<compile_context>
chip_gen: v6e
topology: v6e:2x2x1
jax: 0.10.0
libtpu: 0.0.40
codegen_flags: <defaults>
</compile_context>

<pallas_src>
import math
import functools

import jax
import jax.numpy as jnp
from jax.experimental import pallas as pl
from jax.experimental.pallas import tpu as pltpu


def _round_up(x, m):
    return ((x + m - 1) // m) * m


def _mlp_kernel(x_ref, w1_ref, b1_ref, wdw_ref, bdw_ref, w2_ref, b2_ref,
                o_ref, pad_ref, acc_ref, *, H, W, pad_off):
    N = H * W
    P = pad_off                      # top/bottom zero padding rows (>= W+1, %8==0)
    TC = pad_ref.shape[1]            # hidden-channel tile width
    c = pl.program_id(1)
    n_c = pl.num_programs(1)

    # ---- first channel tile of this batch element: init accumulator with the
    # fc2 bias and zero only the border rows of the conv scratch (the interior
    # is fully overwritten below; scratch persists across grid steps). --------
    @pl.when(c == 0)
    def _():
        acc_ref[...] = jnp.zeros(acc_ref.shape, jnp.float32) + b2_ref[...]
        pad_ref[0:P, :] = jnp.zeros((P, TC), jnp.float32)
        pad_ref[P + N:P + N + P, :] = jnp.zeros((P, TC), jnp.float32)

    # ---- fc1 + ReLU (this channel tile only) --------------------------------
    x = x_ref[0]                                               # (N, Cin)
    h = jnp.dot(x, w1_ref[...], preferred_element_type=jnp.float32)
    h = jnp.maximum(h + b1_ref[...], 0.0)                      # (N, TC)

    # ---- depthwise 3x3 conv, padding=1, on the flattened (H*W) axis ---------
    pad_ref[P:P + N, :] = h

    # hoisted column masks (computed once, not per tap)
    col = jax.lax.broadcasted_iota(jnp.int32, (N, 1), 0) % W
    has_left = col >= 1                                        # pixel has j-1
    has_right = col <= W - 2                                   # pixel has j+1

    wdw = wdw_ref[...]                                         # (9, TC), once

    def tap(dy, dx):
        start = P + dy * W + dx                                # static offset
        return pad_ref[start:start + N, :]                     # (N, TC)

    left = (tap(-1, -1) * wdw[0:1, :] + tap(0, -1) * wdw[3:4, :]
            + tap(1, -1) * wdw[6:7, :])
    mid = (tap(-1, 0) * wdw[1:2, :] + tap(0, 0) * wdw[4:5, :]
           + tap(1, 0) * wdw[7:8, :])
    right = (tap(-1, 1) * wdw[2:3, :] + tap(0, 1) * wdw[5:6, :]
             + tap(1, 1) * wdw[8:9, :])

    y = (mid
         + jnp.where(has_left, left, 0.0)
         + jnp.where(has_right, right, 0.0)
         + bdw_ref[...])                                       # conv bias once

    # ---- GELU (exact, erf-based: matches nn.GELU default) -------------------
    g = 0.5 * y * (1.0 + jax.lax.erf(y * (1.0 / math.sqrt(2.0))))

    # ---- fc2 partial product, accumulated across channel tiles --------------
    acc_ref[...] += jnp.dot(g, w2_ref[...], preferred_element_type=jnp.float32)

    @pl.when(c == n_c - 1)
    def _():
        o_ref[0] = acc_ref[...].astype(o_ref.dtype)


def mlp_pallas(x, w1, b1, wdw, bdw, w2, b2, H, W, c_tile=None):
    """x: (B, N, Cin) with N == H*W (row-major).  Returns (B, N, Cout) f32."""
    B, N, Cin = x.shape
    Chid = w1.shape[1]
    Cout = w2.shape[1]
    assert N == H * W

    # hidden-channel tile: prefer lane-dense multiples of 128, fall back to
    # the full hidden dim for odd sizes.
    if c_tile is None:
        c_tile = next((t for t in (256, 128) if Chid % t == 0), Chid)
    assert Chid % c_tile == 0
    n_c = Chid // c_tile

    # padded conv scratch: P zero rows on top/bottom, P >= W+1 and P % 8 == 0
    # so the dx==0 taps are sublane-aligned whenever W % 8 == 0.
    P = _round_up(W + 1, 8)
    pad_rows = P + N + P

    wdw_flat = wdw.reshape(9, Chid)          # (ky*3+kx, C)
    b1_2d = b1.reshape(1, Chid)
    bdw_2d = bdw.reshape(1, Chid)
    b2_2d = b2.reshape(1, Cout)

    kernel = functools.partial(_mlp_kernel, H=H, W=W, pad_off=P)

    return pl.pallas_call(
        kernel,
        out_shape=jax.ShapeDtypeStruct((B, N, Cout), jnp.float32),
        grid_spec=pltpu.PrefetchScalarGridSpec(
            num_scalar_prefetch=0,
            grid=(B, n_c),                                     # reduction axis last
            in_specs=[
                pl.BlockSpec((1, N, Cin), lambda b, c: (b, 0, 0)),     # x (resident over c)
                pl.BlockSpec((Cin, c_tile), lambda b, c: (0, c)),      # w1 tile
                pl.BlockSpec((1, c_tile), lambda b, c: (0, c)),        # b1 tile
                pl.BlockSpec((9, c_tile), lambda b, c: (0, c)),        # dw weight tile
                pl.BlockSpec((1, c_tile), lambda b, c: (0, c)),        # dw bias tile
                pl.BlockSpec((c_tile, Cout), lambda b, c: (c, 0)),     # w2 tile
                pl.BlockSpec((1, Cout), lambda b, c: (0, 0)),          # b2
            ],
            out_specs=pl.BlockSpec((1, N, Cout), lambda b, c: (b, 0, 0)),
            scratch_shapes=[
                pltpu.VMEM((pad_rows, c_tile), jnp.float32),   # padded conv image
                pltpu.VMEM((N, Cout), jnp.float32),            # fc2 accumulator
            ],
        ),
        compiler_params=pltpu.CompilerParams(
            dimension_semantics=("parallel", "arbitrary"),
            vmem_limit_bytes=48 * 1024 * 1024,
        ),
    )(x, w1, b1_2d, wdw_flat, bdw_2d, w2, b2_2d)


def mlp_reference(x, w1, b1, wdw, bdw, w2, b2, H, W):
    """Pure-JAX reference mirroring the PyTorch forward."""
    B, N, Cin = x.shape
    Chid = w1.shape[1]
    h = jnp.maximum(x @ w1 + b1, 0.0)                        # fc1 + relu
    img = h.transpose(0, 2, 1).reshape(B, Chid, H, W)        # NCHW
    wconv = wdw.transpose(2, 0, 1)[:, None, :, :]            # (C, 1, 3, 3)
    y = jax.lax.conv_general_dilated(
        img, wconv, window_strides=(1, 1), padding="SAME",
        feature_group_count=Chid,
        dimension_numbers=("NCHW", "OIHW", "NCHW"))
    y = y + bdw.reshape(1, Chid, 1, 1)
    y = y.reshape(B, Chid, H * W).transpose(0, 2, 1)         # back to (B,N,C)
    g = 0.5 * y * (1.0 + jax.lax.erf(y / jnp.sqrt(2.0)))     # exact GELU
    return g @ w2 + b2                                       # fc2


if __name__ == "__main__":
    # Small shapes consistent with the module's forward(x, H, W), chosen so
    # channel dims are lane-dense (128) and the channel-tiling/accumulation
    # path is exercised (hidden=256 -> 2 tiles of 128).
    B, H, W = 2, 16, 16
    N = H * W
    in_features, hidden_features, out_features = 128, 256, 128

    key = jax.random.PRNGKey(0)
    kx, k1, kb1, kdw, kbdw, k2, kb2 = jax.random.split(key, 7)

    x = jax.random.normal(kx, (B, N, in_features), jnp.float32)

    # Deterministic synthetic parameters following the module's init scheme
    # (trunc_normal(std=0.02) ~ normal(0, 0.02); conv normal(0, sqrt(2/9)));
    # small nonzero biases to exercise the bias paths.
    w1 = 0.02 * jax.random.normal(k1, (in_features, hidden_features), jnp.float32)
    b1 = 0.01 * jax.random.normal(kb1, (hidden_features,), jnp.float32)
    w2 = 0.02 * jax.random.normal(k2, (hidden_features, out_features), jnp.float32)
    b2 = 0.01 * jax.random.normal(kb2, (out_features,), jnp.float32)
    wdw = math.sqrt(2.0 / 9.0) * jax.random.normal(
        kdw, (3, 3, hidden_features), jnp.float32)
    bdw = 0.01 * jax.random.normal(kbdw, (hidden_features,), jnp.float32)

    out = mlp_pallas(x, w1, b1, wdw, bdw, w2, b2, H, W, c_tile=128)
    out = jax.block_until_ready(out)

    ref = mlp_reference(x, w1, b1, wdw, bdw, w2, b2, H, W)
    assert out.shape == (B, N, out_features)
    max_err = float(jnp.max(jnp.abs(out - ref)))
    assert jnp.allclose(out, ref, atol=5e-4, rtol=5e-4), max_err

    print("KERNEL_OK")
</pallas_src>

<mosaic_0001>
module attributes {stable_mosaic.version = 11 : i64} {
  func.func @_mlp_kernel(%arg0: i32, %arg1: i32, %arg2: memref<1x256x128xf32, #tpu.memory_space<vmem>>, %arg3: memref<128x128xf32, #tpu.memory_space<vmem>>, %arg4: memref<1x128xf32, #tpu.memory_space<vmem>>, %arg5: memref<9x128xf32, #tpu.memory_space<vmem>>, %arg6: memref<1x128xf32, #tpu.memory_space<vmem>>, %arg7: memref<128x128xf32, #tpu.memory_space<vmem>>, %arg8: memref<1x128xf32, #tpu.memory_space<vmem>>, %arg9: memref<1x256x128xf32, #tpu.memory_space<vmem>>, %arg10: memref<304x128xf32, #tpu.memory_space<vmem>>, %arg11: memref<256x128xf32, #tpu.memory_space<vmem>>) attributes {dimension_semantics = [#tpu.dimension_semantics<parallel>, #tpu.dimension_semantics<arbitrary>], iteration_bounds = array<i64: 2, 2>, scalar_prefetch = 0 : i64, scratch_operands = 2 : i64, tpu.core_type = #tpu.core_type<tc>, window_params = [{transform_indices = @transform_0, window_bounds = array<i64: 1, 256, 128>}, {transform_indices = @transform_1, window_bounds = array<i64: 128, 128>}, {transform_indices = @transform_2, window_bounds = array<i64: 1, 128>}, {transform_indices = @transform_3, window_bounds = array<i64: 9, 128>}, {transform_indices = @transform_4, window_bounds = array<i64: 1, 128>}, {transform_indices = @transform_5, window_bounds = array<i64: 128, 128>}, {pipeline_mode = #tpu.pipeline_mode<synchronous>, transform_indices = @transform_6, window_bounds = array<i64: 1, 128>}, {transform_indices = @transform_7, window_bounds = array<i64: 1, 256, 128>}]} {
    %c0_i32 = arith.constant 0 : i32
    %0 = arith.cmpi eq, %arg1, %c0_i32 : i32
    %1 = arith.extui %0 : i1 to i32
    %c0_i32_0 = arith.constant 0 : i32
    %2 = arith.cmpi ne, %1, %c0_i32_0 : i32
    scf.if %2 {
      %cst_42 = arith.constant 0.000000e+00 : f32
      %106 = vector.broadcast %cst_42 : f32 to vector<256x128xf32>
      %c0_43 = arith.constant 0 : index
      %c0_44 = arith.constant 0 : index
      %107 = vector.load %arg8[%c0_43, %c0_44] : memref<1x128xf32, #tpu.memory_space<vmem>>, vector<1x128xf32>
      %108 = vector.broadcast %107 : vector<1x128xf32> to vector<256x128xf32>
      %109 = arith.addf %106, %108 : vector<256x128xf32>
      %c0_45 = arith.constant 0 : index
      %c0_46 = arith.constant 0 : index
      %110 = vector.load %arg11[%c0_45, %c0_46] : memref<256x128xf32, #tpu.memory_space<vmem>>, vector<256x128xf32>
      tpu.vector_store %arg11[%c0_45, %c0_46], %109 {strides = array<i32>} : memref<256x128xf32, #tpu.memory_space<vmem>>, vector<256x128xf32>,
      %cst_47 = arith.constant 0.000000e+00 : f32
      %111 = vector.broadcast %cst_47 : f32 to vector<24x128xf32>
      %c0_48 = arith.constant 0 : index
      %c0_49 = arith.constant 0 : index
      %112 = vector.load %arg10[%c0_48, %c0_49] : memref<304x128xf32, #tpu.memory_space<vmem>>, vector<24x128xf32>
      tpu.vector_store %arg10[%c0_48, %c0_49], %111 {strides = array<i32>} : memref<304x128xf32, #tpu.memory_space<vmem>>, vector<24x128xf32>,
      %cst_50 = arith.constant 0.000000e+00 : f32
      %113 = vector.broadcast %cst_50 : f32 to vector<24x128xf32>
      %c280 = arith.constant 280 : index
      %c0_51 = arith.constant 0 : index
      %114 = vector.load %arg10[%c280, %c0_51] : memref<304x128xf32, #tpu.memory_space<vmem>>, vector<24x128xf32>
      tpu.vector_store %arg10[%c280, %c0_51], %113 {strides = array<i32>} : memref<304x128xf32, #tpu.memory_space<vmem>>, vector<24x128xf32>,
    } else {
    }
    %c0 = arith.constant 0 : index
    %c0_1 = arith.constant 0 : index
    %c0_2 = arith.constant 0 : index
    %3 = vector.load %arg2[%c0, %c0_1, %c0_2] : memref<1x256x128xf32, #tpu.memory_space<vmem>>, vector<1x256x128xf32>
    %4 = vector.shape_cast %3 : vector<1x256x128xf32> to vector<256x128xf32>
    %c0_3 = arith.constant 0 : index
    %c0_4 = arith.constant 0 : index
    %5 = vector.load %arg3[%c0_3, %c0_4] : memref<128x128xf32, #tpu.memory_space<vmem>>, vector<128x128xf32>
    %cst = arith.constant dense<0.000000e+00> : vector<256x128xf32>
    %6 = tpu.matmul %4, %5, %cst {dimension_numbers = #tpu.dot_dimension_numbers<[1], [0], [0], [1], [0, 0, 1, 1], [], []>} : vector<256x128xf32>, vector<128x128xf32>, vector<256x128xf32> -> vector<256x128xf32>
    %c0_5 = arith.constant 0 : index
    %c0_6 = arith.constant 0 : index
    %7 = vector.load %arg4[%c0_5, %c0_6] : memref<1x128xf32, #tpu.memory_space<vmem>>, vector<1x128xf32>
    %8 = vector.broadcast %7 : vector<1x128xf32> to vector<256x128xf32>
    %9 = arith.addf %6, %8 : vector<256x128xf32>
    %cst_7 = arith.constant 0.000000e+00 : f32
    %10 = vector.broadcast %cst_7 : f32 to vector<256x128xf32>
    %11 = arith.maximumf %9, %10 : vector<256x128xf32>
    %c24 = arith.constant 24 : index
    %c0_8 = arith.constant 0 : index
    %12 = vector.load %arg10[%c24, %c0_8] : memref<304x128xf32, #tpu.memory_space<vmem>>, vector<256x128xf32>
    tpu.vector_store %arg10[%c24, %c0_8], %11 {strides = array<i32>} : memref<304x128xf32, #tpu.memory_space<vmem>>, vector<256x128xf32>,
    %13 = tpu.iota {dimensions = array<i32: 0>} : vector<256x1xi32>
    %c16_i32 = arith.constant 16 : i32
    %c0_i32_9 = arith.constant 0 : i32
    %14 = arith.cmpi eq, %c16_i32, %c0_i32_9 : i32
    %c1_i32 = arith.constant 1 : i32
    %15 = arith.select %14, %c1_i32, %c16_i32 : i32
    %16 = vector.broadcast %15 : i32 to vector<256x1xi32>
    %17 = arith.remsi %13, %16 : vector<256x1xi32>
    %c0_i32_10 = arith.constant 0 : i32
    %18 = vector.broadcast %c0_i32_10 : i32 to vector<256x1xi32>
    %19 = arith.cmpi ne, %17, %18 : vector<256x1xi32>
    %c0_i32_11 = arith.constant 0 : i32
    %20 = vector.broadcast %c0_i32_11 : i32 to vector<256x1xi32>
    %21 = arith.cmpi slt, %17, %20 : vector<256x1xi32>
    %c0_i32_12 = arith.constant 0 : i32
    %22 = arith.cmpi slt, %15, %c0_i32_12 : i32
    %23 = vector.broadcast %22 : i1 to vector<256x1xi1>
    %24 = vector.broadcast %23 : vector<256x1xi1> to vector<256x1xi1>
    %25 = arith.xori %21, %24 : vector<256x1xi1>
    %26 = arith.andi %25, %19 : vector<256x1xi1>
    %27 = vector.broadcast %15 : i32 to vector<256x1xi32>
    %28 = arith.addi %17, %27 : vector<256x1xi32>
    %29 = arith.select %26, %28, %17 : vector<256x1xi1>, vector<256x1xi32>
    %c1_i32_13 = arith.constant 1 : i32
    %30 = vector.broadcast %c1_i32_13 : i32 to vector<256x1xi32>
    %31 = arith.cmpi sge, %29, %30 : vector<256x1xi32>
    %c14_i32 = arith.constant 14 : i32
    %32 = vector.broadcast %c14_i32 : i32 to vector<256x1xi32>
    %33 = arith.cmpi sle, %29, %32 : vector<256x1xi32>
    %c0_14 = arith.constant 0 : index
    %c0_15 = arith.constant 0 : index
    %34 = vector.load %arg5[%c0_14, %c0_15] : memref<9x128xf32, #tpu.memory_space<vmem>>, vector<9x128xf32>
    %c7 = arith.constant 7 : index
    %c0_16 = arith.constant 0 : index
    %35 = vector.load %arg10[%c7, %c0_16] : memref<304x128xf32, #tpu.memory_space<vmem>>, vector<256x128xf32>
    %36 = vector.extract_strided_slice %34 {offsets = [0, 0], sizes = [1, 128], strides = [1, 1]} : vector<9x128xf32> to vector<1x128xf32>
    %37 = vector.broadcast %36 : vector<1x128xf32> to vector<256x128xf32>
    %38 = arith.mulf %35, %37 : vector<256x128xf32>
    %c23 = arith.constant 23 : index
    %c0_17 = arith.constant 0 : index
    %39 = vector.load %arg10[%c23, %c0_17] : memref<304x128xf32, #tpu.memory_space<vmem>>, vector<256x128xf32>
    %40 = vector.extract_strided_slice %34 {offsets = [3, 0], sizes = [1, 128], strides = [1, 1]} : vector<9x128xf32> to vector<1x128xf32>
    %41 = vector.broadcast %40 : vector<1x128xf32> to vector<256x128xf32>
    %42 = arith.mulf %39, %41 : vector<256x128xf32>
    %43 = arith.addf %38, %42 : vector<256x128xf32>
    %c39 = arith.constant 39 : index
    %c0_18 = arith.constant 0 : index
    %44 = vector.load %arg10[%c39, %c0_18] : memref<304x128xf32, #tpu.memory_space<vmem>>, vector<256x128xf32>
    %45 = vector.extract_strided_slice %34 {offsets = [6, 0], sizes = [1, 128], strides = [1, 1]} : vector<9x128xf32> to vector<1x128xf32>
    %46 = vector.broadcast %45 : vector<1x128xf32> to vector<256x128xf32>
    %47 = arith.mulf %44, %46 : vector<256x128xf32>
    %48 = arith.addf %43, %47 : vector<256x128xf32>
    %c8 = arith.constant 8 : index
    %c0_19 = arith.constant 0 : index
    %49 = vector.load %arg10[%c8, %c0_19] : memref<304x128xf32, #tpu.memory_space<vmem>>, vector<256x128xf32>
    %50 = vector.extract_strided_slice %34 {offsets = [1, 0], sizes = [1, 128], strides = [1, 1]} : vector<9x128xf32> to vector<1x128xf32>
    %51 = vector.broadcast %50 : vector<1x128xf32> to vector<256x128xf32>
    %52 = arith.mulf %49, %51 : vector<256x128xf32>
    %c24_20 = arith.constant 24 : index
    %c0_21 = arith.constant 0 : index
    %53 = vector.load %arg10[%c24_20, %c0_21] : memref<304x128xf32, #tpu.memory_space<vmem>>, vector<256x128xf32>
    %54 = vector.extract_strided_slice %34 {offsets = [4, 0], sizes = [1, 128], strides = [1, 1]} : vector<9x128xf32> to vector<1x128xf32>
    %55 = vector.broadcast %54 : vector<1x128xf32> to vector<256x128xf32>
    %56 = arith.mulf %53, %55 : vector<256x128xf32>
    %57 = arith.addf %52, %56 : vector<256x128xf32>
    %c40 = arith.constant 40 : index
    %c0_22 = arith.constant 0 : index
    %58 = vector.load %arg10[%c40, %c0_22] : memref<304x128xf32, #tpu.memory_space<vmem>>, vector<256x128xf32>
    %59 = vector.extract_strided_slice %34 {offsets = [7, 0], sizes = [1, 128], strides = [1, 1]} : vector<9x128xf32> to vector<1x128xf32>
    %60 = vector.broadcast %59 : vector<1x128xf32> to vector<256x128xf32>
    %61 = arith.mulf %58, %60 : vector<256x128xf32>
    %62 = arith.addf %57, %61 : vector<256x128xf32>
    %c9 = arith.constant 9 : index
    %c0_23 = arith.constant 0 : index
    %63 = vector.load %arg10[%c9, %c0_23] : memref<304x128xf32, #tpu.memory_space<vmem>>, vector<256x128xf32>
    %64 = vector.extract_strided_slice %34 {offsets = [2, 0], sizes = [1, 128], strides = [1, 1]} : vector<9x128xf32> to vector<1x128xf32>
    %65 = vector.broadcast %64 : vector<1x128xf32> to vector<256x128xf32>
    %66 = arith.mulf %63, %65 : vector<256x128xf32>
    %c25 = arith.constant 25 : index
    %c0_24 = arith.constant 0 : index
    %67 = vector.load %arg10[%c25, %c0_24] : memref<304x128xf32, #tpu.memory_space<vmem>>, vector<256x128xf32>
    %68 = vector.extract_strided_slice %34 {offsets = [5, 0], sizes = [1, 128], strides = [1, 1]} : vector<9x128xf32> to vector<1x128xf32>
    %69 = vector.broadcast %68 : vector<1x128xf32> to vector<256x128xf32>
    %70 = arith.mulf %67, %69 : vector<256x128xf32>
    %71 = arith.addf %66, %70 : vector<256x128xf32>
    %c41 = arith.constant 41 : index
    %c0_25 = arith.constant 0 : index
    %72 = vector.load %arg10[%c41, %c0_25] : memref<304x128xf32, #tpu.memory_space<vmem>>, vector<256x128xf32>
    %73 = vector.extract_strided_slice %34 {offsets = [8, 0], sizes = [1, 128], strides = [1, 1]} : vector<9x128xf32> to vector<1x128xf32>
    %74 = vector.broadcast %73 : vector<1x128xf32> to vector<256x128xf32>
    %75 = arith.mulf %72, %74 : vector<256x128xf32>
    %76 = arith.addf %71, %75 : vector<256x128xf32>
    %cst_26 = arith.constant 0.000000e+00 : f32
    %77 = vector.shape_cast %31 : vector<256x1xi1> to vector<256x1xi1>
    %78 = vector.broadcast %77 : vector<256x1xi1> to vector<256x128xi1>
    %79 = vector.broadcast %cst_26 : f32 to vector<256x128xf32>
    %80 = arith.select %78, %48, %79 : vector<256x128xi1>, vector<256x128xf32>
    %81 = arith.addf %62, %80 : vector<256x128xf32>
    %cst_27 = arith.constant 0.000000e+00 : f32
    %82 = vector.shape_cast %33 : vector<256x1xi1> to vector<256x1xi1>
    %83 = vector.broadcast %82 : vector<256x1xi1> to vector<256x128xi1>
    %84 = vector.broadcast %cst_27 : f32 to vector<256x128xf32>
    %85 = arith.select %83, %76, %84 : vector<256x128xi1>, vector<256x128xf32>
    %86 = arith.addf %81, %85 : vector<256x128xf32>
    %c0_28 = arith.constant 0 : index
    %c0_29 = arith.constant 0 : index
    %87 = vector.load %arg6[%c0_28, %c0_29] : memref<1x128xf32, #tpu.memory_space<vmem>>, vector<1x128xf32>
    %88 = vector.broadcast %87 : vector<1x128xf32> to vector<256x128xf32>
    %89 = arith.addf %86, %88 : vector<256x128xf32>
    %cst_30 = arith.constant 5.000000e-01 : f32
    %90 = vector.broadcast %cst_30 : f32 to vector<256x128xf32>
    %91 = arith.mulf %90, %89 : vector<256x128xf32>
    %cst_31 = arith.constant 0.707106769 : f32
    %92 = vector.broadcast %cst_31 : f32 to vector<256x128xf32>
    %93 = arith.mulf %89, %92 : vector<256x128xf32>
    %94 = math.erf %93 : vector<256x128xf32>
    %cst_32 = arith.constant 1.000000e+00 : f32
    %95 = vector.broadcast %cst_32 : f32 to vector<256x128xf32>
    %96 = arith.addf %95, %94 : vector<256x128xf32>
    %97 = arith.mulf %91, %96 : vector<256x128xf32>
    %c0_33 = arith.constant 0 : index
    %c0_34 = arith.constant 0 : index
    %98 = vector.load %arg11[%c0_33, %c0_34] : memref<256x128xf32, #tpu.memory_space<vmem>>, vector<256x128xf32>
    %c0_35 = arith.constant 0 : index
    %c0_36 = arith.constant 0 : index
    %99 = vector.load %arg7[%c0_35, %c0_36] : memref<128x128xf32, #tpu.memory_space<vmem>>, vector<128x128xf32>
    %cst_37 = arith.constant dense<0.000000e+00> : vector<256x128xf32>
    %100 = tpu.matmul %97, %99, %cst_37 {dimension_numbers = #tpu.dot_dimension_numbers<[1], [0], [0], [1], [0, 0, 1, 1], [], []>} : vector<256x128xf32>, vector<128x128xf32>, vector<256x128xf32> -> vector<256x128xf32>
    %101 = arith.addf %98, %100 : vector<256x128xf32>
    %c0_38 = arith.constant 0 : index
    %c0_39 = arith.constant 0 : index
    %102 = vector.load %arg11[%c0_38, %c0_39] : memref<256x128xf32, #tpu.memory_space<vmem>>, vector<256x128xf32>
    tpu.vector_store %arg11[%c0_38, %c0_39], %101 {strides = array<i32>} : memref<256x128xf32, #tpu.memory_space<vmem>>, vector<256x128xf32>,
    %c1_i32_40 = arith.constant 1 : i32
    %103 = arith.cmpi eq, %arg1, %c1_i32_40 : i32
    %104 = arith.extui %103 : i1 to i32
    %c0_i32_41 = arith.constant 0 : i32
    %105 = arith.cmpi ne, %104, %c0_i32_41 : i32
    scf.if %105 {
      %c0_42 = arith.constant 0 : index
      %c0_43 = arith.constant 0 : index
      %106 = vector.load %arg11[%c0_42, %c0_43] : memref<256x128xf32, #tpu.memory_space<vmem>>, vector<256x128xf32>
      %c0_44 = arith.constant 0 : index
      %c0_45 = arith.constant 0 : index
      %c0_46 = arith.constant 0 : index
      %107 = vector.load %arg9[%c0_44, %c0_45, %c0_46] : memref<1x256x128xf32, #tpu.memory_space<vmem>>, vector<1x256x128xf32>
      %108 = vector.shape_cast %107 : vector<1x256x128xf32> to vector<256x128xf32>
      %109 = vector.shape_cast %106 : vector<256x128xf32> to vector<1x256x128xf32>
      tpu.vector_store %arg9[%c0_44, %c0_45, %c0_46], %109 {strides = array<i32>} : memref<1x256x128xf32, #tpu.memory_space<vmem>>, vector<1x256x128xf32>,
    } else {
    }
    return
  }
  func.func @transform_0(%arg0: i32, %arg1: i32) -> (i32, i32, i32) {
    %c0_i32 = arith.constant 0 : i32
    %c0_i32_0 = arith.constant 0 : i32
    %c0_i32_1 = arith.constant 0 : i32
    return %arg0, %c0_i32, %c0_i32_0 : i32, i32, i32
  }
  func.func @transform_1(%arg0: i32, %arg1: i32) -> (i32, i32) {
    %c0_i32 = arith.constant 0 : i32
    %c0_i32_0 = arith.constant 0 : i32
    return %c0_i32, %arg1 : i32, i32
  }
  func.func @transform_2(%arg0: i32, %arg1: i32) -> (i32, i32) {
    %c0_i32 = arith.constant 0 : i32
    %c0_i32_0 = arith.constant 0 : i32
    return %c0_i32, %arg1 : i32, i32
  }
  func.func @transform_3(%arg0: i32, %arg1: i32) -> (i32, i32) {
    %c0_i32 = arith.constant 0 : i32
    %c0_i32_0 = arith.constant 0 : i32
    return %c0_i32, %arg1 : i32, i32
  }
  func.func @transform_4(%arg0: i32, %arg1: i32) -> (i32, i32) {
    %c0_i32 = arith.constant 0 : i32
    %c0_i32_0 = arith.constant 0 : i32
    return %c0_i32, %arg1 : i32, i32
  }
  func.func @transform_5(%arg0: i32, %arg1: i32) -> (i32, i32) {
    %c0_i32 = arith.constant 0 : i32
    %c0_i32_0 = arith.constant 0 : i32
    return %arg1, %c0_i32 : i32, i32
  }
  func.func @transform_6(%arg0: i32, %arg1: i32) -> (i32, i32) {
    %c0_i32 = arith.constant 0 : i32
    %c0_i32_0 = arith.constant 0 : i32
    %c0_i32_1 = arith.constant 0 : i32
    return %c0_i32, %c0_i32_0 : i32, i32
  }
  func.func @transform_7(%arg0: i32, %arg1: i32) -> (i32, i32, i32) {
    %c0_i32 = arith.constant 0 : i32
    %c0_i32_0 = arith.constant 0 : i32
    %c0_i32_1 = arith.constant 0 : i32
    return %arg0, %c0_i32, %c0_i32_0 : i32, i32, i32
  }
}

</mosaic_0001>

<llo_original>
// kernel: tpu_custom_call.1
$region0: #{tpu_custom_call.1}
  #allocation0 [shape = 'u32[]', space=smem, size = 0x4, offset = 0x4, fixed_abs, tag = 'smem constant byte address 0x4 - core index']
  #allocation1 [shape = 'u32[144,128]{1,0:T(1,128)}', space=vmem, size = 0x12000, scoped, tag = 'internal scratch']
  #allocation2 [shape = 'f32[304,128]{1,0:T(8,128)}', space=vmem, size = 0x26000, scoped, tag = 'scratch operand']
  #allocation3 [shape = 'f32[256,128]{1,0:T(8,128)}', space=vmem, size = 0x20000, scoped, tag = 'scratch operand']
  %s0 = inlined_call_operand.hbm [shape: f32[2,256,128], index: 0, kind: input, shape index: {}]
  %s1 = inlined_call_operand.hbm [shape: f32[128,256], index: 1, kind: input, shape index: {}]
  %s2 = inlined_call_operand.vmem [shape: f32[1,256], index: 2, kind: input, shape index: {}]
  %s3 = inlined_call_operand.hbm [shape: f32[9,256], index: 3, kind: input, shape index: {}]
  %s4 = inlined_call_operand.vmem [shape: f32[1,256], index: 4, kind: input, shape index: {}]
  %s5 = inlined_call_operand.hbm [shape: f32[256,128], index: 5, kind: input, shape index: {}]
  %s6 = inlined_call_operand.vmem [shape: f32[1,128], index: 6, kind: input, shape index: {}]
  %s7 = inlined_call_operand.hbm [shape: f32[2,256,128], index: 7, kind: output, shape index: {}]
  %s8 = sld [smem:[#allocation0]]
  $region85: #{tpu_custom_call.1} parent=0
    _
  %s10 = ssub.s32 1, %s8
  %s11 = scalar_select 0, %s10, %s8
  $region1: #{tpu_custom_call.1} parent=0
    #allocation4 [shape = 'u8[262144]{0}', space=vmem, size = 0x40000, scoped, tag = 'input window, operand 0']
    #allocation5 [shape = 's32[2]{0}', space=sflag, size = 0x8, scoped, tag = 'scoped memory for tpu_custom_call.1']
    #allocation6 [shape = 's32[2]{0}', space=sflag, size = 0x8, scoped, tag = 'scoped memory for tpu_custom_call.1']
    #allocation7 [shape = 'u8[131072]{0}', space=vmem, size = 0x20000, scoped, tag = 'input window, operand 1']
    #allocation8 [shape = 's32[2]{0}', space=sflag, size = 0x8, scoped, tag = 'scoped memory for tpu_custom_call.1']
    #allocation9 [shape = 'u8[16384]{0}', space=vmem, size = 0x4000, scoped, tag = 'input window, operand 3']
    #allocation10 [shape = 'u8[131072]{0}', space=vmem, size = 0x20000, scoped, tag = 'input window, operand 5']
    #allocation11 [shape = 's32[2]{0}', space=sflag, size = 0x8, scoped, tag = 'scoped memory for tpu_custom_call.1']
    #allocation12 [shape = 'u8[262144]{0}', space=vmem, size = 0x40000, scoped, tag = 'output window, operand 0']
    %12 = vsyncpa [#allocation5], 0
    %s13 = scalar_lea.sflag [#allocation5], 1
    %14 = vsyncpa %s13, 0
    %15 = vsyncpa [#allocation8], 0
    %s16 = scalar_lea.sflag [#allocation8], 1
    %17 = vsyncpa %s16, 0
    %18 = vsyncpa [#allocation11], 0
    %s19 = scalar_lea.sflag [#allocation11], 1
    %20 = vsyncpa %s19, 0
    %21 = vsyncpa [#allocation6], 0
    %s22 = scalar_lea.sflag [#allocation6], 1
    %23 = vsyncpa %s22, 0
    loop: start=0, step=1, limit=6
    $region2: #{tpu_custom_call.1} parent=1 // loop_pre_header
      _
    $region3: #{tpu_custom_call.1} parent=1 // loop_header
      %s25 = sphi 0, %s29
      %p26 = scmp.ge.s32.totalorder %s25, 6
      %s32 = sphi 0, %s44
      %s33 = sphi 0, %s40
      %s34 = sphi 0, %s32
      %s35 = sphi 0, %s33
      %s36 = sphi 0, %s34
      %s37 = sphi 0, %s35
      %s47 = sphi 0, %s49
      %s50 = sphi 0, %s47
      %s51 = sphi 0, %s50
      %s67 = sphi 0, %s51
      %s73 = sphi 0, %s75
      %s76 = sphi 0, %s73
      %s77 = sphi 0, %s76
      %s93 = sphi 0, %s77
      %s99 = sphi 0, %s101
      %s102 = sphi 0, %s99
      %s103 = sphi 0, %s102
      %s119 = sphi 0, %s103
      %s125 = sphi 0, %s127
      %s128 = sphi 0, %s125
      %s129 = sphi 0, %s128
      %s145 = sphi 0, %s129
      %s151 = sphi 0, %s153
      %s154 = sphi 0, %s151
      %s155 = sphi 0, %s154
      %s171 = sphi 0, %s155
      %s177 = sphi 0, %s179
      %s180 = sphi 0, %s177
      %s181 = sphi 0, %s180
      %s197 = sphi 0, %s181
      %s201 = sphi 0, %s201
      %s203 = sphi 0, %s201
      %s204 = sphi 0, %s203
      %s218 = sphi 0, %s204
      %s224 = sphi 0, %s226
      %s227 = sphi 0, %s224
      %s228 = sphi 0, %s227
      %s244 = sphi 0, %s228
    $region4: #{tpu_custom_call.1} parent=1 // loop_header_branch
      %28 = sbr.rel (%p26) target = $region8
    $region5: #{tpu_custom_call.1} parent=1 // loop_body
      %s30 = ssub.s32 %s25, 1
      %s31 = ssub.s32 %s25, 2
      %s38 = sadd.s32 1, %s33
      %p39 = scmp.ge.s32.totalorder %s38, 2
      %s40 = scalar_select %p39, 0, %s38
      %s41 = sadd.s32 1, %s32
      %s42 = scalar_select %p39, %s41, %s32
      %p43 = scmp.ge.s32.totalorder %s42, 2
      %s44 = scalar_select %p43, 0, %s42
      %s45 = ssub.s32 %s32, %s44
      %p46 = scmp.eq.s32.totalorder %s45, 0
      %s48 = sadd.s32 %s47, 1
      %s49 = scalar_select %p46, %s47, %s48
      %p52 = pneg %p46
      %p53 = scmp.eq.s32.totalorder %s25, 3
      %p54 = por %p52, %p53
      %p55 = scmp.ne.s32.totalorder %s47, %s50
      %p56 = scmp.eq.s32.totalorder %s25, 0
      %p57 = por %p55, %p56
      %p58 = scmp.ne.s32.totalorder %s47, %s50
      %p59 = scmp.eq.s32.totalorder %s30, 3
      %p60 = por %p58, %p59
      %p61 = scmp.ne.s32.totalorder %s50, %s51
      %p62 = scmp.eq.s32.totalorder %s30, 0
      %p63 = por %p61, %p62
      %p64 = scmp.ne.s32.totalorder %s50, %s51
      %p65 = scmp.eq.s32.totalorder %s31, 3
      %p66 = por %p64, %p65
      %p68 = scmp.ne.s32.totalorder %s51, %s67
      %p69 = scmp.eq.s32.totalorder %s31, 0
      %p70 = por %p68, %p69
      %s71 = ssub.s32 %s33, %s40
      %p72 = scmp.eq.s32.totalorder %s71, 0
      %s74 = sadd.s32 %s73, 1
      %s75 = scalar_select %p72, %s73, %s74
      %p78 = pneg %p72
      %p79 = scmp.eq.s32.totalorder %s25, 3
      %p80 = por %p78, %p79
      %p81 = scmp.ne.s32.totalorder %s73, %s76
      %p82 = scmp.eq.s32.totalorder %s25, 0
      %p83 = por %p81, %p82
      %p84 = scmp.ne.s32.totalorder %s73, %s76
      %p85 = scmp.eq.s32.totalorder %s30, 3
      %p86 = por %p84, %p85
      %p87 = scmp.ne.s32.totalorder %s76, %s77
      %p88 = scmp.eq.s32.totalorder %s30, 0
      %p89 = por %p87, %p88
      %p90 = scmp.ne.s32.totalorder %s76, %s77
      %p91 = scmp.eq.s32.totalorder %s31, 3
      %p92 = por %p90, %p91
      %p94 = scmp.ne.s32.totalorder %s77, %s93
      %p95 = scmp.eq.s32.totalorder %s31, 0
      %p96 = por %p94, %p95
      %s97 = ssub.s32 %s33, %s40
      %p98 = scmp.eq.s32.totalorder %s97, 0
      %s100 = sadd.s32 %s99, 1
      %s101 = scalar_select %p98, %s99, %s100
      %p104 = pneg %p98
      %p105 = scmp.eq.s32.totalorder %s25, 3
      %p106 = por %p104, %p105
      %p107 = scmp.ne.s32.totalorder %s99, %s102
      %p108 = scmp.eq.s32.totalorder %s25, 0
      %p109 = por %p107, %p108
      %p110 = scmp.ne.s32.totalorder %s99, %s102
      %p111 = scmp.eq.s32.totalorder %s30, 3
      %p112 = por %p110, %p111
      %p113 = scmp.ne.s32.totalorder %s102, %s103
      %p114 = scmp.eq.s32.totalorder %s30, 0
      %p115 = por %p113, %p114
      %p116 = scmp.ne.s32.totalorder %s102, %s103
      %p117 = scmp.eq.s32.totalorder %s31, 3
      %p118 = por %p116, %p117
      %p120 = scmp.ne.s32.totalorder %s103, %s119
      %p121 = scmp.eq.s32.totalorder %s31, 0
      %p122 = por %p120, %p121
      %s123 = ssub.s32 %s33, %s40
      %p124 = scmp.eq.s32.totalorder %s123, 0
      %s126 = sadd.s32 %s125, 1
      %s127 = scalar_select %p124, %s125, %s126
      %p130 = pneg %p124
      %p131 = scmp.eq.s32.totalorder %s25, 3
      %p132 = por %p130, %p131
      %p133 = scmp.ne.s32.totalorder %s125, %s128
      %p134 = scmp.eq.s32.totalorder %s25, 0
      %p135 = por %p133, %p134
      %p136 = scmp.ne.s32.totalorder %s125, %s128
      %p137 = scmp.eq.s32.totalorder %s30, 3
      %p138 = por %p136, %p137
      %p139 = scmp.ne.s32.totalorder %s128, %s129
      %p140 = scmp.eq.s32.totalorder %s30, 0
      %p141 = por %p139, %p140
      %p142 = scmp.ne.s32.totalorder %s128, %s129
      %p143 = scmp.eq.s32.totalorder %s31, 3
      %p144 = por %p142, %p143
      %p146 = scmp.ne.s32.totalorder %s129, %s145
      %p147 = scmp.eq.s32.totalorder %s31, 0
      %p148 = por %p146, %p147
      %s149 = ssub.s32 %s33, %s40
      %p150 = scmp.eq.s32.totalorder %s149, 0
      %s152 = sadd.s32 %s151, 1
      %s153 = scalar_select %p150, %s151, %s152
      %p156 = pneg %p150
      %p157 = scmp.eq.s32.totalorder %s25, 3
      %p158 = por %p156, %p157
      %p159 = scmp.ne.s32.totalorder %s151, %s154
      %p160 = scmp.eq.s32.totalorder %s25, 0
      %p161 = por %p159, %p160
      %p162 = scmp.ne.s32.totalorder %s151, %s154
      %p163 = scmp.eq.s32.totalorder %s30, 3
      %p164 = por %p162, %p163
      %p165 = scmp.ne.s32.totalorder %s154, %s155
      %p166 = scmp.eq.s32.totalorder %s30, 0
      %p167 = por %p165, %p166
      %p168 = scmp.ne.s32.totalorder %s154, %s155
      %p169 = scmp.eq.s32.totalorder %s31, 3
      %p170 = por %p168, %p169
      %p172 = scmp.ne.s32.totalorder %s155, %s171
      %p173 = scmp.eq.s32.totalorder %s31, 0
      %p174 = por %p172, %p173
      %s175 = ssub.s32 %s33, %s40
      %p176 = scmp.eq.s32.totalorder %s175, 0
      %s178 = sadd.s32 %s177, 1
      %s179 = scalar_select %p176, %s177, %s178
      %p182 = pneg %p176
      %p183 = scmp.eq.s32.totalorder %s25, 3
      %p184 = por %p182, %p183
      %p185 = scmp.ne.s32.totalorder %s177, %s180
      %p186 = scmp.eq.s32.totalorder %s25, 0
      %p187 = por %p185, %p186
      %p188 = scmp.ne.s32.totalorder %s177, %s180
      %p189 = scmp.eq.s32.totalorder %s30, 3
      %p190 = por %p188, %p189
      %p191 = scmp.ne.s32.totalorder %s180, %s181
      %p192 = scmp.eq.s32.totalorder %s30, 0
      %p193 = por %p191, %p192
      %p194 = scmp.ne.s32.totalorder %s180, %s181
      %p195 = scmp.eq.s32.totalorder %s31, 3
      %p196 = por %p194, %p195
      %p198 = scmp.ne.s32.totalorder %s181, %s197
      %p199 = scmp.eq.s32.totalorder %s31, 0
      %p200 = por %p198, %p199
      %s202 = sadd.s32 %s201, 1
      %p205 = scmp.eq.s32.totalorder %s25, 3
      %p206 = scmp.ne.s32.totalorder %s201, %s203
      %p207 = scmp.eq.s32.totalorder %s25, 0
      %p208 = por %p206, %p207
      %p209 = scmp.ne.s32.totalorder %s201, %s203
      %p210 = scmp.eq.s32.totalorder %s30, 3
      %p211 = por %p209, %p210
      %p212 = scmp.ne.s32.totalorder %s203, %s204
      %p213 = scmp.eq.s32.totalorder %s30, 0
      %p214 = por %p212, %p213
      %p215 = scmp.ne.s32.totalorder %s203, %s204
      %p216 = scmp.eq.s32.totalorder %s31, 3
      %p217 = por %p215, %p216
      %p219 = scmp.ne.s32.totalorder %s204, %s218
      %p220 = scmp.eq.s32.totalorder %s31, 0
      %p221 = por %p219, %p220
      %s222 = ssub.s32 %s32, %s44
      %p223 = scmp.eq.s32.totalorder %s222, 0
      %s225 = sadd.s32 %s224, 1
      %s226 = scalar_select %p223, %s224, %s225
      %p229 = pneg %p223
      %p230 = scmp.eq.s32.totalorder %s25, 3
      %p231 = por %p229, %p230
      %p232 = scmp.ne.s32.totalorder %s224, %s227
      %p233 = scmp.eq.s32.totalorder %s25, 0
      %p234 = por %p232, %p233
      %p235 = scmp.ne.s32.totalorder %s224, %s227
      %p236 = scmp.eq.s32.totalorder %s30, 3
      %p237 = por %p235, %p236
      %p238 = scmp.ne.s32.totalorder %s227, %s228
      %p239 = scmp.eq.s32.totalorder %s30, 0
      %p240 = por %p238, %p239
      %p241 = scmp.ne.s32.totalorder %s227, %s228
      %p242 = scmp.eq.s32.totalorder %s31, 3
      %p243 = por %p241, %p242
      %p245 = scmp.ne.s32.totalorder %s228, %s244
      %p246 = scmp.eq.s32.totalorder %s31, 0
      %p247 = por %p245, %p246
      %p248 = scmp.le.s32.totalorder 1, %s25
      %p249 = scmp.lt.s32.totalorder %s25, 5
      %p250 = pnand %p248, %p249
      %p251 = pneg %p250
      // Predicated region
      $region9: #{tpu_custom_call.1} parent=5 // pred_check
        _
      $region10: #{tpu_custom_call.1} parent=5 // pred_check_branch
        %253 = sbr.rel (%p250) target = $region12
      $region11: #{tpu_custom_call.1} parent=5 // pred_region
        %s254 = ssub.s32 %s25, 1
        // Predicated region
        $region13: #{tpu_custom_call.1} parent=11 // pred_check
          %p255 = pneg %p214
        $region14: #{tpu_custom_call.1} parent=11 // pred_check_branch
          %257 = sbr.rel (%p255) target = $region16
        $region15: #{tpu_custom_call.1} parent=11 // pred_region
          _
        $region16: #{tpu_custom_call.1} parent=11 // pred_fallthru
          _
      $region12: #{tpu_custom_call.1} parent=5 // pred_fallthru
        _
      %p258 = scmp.lt.s32.totalorder %s25, 4
      // Predicated region
      $region17: #{tpu_custom_call.1} parent=5 // pred_check
        %p259 = pneg %p258
      $region18: #{tpu_custom_call.1} parent=5 // pred_check_branch
        %261 = sbr.rel (%p259) target = $region20
      $region19: #{tpu_custom_call.1} parent=5 // pred_region
        // Predicated region
        $region21: #{tpu_custom_call.1} parent=19 // pred_check
          %p262 = pneg %p57
        $region22: #{tpu_custom_call.1} parent=19 // pred_check_branch
          %264 = sbr.rel (%p262) target = $region24
        $region23: #{tpu_custom_call.1} parent=19 // pred_region
          %s265 = sand.u32 %s47, 1
          %s266 = scalar_lea.sflag [#allocation5], %s265
          %s267 = sand.u32 %s47, 1
          %s268 = smul.addr %s267, 256
          %s269 = scalar_lea.vmem [#allocation4], %s268
          %s271 = ssub.s32 4096, 4096
          %272 = vsyncadd %s266, %s271
          %s273 = smul.addr %s32, 32
          %s274 = smul.addr %s273, 128
          %s275 = scalar_lea.hbm %s0, %s274
          %s276 = sshll.u32 %s269, 4
          %s277 = int_to_ptr.vmem [resolvable:$true] %s276
          %282 = dma.hbm_to_vmem [thread:$0]  %s275, 4096, %s277, %s266, 128, 128, 8
        $region24: #{tpu_custom_call.1} parent=19 // pred_fallthru
          _
        // Predicated region
        $region25: #{tpu_custom_call.1} parent=19 // pred_check
          %p283 = pneg %p83
        $region26: #{tpu_custom_call.1} parent=19 // pred_check_branch
          %285 = sbr.rel (%p283) target = $region28
        $region27: #{tpu_custom_call.1} parent=19 // pred_region
          %s286 = sand.u32 %s25, 1
          %s287 = scalar_lea.sflag [#allocation8], %s286
          %s288 = sand.u32 %s73, 1
          %s289 = smul.addr %s288, 128
          %s290 = scalar_lea.vmem [#allocation7], %s289
          %s292 = ssub.s32 2048, 2048
          %293 = vsyncadd %s287, %s292
          %s294 = smul.addr %s33, 128
          %s295 = scalar_lea.hbm %s1, %s294
          %s296 = sshll.u32 %s290, 4
          %s297 = int_to_ptr.vmem [resolvable:$true] %s296
          %302 = dma.hbm_to_vmem [thread:$0]  %s295, 2048, %s297, %s287, 256, 128, 8
        $region28: #{tpu_custom_call.1} parent=19 // pred_fallthru
          _
        // Predicated region
        $region29: #{tpu_custom_call.1} parent=19 // pred_check
          %p303 = pneg %p109
        $region30: #{tpu_custom_call.1} parent=19 // pred_check_branch
          %305 = sbr.rel (%p303) target = $region32
        $region31: #{tpu_custom_call.1} parent=19 // pred_region
          %p306 = scmp.lt.s32.totalorder %s33, 1
          %s307 = scalar_select %p306, %s33, 1
          %s308 = scalar_lea.vmem %s2, %s307
        $region32: #{tpu_custom_call.1} parent=19 // pred_fallthru
          _
        // Predicated region
        $region33: #{tpu_custom_call.1} parent=19 // pred_check
          %p309 = pneg %p135
        $region34: #{tpu_custom_call.1} parent=19 // pred_check_branch
          %311 = sbr.rel (%p309) target = $region36
        $region35: #{tpu_custom_call.1} parent=19 // pred_region
          %s312 = sand.u32 %s25, 1
          %s313 = scalar_lea.sflag [#allocation8], %s312
          %s314 = sand.u32 %s125, 1
          %s315 = smul.addr %s314, 16
          %s316 = scalar_lea.vmem [#allocation9], %s315
          %s318 = ssub.s32 256, 256
          %319 = vsyncadd %s313, %s318
          %s320 = smul.addr %s33, 128
          %s321 = scalar_lea.hbm %s3, %s320
          %s322 = sshll.u32 %s316, 4
          %s323 = int_to_ptr.vmem [resolvable:$true] %s322
          %328 = dma.hbm_to_vmem [thread:$0]  %s321, 256, %s323, %s313, 256, 128, 8
        $region36: #{tpu_custom_call.1} parent=19 // pred_fallthru
          _
        // Predicated region
        $region37: #{tpu_custom_call.1} parent=19 // pred_check
          %p329 = pneg %p161
        $region38: #{tpu_custom_call.1} parent=19 // pred_check_branch
          %331 = sbr.rel (%p329) target = $region40
        $region39: #{tpu_custom_call.1} parent=19 // pred_region
          %p332 = scmp.lt.s32.totalorder %s33, 1
          %s333 = scalar_select %p332, %s33, 1
          %s334 = scalar_lea.vmem %s4, %s333
        $region40: #{tpu_custom_call.1} parent=19 // pred_fallthru
          _
        // Predicated region
        $region41: #{tpu_custom_call.1} parent=19 // pred_check
          %p335 = pneg %p187
        $region42: #{tpu_custom_call.1} parent=19 // pred_check_branch
          %337 = sbr.rel (%p335) target = $region44
        $region43: #{tpu_custom_call.1} parent=19 // pred_region
          %s338 = sand.u32 %s177, 1
          %s339 = scalar_lea.sflag [#allocation11], %s338
          %s340 = sand.u32 %s177, 1
          %s341 = smul.addr %s340, 128
          %s342 = scalar_lea.vmem [#allocation10], %s341
          %s343 = smul.u32 16, %s33
          %s345 = ssub.s32 2048, 2048
          %346 = vsyncadd %s339, %s345
          %s347 = smul.addr %s343, 128
          %s348 = scalar_lea.hbm %s5, %s347
          %s349 = sshll.u32 %s342, 4
          %s350 = int_to_ptr.vmem [resolvable:$true] %s349
          %355 = dma.hbm_to_vmem [thread:$0]  %s348, 2048, %s350, %s339, 128, 128, 8
        $region44: #{tpu_custom_call.1} parent=19 // pred_fallthru
          _
      $region20: #{tpu_custom_call.1} parent=5 // pred_fallthru
        _
      %p356 = scmp.le.s32.totalorder 1, %s25
      %p357 = scmp.lt.s32.totalorder %s25, 5
      %p358 = pnand %p356, %p357
      %p359 = pneg %p358
      // Predicated region
      $region45: #{tpu_custom_call.1} parent=5 // pred_check
        _
      $region46: #{tpu_custom_call.1} parent=5 // pred_check_branch
        %361 = sbr.rel (%p358) target = $region48
      $region47: #{tpu_custom_call.1} parent=5 // pred_region
        %s362 = ssub.s32 %s25, 1
        %s363 = sand.u32 %s50, 1
        %s364 = scalar_lea.sflag [#allocation5], %s363
        %s365 = sand.u32 %s50, 1
        %s366 = smul.addr %s365, 256
        %s367 = scalar_lea.vmem [#allocation4], %s366
        // Predicated region
        $region49: #{tpu_custom_call.1} parent=47 // pred_check
          %p368 = pneg %p63
        $region50: #{tpu_custom_call.1} parent=47 // pred_check_branch
          %370 = sbr.rel (%p368) target = $region52
        $region51: #{tpu_custom_call.1} parent=47 // pred_region
          %371 = dma.done %s364, 4096
        $region52: #{tpu_custom_call.1} parent=47 // pred_fallthru
          _
        %s372 = sand.u32 %s30, 1
        %s373 = scalar_lea.sflag [#allocation8], %s372
        %s374 = sand.u32 %s76, 1
        %s375 = smul.addr %s374, 128
        %s376 = scalar_lea.vmem [#allocation7], %s375
        // Predicated region
        $region53: #{tpu_custom_call.1} parent=47 // pred_check
          %p377 = pneg %p89
        $region54: #{tpu_custom_call.1} parent=47 // pred_check_branch
          %379 = sbr.rel (%p377) target = $region56
        $region55: #{tpu_custom_call.1} parent=47 // pred_region
          %380 = dma.done %s373, 2048
        $region56: #{tpu_custom_call.1} parent=47 // pred_fallthru
          _
        %s381 = sand.u32 %s30, 1
        %s382 = scalar_lea.sflag [#allocation8], %s381
        %s383 = sand.u32 %s128, 1
        %s384 = smul.addr %s383, 16
        %s385 = scalar_lea.vmem [#allocation9], %s384
        // Predicated region
        $region57: #{tpu_custom_call.1} parent=47 // pred_check
          %p386 = pneg %p141
        $region58: #{tpu_custom_call.1} parent=47 // pred_check_branch
          %388 = sbr.rel (%p386) target = $region60
        $region59: #{tpu_custom_call.1} parent=47 // pred_region
          %389 = dma.done %s382, 256
        $region60: #{tpu_custom_call.1} parent=47 // pred_fallthru
          _
        %s390 = sand.u32 %s180, 1
        %s391 = scalar_lea.sflag [#allocation11], %s390
        %s392 = sand.u32 %s180, 1
        %s393 = smul.addr %s392, 128
        %s394 = scalar_lea.vmem [#allocation10], %s393
        // Predicated region
        $region61: #{tpu_custom_call.1} parent=47 // pred_check
          %p395 = pneg %p193
        $region62: #{tpu_custom_call.1} parent=47 // pred_check_branch
          %397 = sbr.rel (%p395) target = $region64
        $region63: #{tpu_custom_call.1} parent=47 // pred_region
          %398 = dma.done %s391, 2048
        $region64: #{tpu_custom_call.1} parent=47 // pred_fallthru
          _
        %s399 = sand.u32 %s50, 1
        %s400 = scalar_lea.sflag [#allocation5], %s399
        %s401 = sand.u32 %s50, 1
        %s402 = smul.addr %s401, 256
        %s403 = scalar_lea.vmem [#allocation4], %s402
        %p404 = pneg %p63
        %p405 = pneg %p60
        %s406 = sand.u32 %s30, 1
        %s407 = scalar_lea.sflag [#allocation8], %s406
        %s408 = sand.u32 %s76, 1
        %s409 = smul.addr %s408, 128
        %s410 = scalar_lea.vmem [#allocation7], %s409
        %p411 = pneg %p89
        %p412 = pneg %p86
        %p413 = scmp.lt.s32.totalorder %s35, 1
        %s414 = scalar_select %p413, %s35, 1
        %s415 = scalar_lea.vmem %s2, %s414
        %p416 = pneg %p115
        %p417 = pneg %p112
        %s418 = sand.u32 %s30, 1
        %s419 = scalar_lea.sflag [#allocation8], %s418
        %s420 = sand.u32 %s128, 1
        %s421 = smul.addr %s420, 16
        %s422 = scalar_lea.vmem [#allocation9], %s421
        %p423 = pneg %p141
        %p424 = pneg %p138
        %p425 = scmp.lt.s32.totalorder %s35, 1
        %s426 = scalar_select %p425, %s35, 1
        %s427 = scalar_lea.vmem %s4, %s426
        %p428 = pneg %p167
        %p429 = pneg %p164
        %s430 = sand.u32 %s180, 1
        %s431 = scalar_lea.sflag [#allocation11], %s430
        %s432 = sand.u32 %s180, 1
        %s433 = smul.addr %s432, 128
        %s434 = scalar_lea.vmem [#allocation10], %s433
        %p435 = pneg %p193
        %p436 = pneg %p190
        %p437 = pneg %p214
        %p438 = pneg %p211
        %p439 = pneg %p240
        %p440 = pneg %p237
        %s441 = sand.u32 %s227, 1
        %s442 = scalar_lea.sflag [#allocation6], %s441
        %s443 = sand.u32 %s227, 1
        %s444 = smul.addr %s443, 256
        %s445 = scalar_lea.vmem [#allocation12], %s444
        %p446 = scmp.lt.s32.totalorder %s35, 1
        %s447 = scalar_select %p446, %s35, 1
        %s448 = scalar_lea.vmem %s2, %s447
        %p449 = scmp.lt.s32.totalorder %s35, 1
        %s450 = scalar_select %p449, %s35, 1
        %s451 = scalar_lea.vmem %s4, %s450
        %s452 = smul.u32 16, %s35
        %p453 = scmp.eq.s32.totalorder %s35, 0
        // Predicated region
        $region65: #{tpu_custom_call.1} parent=47 // pred_check
          %p454 = pneg %p453
        $region66: #{tpu_custom_call.1} parent=47 // pred_check_branch
          %456 = sbr.rel (%p454) target = $region68
        $region67: #{tpu_custom_call.1} parent=47 // pred_region
          %v457 = vld [vmem:[%s6] sm:$0x1]
          %v459 = vlaneseq
          %v460 = vshrl.u32 %v459, 7
          %v461 = vsub.s32 0, %v460
          %v462 = vrot.slane %v457, %v461
          %v464 = vadd.f32 %v462, 0.0
          %465 = vst [vmem:[#allocation3] sm:$0xff] %v464
          %466 = vst [vmem:[#allocation3 + $0x8] sm:$0xff] %v464
          %467 = vst [vmem:[#allocation3 + $0x10] sm:$0xff] %v464
          %468 = vst [vmem:[#allocation3 + $0x18] sm:$0xff] %v464
          %469 = vst [vmem:[#allocation3 + $0x20] sm:$0xff] %v464
          %470 = vst [vmem:[#allocation3 + $0x28] sm:$0xff] %v464
          %471 = vst [vmem:[#allocation3 + $0x30] sm:$0xff] %v464
          %472 = vst [vmem:[#allocation3 + $0x38] sm:$0xff] %v464
          %473 = vst [vmem:[#allocation3 + $0x40] sm:$0xff] %v464
          %474 = vst [vmem:[#allocation3 + $0x48] sm:$0xff] %v464
          %475 = vst [vmem:[#allocation3 + $0x50] sm:$0xff] %v464
          %476 = vst [vmem:[#allocation3 + $0x58] sm:$0xff] %v464
          %477 = vst [vmem:[#allocation3 + $0x60] sm:$0xff] %v464
          %478 = vst [vmem:[#allocation3 + $0x68] sm:$0xff] %v464
          %479 = vst [vmem:[#allocation3 + $0x70] sm:$0xff] %v464
          %480 = vst [vmem:[#allocation3 + $0x78] sm:$0xff] %v464
          %481 = vst [vmem:[#allocation3 + $0x80] sm:$0xff] %v464
          %482 = vst [vmem:[#allocation3 + $0x88] sm:$0xff] %v464
          %483 = vst [vmem:[#allocation3 + $0x90] sm:$0xff] %v464
          %484 = vst [vmem:[#allocation3 + $0x98] sm:$0xff] %v464
          %485 = vst [vmem:[#allocation3 + $0xa0] sm:$0xff] %v464
          %486 = vst [vmem:[#allocation3 + $0xa8] sm:$0xff] %v464
          %487 = vst [vmem:[#allocation3 + $0xb0] sm:$0xff] %v464
          %488 = vst [vmem:[#allocation3 + $0xb8] sm:$0xff] %v464
          %489 = vst [vmem:[#allocation3 + $0xc0] sm:$0xff] %v464
          %490 = vst [vmem:[#allocation3 + $0xc8] sm:$0xff] %v464
          %491 = vst [vmem:[#allocation3 + $0xd0] sm:$0xff] %v464
          %492 = vst [vmem:[#allocation3 + $0xd8] sm:$0xff] %v464
          %493 = vst [vmem:[#allocation3 + $0xe0] sm:$0xff] %v464
          %494 = vst [vmem:[#allocation3 + $0xe8] sm:$0xff] %v464
          %495 = vst [vmem:[#allocation3 + $0xf0] sm:$0xff] %v464
          %496 = vst [vmem:[#allocation3 + $0xf8] sm:$0xff] %v464
          %497 = vst [vmem:[#allocation2] sm:$0xff] 0.0
          %498 = vst [vmem:[#allocation2 + $0x8] sm:$0xff] 0.0
          %499 = vst [vmem:[#allocation2 + $0x10] sm:$0xff] 0.0
          %500 = vst [vmem:[#allocation2 + $0x118] sm:$0xff] 0.0
          %501 = vst [vmem:[#allocation2 + $0x120] sm:$0xff] 0.0
          %502 = vst [vmem:[#allocation2 + $0x128] sm:$0xff] 0.0
        $region68: #{tpu_custom_call.1} parent=47 // pred_fallthru
          _
        %v503 = vld [vmem:[%s367] sm:$0xff]
        %v504 = vld [vmem:[%s367 + $0x8] sm:$0xff]
        %v505 = vld [vmem:[%s367 + $0x10] sm:$0xff]
        %v506 = vld [vmem:[%s367 + $0x18] sm:$0xff]
        %v507 = vld [vmem:[%s367 + $0x20] sm:$0xff]
        %v508 = vld [vmem:[%s367 + $0x28] sm:$0xff]
        %v509 = vld [vmem:[%s367 + $0x30] sm:$0xff]
        %v510 = vld [vmem:[%s367 + $0x38] sm:$0xff]
        %v511 = vld [vmem:[%s367 + $0x40] sm:$0xff]
        %v512 = vld [vmem:[%s367 + $0x48] sm:$0xff]
        %v513 = vld [vmem:[%s367 + $0x50] sm:$0xff]
        %v514 = vld [vmem:[%s367 + $0x58] sm:$0xff]
        %v515 = vld [vmem:[%s367 + $0x60] sm:$0xff]
        %v516 = vld [vmem:[%s367 + $0x68] sm:$0xff]
        %v517 = vld [vmem:[%s367 + $0x70] sm:$0xff]
        %v518 = vld [vmem:[%s367 + $0x78] sm:$0xff]
        %v519 = vld [vmem:[%s367 + $0x80] sm:$0xff]
        %v520 = vld [vmem:[%s367 + $0x88] sm:$0xff]
        %v521 = vld [vmem:[%s367 + $0x90] sm:$0xff]
        %v522 = vld [vmem:[%s367 + $0x98] sm:$0xff]
        %v523 = vld [vmem:[%s367 + $0xa0] sm:$0xff]
        %v524 = vld [vmem:[%s367 + $0xa8] sm:$0xff]
        %v525 = vld [vmem:[%s367 + $0xb0] sm:$0xff]
        %v526 = vld [vmem:[%s367 + $0xb8] sm:$0xff]
        %v527 = vld [vmem:[%s367 + $0xc0] sm:$0xff]
        %v528 = vld [vmem:[%s367 + $0xc8] sm:$0xff]
        %v529 = vld [vmem:[%s367 + $0xd0] sm:$0xff]
        %v530 = vld [vmem:[%s367 + $0xd8] sm:$0xff]
        %v531 = vld [vmem:[%s367 + $0xe0] sm:$0xff]
        %v532 = vld [vmem:[%s367 + $0xe8] sm:$0xff]
        %v533 = vld [vmem:[%s367 + $0xf0] sm:$0xff]
        %v534 = vld [vmem:[%s367 + $0xf8] sm:$0xff]
        %v535 = vld [vmem:[%s376] sm:$0xff]
        %v536 = vld [vmem:[%s376 + $0x8] sm:$0xff]
        %v537 = vld [vmem:[%s376 + $0x10] sm:$0xff]
        %v538 = vld [vmem:[%s376 + $0x18] sm:$0xff]
        %v539 = vld [vmem:[%s376 + $0x20] sm:$0xff]
        %v540 = vld [vmem:[%s376 + $0x28] sm:$0xff]
        %v541 = vld [vmem:[%s376 + $0x30] sm:$0xff]
        %v542 = vld [vmem:[%s376 + $0x38] sm:$0xff]
        %v543 = vld [vmem:[%s376 + $0x40] sm:$0xff]
        %v544 = vld [vmem:[%s376 + $0x48] sm:$0xff]
        %v545 = vld [vmem:[%s376 + $0x50] sm:$0xff]
        %v546 = vld [vmem:[%s376 + $0x58] sm:$0xff]
        %v547 = vld [vmem:[%s376 + $0x60] sm:$0xff]
        %v548 = vld [vmem:[%s376 + $0x68] sm:$0xff]
        %v549 = vld [vmem:[%s376 + $0x70] sm:$0xff]
        %v550 = vld [vmem:[%s376 + $0x78] sm:$0xff]
        %v551 = vld [vmem:[%s448] sm:$0x1]
        %v553 = vlaneseq
        %v554 = vshrl.u32 %v553, 7
        %v555 = vsub.s32 0, %v554
        %v556 = vrot.slane %v551, %v555
        %558 = vmatprep.subr.mxu0 0.0
        %559 = vmatpush1.msra.mxu0 %v550
        %560 = vmatprep.subr.mxu0 0.0
        %561 = vmatpush1.msra.mxu0 %v549
        %562 = vmatprep.subr.mxu0 0.0
        %563 = vmatpush1.msra.mxu0 %v548
        %564 = vmatprep.subr.mxu0 0.0
        %565 = vmatpush1.msra.mxu0 %v547
        %566 = vmatprep.subr.mxu0 0.0
        %567 = vmatpush1.msra.mxu0 %v546
        %568 = vmatprep.subr.mxu0 0.0
        %569 = vmatpush1.msra.mxu0 %v545
        %570 = vmatprep.subr.mxu0 0.0
        %571 = vmatpush1.msra.mxu0 %v544
        %572 = vmatprep.subr.mxu0 0.0
        %573 = vmatpush1.msra.mxu0 %v543
        %574 = vmatprep.subr.mxu0 0.0
        %575 = vmatpush1.msra.mxu0 %v542
        %576 = vmatprep.subr.mxu0 0.0
        %577 = vmatpush1.msra.mxu0 %v541
        %578 = vmatprep.subr.mxu0 0.0
        %579 = vmatpush1.msra.mxu0 %v540
        %580 = vmatprep.subr.mxu0 0.0
        %581 = vmatpush1.msra.mxu0 %v539
        %582 = vmatprep.subr.mxu0 0.0
        %583 = vmatpush1.msra.mxu0 %v538
        %584 = vmatprep.subr.mxu0 0.0
        %585 = vmatpush1.msra.mxu0 %v537
        %586 = vmatprep.subr.mxu0 0.0
        %587 = vmatpush1.msra.mxu0 %v536
        %588 = vmatprep.subr.mxu0 0.0
        %589 = vmatpush1.msra.mxu0 %v535
        %590 = vmatprep.subr.mxu0 0.0
        %591 = vmatpush2.msra.mxu0 0.0
        %592 = vmatprep.subr.mxu0 0.0
        %593 = vmatpush2.msra.mxu0 0.0
        %594 = vmatprep.subr.mxu0 0.0
        %595 = vmatpush2.msra.mxu0 0.0
        %596 = vmatprep.subr.mxu0 0.0
        %597 = vmatpush2.msra.mxu0 0.0
        %598 = vmatprep.subr.mxu0 0.0
        %599 = vmatpush2.msra.mxu0 0.0
        %600 = vmatprep.subr.mxu0 0.0
        %601 = vmatpush2.msra.mxu0 0.0
        %602 = vmatprep.subr.mxu0 0.0
        %603 = vmatpush2.msra.mxu0 0.0
        %604 = vmatprep.subr.mxu0 0.0
        %605 = vmatpush2.msra.mxu0 0.0
        %606 = vmatprep.subr.mxu0 0.0
        %607 = vmatpush2.msra.mxu0 0.0
        %608 = vmatprep.subr.mxu0 0.0
        %609 = vmatpush2.msra.mxu0 0.0
        %610 = vmatprep.subr.mxu0 0.0
        %611 = vmatpush2.msra.mxu0 0.0
        %612 = vmatprep.subr.mxu0 0.0
        %613 = vmatpush2.msra.mxu0 0.0
        %614 = vmatprep.subr.mxu0 0.0
        %615 = vmatpush2.msra.mxu0 0.0
        %616 = vmatprep.subr.mxu0 0.0
        %617 = vmatpush2.msra.mxu0 0.0
        %618 = vmatprep.subr.mxu0 0.0
        %619 = vmatpush2.msra.mxu0 0.0
        %620 = vmatprep.subr.mxu0 0.0
        %621 = vmatpush2.msra.mxu0 0.0
        %622 = vmatprep.mubr.f32.mxu0 0.0
        %623 = vmatmul.mubr.f32.gmra.mxu0 %v503
        %v624 = vpop.f32.mrf.mxu0
        %v625 = vadd.f32 %v556, %v624
        %v626 = vpop.f32.mrf.mxu0
        %627 = vmatprep.mubr.f32.mxu0 0.0
        %628 = vmatmul.mubr.f32.gmra.mxu0 %v504
        %v629 = vpop.f32.mrf.mxu0
        %v630 = vadd.f32 %v556, %v629
        %v631 = vpop.f32.mrf.mxu0
        %632 = vmatprep.mubr.f32.mxu0 0.0
        %633 = vmatmul.mubr.f32.gmra.mxu0 %v505
        %v634 = vpop.f32.mrf.mxu0
        %v635 = vadd.f32 %v556, %v634
        %v636 = vpop.f32.mrf.mxu0
        %637 = vmatprep.mubr.f32.mxu0 0.0
        %638 = vmatmul.mubr.f32.gmra.mxu0 %v506
        %v639 = vpop.f32.mrf.mxu0
        %v640 = vadd.f32 %v556, %v639
        %v641 = vpop.f32.mrf.mxu0
        %642 = vmatprep.mubr.f32.mxu0 0.0
        %643 = vmatmul.mubr.f32.gmra.mxu0 %v507
        %v644 = vpop.f32.mrf.mxu0
        %v645 = vadd.f32 %v556, %v644
        %v646 = vpop.f32.mrf.mxu0
        %647 = vmatprep.mubr.f32.mxu0 0.0
        %648 = vmatmul.mubr.f32.gmra.mxu0 %v508
        %v649 = vpop.f32.mrf.mxu0
        %v650 = vadd.f32 %v556, %v649
        %v651 = vpop.f32.mrf.mxu0
        %652 = vmatprep.mubr.f32.mxu0 0.0
        %653 = vmatmul.mubr.f32.gmra.mxu0 %v509
        %v654 = vpop.f32.mrf.mxu0
        %v655 = vadd.f32 %v556, %v654
        %v656 = vpop.f32.mrf.mxu0
        %657 = vmatprep.mubr.f32.mxu0 0.0
        %658 = vmatmul.mubr.f32.gmra.mxu0 %v510
        %v659 = vpop.f32.mrf.mxu0
        %v660 = vadd.f32 %v556, %v659
        %v661 = vpop.f32.mrf.mxu0
        %662 = vmatprep.mubr.f32.mxu0 0.0
        %663 = vmatmul.mubr.f32.gmra.mxu0 %v511
        %v664 = vpop.f32.mrf.mxu0
        %v665 = vadd.f32 %v556, %v664
        %v666 = vpop.f32.mrf.mxu0
        %667 = vmatprep.mubr.f32.mxu0 0.0
        %668 = vmatmul.mubr.f32.gmra.mxu0 %v512
        %v669 = vpop.f32.mrf.mxu0
        %v670 = vadd.f32 %v556, %v669
        %v671 = vpop.f32.mrf.mxu0
        %672 = vmatprep.mubr.f32.mxu0 0.0
        %673 = vmatmul.mubr.f32.gmra.mxu0 %v513
        %v674 = vpop.f32.mrf.mxu0
        %v675 = vadd.f32 %v556, %v674
        %v676 = vpop.f32.mrf.mxu0
        %677 = vmatprep.mubr.f32.mxu0 0.0
        %678 = vmatmul.mubr.f32.gmra.mxu0 %v514
        %v679 = vpop.f32.mrf.mxu0
        %v680 = vadd.f32 %v556, %v679
        %v681 = vpop.f32.mrf.mxu0
        %682 = vmatprep.mubr.f32.mxu0 0.0
        %683 = vmatmul.mubr.f32.gmra.mxu0 %v515
        %v684 = vpop.f32.mrf.mxu0
        %v685 = vadd.f32 %v556, %v684
        %v686 = vpop.f32.mrf.mxu0
        %687 = vmatprep.mubr.f32.mxu0 0.0
        %688 = vmatmul.mubr.f32.gmra.mxu0 %v516
        %v689 = vpop.f32.mrf.mxu0
        %v690 = vadd.f32 %v556, %v689
        %v691 = vpop.f32.mrf.mxu0
        %692 = vmatprep.mubr.f32.mxu0 0.0
        %693 = vmatmul.mubr.f32.gmra.mxu0 %v517
        %v694 = vpop.f32.mrf.mxu0
        %v695 = vadd.f32 %v556, %v694
        %v696 = vpop.f32.mrf.mxu0
        %697 = vmatprep.mubr.f32.mxu0 0.0
        %698 = vmatmul.mubr.f32.gmra.mxu0 %v518
        %v699 = vpop.f32.mrf.mxu0
        %v700 = vadd.f32 %v556, %v699
        %v701 = vpop.f32.mrf.mxu0
        %702 = vmatprep.mubr.f32.mxu0 0.0
        %703 = vmatmul.mubr.f32.gmra.mxu0 %v519
        %v704 = vpop.f32.mrf.mxu0
        %v705 = vadd.f32 %v556, %v704
        %v706 = vpop.f32.mrf.mxu0
        %707 = vmatprep.mubr.f32.mxu0 0.0
        %708 = vmatmul.mubr.f32.gmra.mxu0 %v520
        %v709 = vpop.f32.mrf.mxu0
        %v710 = vadd.f32 %v556, %v709
        %v711 = vpop.f32.mrf.mxu0
        %712 = vmatprep.mubr.f32.mxu0 0.0
        %713 = vmatmul.mubr.f32.gmra.mxu0 %v521
        %v714 = vpop.f32.mrf.mxu0
        %v715 = vadd.f32 %v556, %v714
        %v716 = vpop.f32.mrf.mxu0
        %717 = vmatprep.mubr.f32.mxu0 0.0
        %718 = vmatmul.mubr.f32.gmra.mxu0 %v522
        %v719 = vpop.f32.mrf.mxu0
        %v720 = vadd.f32 %v556, %v719
        %v721 = vpop.f32.mrf.mxu0
        %722 = vmatprep.mubr.f32.mxu0 0.0
        %723 = vmatmul.mubr.f32.gmra.mxu0 %v523
        %v724 = vpop.f32.mrf.mxu0
        %v725 = vadd.f32 %v556, %v724
        %v726 = vpop.f32.mrf.mxu0
        %727 = vmatprep.mubr.f32.mxu0 0.0
        %728 = vmatmul.mubr.f32.gmra.mxu0 %v524
        %v729 = vpop.f32.mrf.mxu0
        %v730 = vadd.f32 %v556, %v729
        %v731 = vpop.f32.mrf.mxu0
        %732 = vmatprep.mubr.f32.mxu0 0.0
        %733 = vmatmul.mubr.f32.gmra.mxu0 %v525
        %v734 = vpop.f32.mrf.mxu0
        %v735 = vadd.f32 %v556, %v734
        %v736 = vpop.f32.mrf.mxu0
        %737 = vmatprep.mubr.f32.mxu0 0.0
        %738 = vmatmul.mubr.f32.gmra.mxu0 %v526
        %v739 = vpop.f32.mrf.mxu0
        %v740 = vadd.f32 %v556, %v739
        %v741 = vpop.f32.mrf.mxu0
        %742 = vmatprep.mubr.f32.mxu0 0.0
        %743 = vmatmul.mubr.f32.gmra.mxu0 %v527
        %v744 = vpop.f32.mrf.mxu0
        %v745 = vadd.f32 %v556, %v744
        %v746 = vpop.f32.mrf.mxu0
        %747 = vmatprep.mubr.f32.mxu0 0.0
        %748 = vmatmul.mubr.f32.gmra.mxu0 %v528
        %v749 = vpop.f32.mrf.mxu0
        %v750 = vadd.f32 %v556, %v749
        %v751 = vpop.f32.mrf.mxu0
        %752 = vmatprep.mubr.f32.mxu0 0.0
        %753 = vmatmul.mubr.f32.gmra.mxu0 %v529
        %v754 = vpop.f32.mrf.mxu0
        %v755 = vadd.f32 %v556, %v754
        %v756 = vpop.f32.mrf.mxu0
        %757 = vmatprep.mubr.f32.mxu0 0.0
        %758 = vmatmul.mubr.f32.gmra.mxu0 %v530
        %v759 = vpop.f32.mrf.mxu0
        %v760 = vadd.f32 %v556, %v759
        %v761 = vpop.f32.mrf.mxu0
        %762 = vmatprep.mubr.f32.mxu0 0.0
        %763 = vmatmul.mubr.f32.gmra.mxu0 %v531
        %v764 = vpop.f32.mrf.mxu0
        %v765 = vadd.f32 %v556, %v764
        %v766 = vpop.f32.mrf.mxu0
        %767 = vmatprep.mubr.f32.mxu0 0.0
        %768 = vmatmul.mubr.f32.gmra.mxu0 %v532
        %v769 = vpop.f32.mrf.mxu0
        %v770 = vadd.f32 %v556, %v769
        %v771 = vpop.f32.mrf.mxu0
        %772 = vmatprep.mubr.f32.mxu0 0.0
        %773 = vmatmul.mubr.f32.gmra.mxu0 %v533
        %v774 = vpop.f32.mrf.mxu0
        %v775 = vadd.f32 %v556, %v774
        %v776 = vpop.f32.mrf.mxu0
        %777 = vmatprep.mubr.f32.mxu0 0.0
        %778 = vmatmul.mubr.f32.gmra.mxu0 %v534
        %v779 = vpop.f32.mrf.mxu0
        %v780 = vadd.f32 %v556, %v779
        %v781 = vpop.f32.mrf.mxu0
        %782 = vdwg.mxu0
        %v783 = vmax.f32 %v625, 0.0
        %v784 = vmax.f32 %v630, 0.0
        %v785 = vmax.f32 %v635, 0.0
        %v786 = vmax.f32 %v640, 0.0
        %v787 = vmax.f32 %v645, 0.0
        %v788 = vmax.f32 %v650, 0.0
        %v789 = vmax.f32 %v655, 0.0
        %v790 = vmax.f32 %v660, 0.0
        %v791 = vmax.f32 %v665, 0.0
        %v792 = vmax.f32 %v670, 0.0
        %v793 = vmax.f32 %v675, 0.0
        %v794 = vmax.f32 %v680, 0.0
        %v795 = vmax.f32 %v685, 0.0
        %v796 = vmax.f32 %v690, 0.0
        %v797 = vmax.f32 %v695, 0.0
        %v798 = vmax.f32 %v700, 0.0
        %v799 = vmax.f32 %v705, 0.0
        %v800 = vmax.f32 %v710, 0.0
        %v801 = vmax.f32 %v715, 0.0
        %v802 = vmax.f32 %v720, 0.0
        %v803 = vmax.f32 %v725, 0.0
        %v804 = vmax.f32 %v730, 0.0
        %v805 = vmax.f32 %v735, 0.0
        %v806 = vmax.f32 %v740, 0.0
        %v807 = vmax.f32 %v745, 0.0
        %v808 = vmax.f32 %v750, 0.0
        %v809 = vmax.f32 %v755, 0.0
        %v810 = vmax.f32 %v760, 0.0
        %v811 = vmax.f32 %v765, 0.0
        %v812 = vmax.f32 %v770, 0.0
        %v813 = vmax.f32 %v775, 0.0
        %v814 = vmax.f32 %v780, 0.0
        %815 = vst [vmem:[#allocation2 + $0x18] sm:$0xff] %v783
        %816 = vst [vmem:[#allocation2 + $0x20] sm:$0xff] %v784
        %817 = vst [vmem:[#allocation2 + $0x28] sm:$0xff] %v785
        %818 = vst [vmem:[#allocation2 + $0x30] sm:$0xff] %v786
        %819 = vst [vmem:[#allocation2 + $0x38] sm:$0xff] %v787
        %820 = vst [vmem:[#allocation2 + $0x40] sm:$0xff] %v788
        %821 = vst [vmem:[#allocation2 + $0x48] sm:$0xff] %v789
        %822 = vst [vmem:[#allocation2 + $0x50] sm:$0xff] %v790
        %823 = vst [vmem:[#allocation2 + $0x58] sm:$0xff] %v791
        %824 = vst [vmem:[#allocation2 + $0x60] sm:$0xff] %v792
        %825 = vst [vmem:[#allocation2 + $0x68] sm:$0xff] %v793
        %826 = vst [vmem:[#allocation2 + $0x70] sm:$0xff] %v794
        %827 = vst [vmem:[#allocation2 + $0x78] sm:$0xff] %v795
        %828 = vst [vmem:[#allocation2 + $0x80] sm:$0xff] %v796
        %829 = vst [vmem:[#allocation2 + $0x88] sm:$0xff] %v797
        %830 = vst [vmem:[#allocation2 + $0x90] sm:$0xff] %v798
        %831 = vst [vmem:[#allocation2 + $0x98] sm:$0xff] %v799
        %832 = vst [vmem:[#allocation2 + $0xa0] sm:$0xff] %v800
        %833 = vst [vmem:[#allocation2 + $0xa8] sm:$0xff] %v801
        %834 = vst [vmem:[#allocation2 + $0xb0] sm:$0xff] %v802
        %835 = vst [vmem:[#allocation2 + $0xb8] sm:$0xff] %v803
        %836 = vst [vmem:[#allocation2 + $0xc0] sm:$0xff] %v804
        %837 = vst [vmem:[#allocation2 + $0xc8] sm:$0xff] %v805
        %838 = vst [vmem:[#allocation2 + $0xd0] sm:$0xff] %v806
        %839 = vst [vmem:[#allocation2 + $0xd8] sm:$0xff] %v807
        %840 = vst [vmem:[#allocation2 + $0xe0] sm:$0xff] %v808
        %841 = vst [vmem:[#allocation2 + $0xe8] sm:$0xff] %v809
        %842 = vst [vmem:[#allocation2 + $0xf0] sm:$0xff] %v810
        %843 = vst [vmem:[#allocation2 + $0xf8] sm:$0xff] %v811
        %844 = vst [vmem:[#allocation2 + $0x100] sm:$0xff] %v812
        %845 = vst [vmem:[#allocation2 + $0x108] sm:$0xff] %v813
        %846 = vst [vmem:[#allocation2 + $0x110] sm:$0xff] %v814
        %v847 = vlaneseq
        %v848 = vshrl.u32 %v847, 7
        %v849 = vadd.s32 %v848, 8
        %v850 = vadd.s32 %v848, 16
        %v851 = vadd.s32 %v848, 24
        %v852 = vadd.s32 %v848, 32
        %v853 = vadd.s32 %v848, 40
        %v854 = vadd.s32 %v848, 48
        %v855 = vadd.s32 %v848, 56
        %v856 = vadd.s32 %v848, 64
        %v857 = vadd.s32 %v848, 72
        %v858 = vadd.s32 %v848, 80
        %v859 = vadd.s32 %v848, 88
        %v860 = vadd.s32 %v848, 96
        %v861 = vadd.s32 %v848, 104
        %v862 = vadd.s32 %v848, 112
        %v863 = vadd.s32 %v848, 120
        %v864 = vadd.s32 %v848, 128
        %v865 = vadd.s32 %v848, 136
        %v866 = vadd.s32 %v848, 144
        %v867 = vadd.s32 %v848, 152
        %v868 = vadd.s32 %v848, 160
        %v869 = vadd.s32 %v848, 168
        %v870 = vadd.s32 %v848, 176
        %v871 = vadd.s32 %v848, 184
        %v872 = vadd.s32 %v848, 192
        %v873 = vadd.s32 %v848, 200
        %v874 = vadd.s32 %v848, 208
        %v875 = vadd.s32 %v848, 216
        %v876 = vadd.s32 %v848, 224
        %v877 = vadd.s32 %v848, 232
        %v878 = vadd.s32 %v848, 240
        %v879 = vadd.s32 %v848, 248
        %vm880 = vcmp.lt.s32.totalorder %v848, 0
        %v881 = vsub.s32 0, %v848
        %v882 = vsel %vm880, %v881, %v848
        %v883 = vshrl.u32 %v882, 4
        %v884 = vand.u32 %v882, 15
        %v885 = vsub.s32 0, %v884
        %v886 = vsel %vm880, %v885, %v884
        %vm887 = vcmp.lt.s32.totalorder %v849, 0
        %v888 = vsub.s32 0, %v849
        %v889 = vsel %vm887, %v888, %v849
        %v890 = vshrl.u32 %v889, 4
        %v891 = vand.u32 %v889, 15
        %v892 = vsub.s32 0, %v891
        %v893 = vsel %vm887, %v892, %v891
        %vm894 = vcmp.lt.s32.totalorder %v850, 0
        %v895 = vsub.s32 0, %v850
        %v896 = vsel %vm894, %v895, %v850
        %v897 = vshrl.u32 %v896, 4
        %v898 = vand.u32 %v896, 15
        %v899 = vsub.s32 0, %v898
        %v900 = vsel %vm894, %v899, %v898
        %vm901 = vcmp.lt.s32.totalorder %v851, 0
        %v902 = vsub.s32 0, %v851
        %v903 = vsel %vm901, %v902, %v851
        %v904 = vshrl.u32 %v903, 4
        %v905 = vand.u32 %v903, 15
        %v906 = vsub.s32 0, %v905
        %v907 = vsel %vm901, %v906, %v905
        %vm908 = vcmp.lt.s32.totalorder %v852, 0
        %v909 = vsub.s32 0, %v852
        %v910 = vsel %vm908, %v909, %v852
        %v911 = vshrl.u32 %v910, 4
        %v912 = vand.u32 %v910, 15
        %v913 = vsub.s32 0, %v912
        %v914 = vsel %vm908, %v913, %v912
        %vm915 = vcmp.lt.s32.totalorder %v853, 0
        %v916 = vsub.s32 0, %v853
        %v917 = vsel %vm915, %v916, %v853
        %v918 = vshrl.u32 %v917, 4
        %v919 = vand.u32 %v917, 15
        %v920 = vsub.s32 0, %v919
        %v921 = vsel %vm915, %v920, %v919
        %vm922 = vcmp.lt.s32.totalorder %v854, 0
        %v923 = vsub.s32 0, %v854
        %v924 = vsel %vm922, %v923, %v854
        %v925 = vshrl.u32 %v924, 4
        %v926 = vand.u32 %v924, 15
        %v927 = vsub.s32 0, %v926
        %v928 = vsel %vm922, %v927, %v926
        %vm929 = vcmp.lt.s32.totalorder %v855, 0
        %v930 = vsub.s32 0, %v855
        %v931 = vsel %vm929, %v930, %v855
        %v932 = vshrl.u32 %v931, 4
        %v933 = vand.u32 %v931, 15
        %v934 = vsub.s32 0, %v933
        %v935 = vsel %vm929, %v934, %v933
        %vm936 = vcmp.lt.s32.totalorder %v856, 0
        %v937 = vsub.s32 0, %v856
        %v938 = vsel %vm936, %v937, %v856
        %v939 = vshrl.u32 %v938, 4
        %v940 = vand.u32 %v938, 15
        %v941 = vsub.s32 0, %v940
        %v942 = vsel %vm936, %v941, %v940
        %vm943 = vcmp.lt.s32.totalorder %v857, 0
        %v944 = vsub.s32 0, %v857
        %v945 = vsel %vm943, %v944, %v857
        %v946 = vshrl.u32 %v945, 4
        %v947 = vand.u32 %v945, 15
        %v948 = vsub.s32 0, %v947
        %v949 = vsel %vm943, %v948, %v947
        %vm950 = vcmp.lt.s32.totalorder %v858, 0
        %v951 = vsub.s32 0, %v858
        %v952 = vsel %vm950, %v951, %v858
        %v953 = vshrl.u32 %v952, 4
        %v954 = vand.u32 %v952, 15
        %v955 = vsub.s32 0, %v954
        %v956 = vsel %vm950, %v955, %v954
        %vm957 = vcmp.lt.s32.totalorder %v859, 0
        %v958 = vsub.s32 0, %v859
        %v959 = vsel %vm957, %v958, %v859
        %v960 = vshrl.u32 %v959, 4
        %v961 = vand.u32 %v959, 15
        %v962 = vsub.s32 0, %v961
        %v963 = vsel %vm957, %v962, %v961
        %vm964 = vcmp.lt.s32.totalorder %v860, 0
        %v965 = vsub.s32 0, %v860
        %v966 = vsel %vm964, %v965, %v860
        %v967 = vshrl.u32 %v966, 4
        %v968 = vand.u32 %v966, 15
        %v969 = vsub.s32 0, %v968
        %v970 = vsel %vm964, %v969, %v968
        %vm971 = vcmp.lt.s32.totalorder %v861, 0
        %v972 = vsub.s32 0, %v861
        %v973 = vsel %vm971, %v972, %v861
        %v974 = vshrl.u32 %v973, 4
        %v975 = vand.u32 %v973, 15
        %v976 = vsub.s32 0, %v975
        %v977 = vsel %vm971, %v976, %v975
        %vm978 = vcmp.lt.s32.totalorder %v862, 0
        %v979 = vsub.s32 0, %v862
        %v980 = vsel %vm978, %v979, %v862
        %v981 = vshrl.u32 %v980, 4
        %v982 = vand.u32 %v980, 15
        %v983 = vsub.s32 0, %v982
        %v984 = vsel %vm978, %v983, %v982
        %vm985 = vcmp.lt.s32.totalorder %v863, 0
        %v986 = vsub.s32 0, %v863
        %v987 = vsel %vm985, %v986, %v863
        %v988 = vshrl.u32 %v987, 4
        %v989 = vand.u32 %v987, 15
        %v990 = vsub.s32 0, %v989
        %v991 = vsel %vm985, %v990, %v989
        %vm992 = vcmp.lt.s32.totalorder %v864, 0
        %v993 = vsub.s32 0, %v864
        %v994 = vsel %vm992, %v993, %v864
        %v995 = vshrl.u32 %v994, 4
        %v996 = vand.u32 %v994, 15
        %v997 = vsub.s32 0, %v996
        %v998 = vsel %vm992, %v997, %v996
        %vm999 = vcmp.lt.s32.totalorder %v865, 0
        %v1000 = vsub.s32 0, %v865
        %v1001 = vsel %vm999, %v1000, %v865
        %v1002 = vshrl.u32 %v1001, 4
        %v1003 = vand.u32 %v1001, 15
        %v1004 = vsub.s32 0, %v1003
        %v1005 = vsel %vm999, %v1004, %v1003
        %vm1006 = vcmp.lt.s32.totalorder %v866, 0
        %v1007 = vsub.s32 0, %v866
        %v1008 = vsel %vm1006, %v1007, %v866
        %v1009 = vshrl.u32 %v1008, 4
        %v1010 = vand.u32 %v1008, 15
        %v1011 = vsub.s32 0, %v1010
        %v1012 = vsel %vm1006, %v1011, %v1010
        %vm1013 = vcmp.lt.s32.totalorder %v867, 0
        %v1014 = vsub.s32 0, %v867
        %v1015 = vsel %vm1013, %v1014, %v867
        %v1016 = vshrl.u32 %v1015, 4
        %v1017 = vand.u32 %v1015, 15
        %v1018 = vsub.s32 0, %v1017
        %v1019 = vsel %vm1013, %v1018, %v1017
        %vm1020 = vcmp.lt.s32.totalorder %v868, 0
        %v1021 = vsub.s32 0, %v868
        %v1022 = vsel %vm1020, %v1021, %v868
        %v1023 = vshrl.u32 %v1022, 4
        %v1024 = vand.u32 %v1022, 15
        %v1025 = vsub.s32 0, %v1024
        %v1026 = vsel %vm1020, %v1025, %v1024
        %vm1027 = vcmp.lt.s32.totalorder %v869, 0
        %v1028 = vsub.s32 0, %v869
        %v1029 = vsel %vm1027, %v1028, %v869
        %v1030 = vshrl.u32 %v1029, 4
        %v1031 = vand.u32 %v1029, 15
        %v1032 = vsub.s32 0, %v1031
        %v1033 = vsel %vm1027, %v1032, %v1031
        %vm1034 = vcmp.lt.s32.totalorder %v870, 0
        %v1035 = vsub.s32 0, %v870
        %v1036 = vsel %vm1034, %v1035, %v870
        %v1037 = vshrl.u32 %v1036, 4
        %v1038 = vand.u32 %v1036, 15
        %v1039 = vsub.s32 0, %v1038
        %v1040 = vsel %vm1034, %v1039, %v1038
        %vm1041 = vcmp.lt.s32.totalorder %v871, 0
        %v1042 = vsub.s32 0, %v871
        %v1043 = vsel %vm1041, %v1042, %v871
        %v1044 = vshrl.u32 %v1043, 4
        %v1045 = vand.u32 %v1043, 15
        %v1046 = vsub.s32 0, %v1045
        %v1047 = vsel %vm1041, %v1046, %v1045
        %vm1048 = vcmp.lt.s32.totalorder %v872, 0
        %v1049 = vsub.s32 0, %v872
        %v1050 = vsel %vm1048, %v1049, %v872
        %v1051 = vshrl.u32 %v1050, 4
        %v1052 = vand.u32 %v1050, 15
        %v1053 = vsub.s32 0, %v1052
        %v1054 = vsel %vm1048, %v1053, %v1052
        %vm1055 = vcmp.lt.s32.totalorder %v873, 0
        %v1056 = vsub.s32 0, %v873
        %v1057 = vsel %vm1055, %v1056, %v873
        %v1058 = vshrl.u32 %v1057, 4
        %v1059 = vand.u32 %v1057, 15
        %v1060 = vsub.s32 0, %v1059
        %v1061 = vsel %vm1055, %v1060, %v1059
        %vm1062 = vcmp.lt.s32.totalorder %v874, 0
        %v1063 = vsub.s32 0, %v874
        %v1064 = vsel %vm1062, %v1063, %v874
        %v1065 = vshrl.u32 %v1064, 4
        %v1066 = vand.u32 %v1064, 15
        %v1067 = vsub.s32 0, %v1066
        %v1068 = vsel %vm1062, %v1067, %v1066
        %vm1069 = vcmp.lt.s32.totalorder %v875, 0
        %v1070 = vsub.s32 0, %v875
        %v1071 = vsel %vm1069, %v1070, %v875
        %v1072 = vshrl.u32 %v1071, 4
        %v1073 = vand.u32 %v1071, 15
        %v1074 = vsub.s32 0, %v1073
        %v1075 = vsel %vm1069, %v1074, %v1073
        %vm1076 = vcmp.lt.s32.totalorder %v876, 0
        %v1077 = vsub.s32 0, %v876
        %v1078 = vsel %vm1076, %v1077, %v876
        %v1079 = vshrl.u32 %v1078, 4
        %v1080 = vand.u32 %v1078, 15
        %v1081 = vsub.s32 0, %v1080
        %v1082 = vsel %vm1076, %v1081, %v1080
        %vm1083 = vcmp.lt.s32.totalorder %v877, 0
        %v1084 = vsub.s32 0, %v877
        %v1085 = vsel %vm1083, %v1084, %v877
        %v1086 = vshrl.u32 %v1085, 4
        %v1087 = vand.u32 %v1085, 15
        %v1088 = vsub.s32 0, %v1087
        %v1089 = vsel %vm1083, %v1088, %v1087
        %vm1090 = vcmp.lt.s32.totalorder %v878, 0
        %v1091 = vsub.s32 0, %v878
        %v1092 = vsel %vm1090, %v1091, %v878
        %v1093 = vshrl.u32 %v1092, 4
        %v1094 = vand.u32 %v1092, 15
        %v1095 = vsub.s32 0, %v1094
        %v1096 = vsel %vm1090, %v1095, %v1094
        %vm1097 = vcmp.lt.s32.totalorder %v879, 0
        %v1098 = vsub.s32 0, %v879
        %v1099 = vsel %vm1097, %v1098, %v879
        %v1100 = vshrl.u32 %v1099, 4
        %v1101 = vand.u32 %v1099, 15
        %v1102 = vsub.s32 0, %v1101
        %v1103 = vsel %vm1097, %v1102, %v1101
        %vm1104 = vcmp.ne.s32.totalorder %v886, 0
        %vm1105 = vcmp.ne.s32.totalorder %v893, 0
        %vm1106 = vcmp.ne.s32.totalorder %v900, 0
        %vm1107 = vcmp.ne.s32.totalorder %v907, 0
        %vm1108 = vcmp.ne.s32.totalorder %v914, 0
        %vm1109 = vcmp.ne.s32.totalorder %v921, 0
        %vm1110 = vcmp.ne.s32.totalorder %v928, 0
        %vm1111 = vcmp.ne.s32.totalorder %v935, 0
        %vm1112 = vcmp.ne.s32.totalorder %v942, 0
        %vm1113 = vcmp.ne.s32.totalorder %v949, 0
        %vm1114 = vcmp.ne.s32.totalorder %v956, 0
        %vm1115 = vcmp.ne.s32.totalorder %v963, 0
        %vm1116 = vcmp.ne.s32.totalorder %v970, 0
        %vm1117 = vcmp.ne.s32.totalorder %v977, 0
        %vm1118 = vcmp.ne.s32.totalorder %v984, 0
        %vm1119 = vcmp.ne.s32.totalorder %v991, 0
        %vm1120 = vcmp.ne.s32.totalorder %v998, 0
        %vm1121 = vcmp.ne.s32.totalorder %v1005, 0
        %vm1122 = vcmp.ne.s32.totalorder %v1012, 0
        %vm1123 = vcmp.ne.s32.totalorder %v1019, 0
        %vm1124 = vcmp.ne.s32.totalorder %v1026, 0
        %vm1125 = vcmp.ne.s32.totalorder %v1033, 0
        %vm1126 = vcmp.ne.s32.totalorder %v1040, 0
        %vm1127 = vcmp.ne.s32.totalorder %v1047, 0
        %vm1128 = vcmp.ne.s32.totalorder %v1054, 0
        %vm1129 = vcmp.ne.s32.totalorder %v1061, 0
        %vm1130 = vcmp.ne.s32.totalorder %v1068, 0
        %vm1131 = vcmp.ne.s32.totalorder %v1075, 0
        %vm1132 = vcmp.ne.s32.totalorder %v1082, 0
        %vm1133 = vcmp.ne.s32.totalorder %v1089, 0
        %vm1134 = vcmp.ne.s32.totalorder %v1096, 0
        %vm1135 = vcmp.ne.s32.totalorder %v1103, 0
        %vm1136 = vcmp.lt.s32.totalorder %v886, 0
        %vm1137 = vcmp.lt.s32.totalorder %v893, 0
        %vm1138 = vcmp.lt.s32.totalorder %v900, 0
        %vm1139 = vcmp.lt.s32.totalorder %v907, 0
        %vm1140 = vcmp.lt.s32.totalorder %v914, 0
        %vm1141 = vcmp.lt.s32.totalorder %v921, 0
        %vm1142 = vcmp.lt.s32.totalorder %v928, 0
        %vm1143 = vcmp.lt.s32.totalorder %v935, 0
        %vm1144 = vcmp.lt.s32.totalorder %v942, 0
        %vm1145 = vcmp.lt.s32.totalorder %v949, 0
        %vm1146 = vcmp.lt.s32.totalorder %v956, 0
        %vm1147 = vcmp.lt.s32.totalorder %v963, 0
        %vm1148 = vcmp.lt.s32.totalorder %v970, 0
        %vm1149 = vcmp.lt.s32.totalorder %v977, 0
        %vm1150 = vcmp.lt.s32.totalorder %v984, 0
        %vm1151 = vcmp.lt.s32.totalorder %v991, 0
        %vm1152 = vcmp.lt.s32.totalorder %v998, 0
        %vm1153 = vcmp.lt.s32.totalorder %v1005, 0
        %vm1154 = vcmp.lt.s32.totalorder %v1012, 0
        %vm1155 = vcmp.lt.s32.totalorder %v1019, 0
        %vm1156 = vcmp.lt.s32.totalorder %v1026, 0
        %vm1157 = vcmp.lt.s32.totalorder %v1033, 0
        %vm1158 = vcmp.lt.s32.totalorder %v1040, 0
        %vm1159 = vcmp.lt.s32.totalorder %v1047, 0
        %vm1160 = vcmp.lt.s32.totalorder %v1054, 0
        %vm1161 = vcmp.lt.s32.totalorder %v1061, 0
        %vm1162 = vcmp.lt.s32.totalorder %v1068, 0
        %vm1163 = vcmp.lt.s32.totalorder %v1075, 0
        %vm1164 = vcmp.lt.s32.totalorder %v1082, 0
        %vm1165 = vcmp.lt.s32.totalorder %v1089, 0
        %vm1166 = vcmp.lt.s32.totalorder %v1096, 0
        %vm1167 = vcmp.lt.s32.totalorder %v1103, 0
        %vm1168 = vmand %vm1136, %vm1104
        %vm1169 = vmand %vm1137, %vm1105
        %vm1170 = vmand %vm1138, %vm1106
        %vm1171 = vmand %vm1139, %vm1107
        %vm1172 = vmand %vm1140, %vm1108
        %vm1173 = vmand %vm1141, %vm1109
        %vm1174 = vmand %vm1142, %vm1110
        %vm1175 = vmand %vm1143, %vm1111
        %vm1176 = vmand %vm1144, %vm1112
        %vm1177 = vmand %vm1145, %vm1113
        %vm1178 = vmand %vm1146, %vm1114
        %vm1179 = vmand %vm1147, %vm1115
        %vm1180 = vmand %vm1148, %vm1116
        %vm1181 = vmand %vm1149, %vm1117
        %vm1182 = vmand %vm1150, %vm1118
        %vm1183 = vmand %vm1151, %vm1119
        %vm1184 = vmand %vm1152, %vm1120
        %vm1185 = vmand %vm1153, %vm1121
        %vm1186 = vmand %vm1154, %vm1122
        %vm1187 = vmand %vm1155, %vm1123
        %vm1188 = vmand %vm1156, %vm1124
        %vm1189 = vmand %vm1157, %vm1125
        %vm1190 = vmand %vm1158, %vm1126
        %vm1191 = vmand %vm1159, %vm1127
        %vm1192 = vmand %vm1160, %vm1128
        %vm1193 = vmand %vm1161, %vm1129
        %vm1194 = vmand %vm1162, %vm1130
        %vm1195 = vmand %vm1163, %vm1131
        %vm1196 = vmand %vm1164, %vm1132
        %vm1197 = vmand %vm1165, %vm1133
        %vm1198 = vmand %vm1166, %vm1134
        %vm1199 = vmand %vm1167, %vm1135
        %v1200 = vadd.s32 %v886, 16
        %v1201 = vadd.s32 %v893, 16
        %v1202 = vadd.s32 %v900, 16
        %v1203 = vadd.s32 %v907, 16
        %v1204 = vadd.s32 %v914, 16
        %v1205 = vadd.s32 %v921, 16
        %v1206 = vadd.s32 %v928, 16
        %v1207 = vadd.s32 %v935, 16
        %v1208 = vadd.s32 %v942, 16
        %v1209 = vadd.s32 %v949, 16
        %v1210 = vadd.s32 %v956, 16
        %v1211 = vadd.s32 %v963, 16
        %v1212 = vadd.s32 %v970, 16
        %v1213 = vadd.s32 %v977, 16
        %v1214 = vadd.s32 %v984, 16
        %v1215 = vadd.s32 %v991, 16
        %v1216 = vadd.s32 %v998, 16
        %v1217 = vadd.s32 %v1005, 16
        %v1218 = vadd.s32 %v1012, 16
        %v1219 = vadd.s32 %v1019, 16
        %v1220 = vadd.s32 %v1026, 16
        %v1221 = vadd.s32 %v1033, 16
        %v1222 = vadd.s32 %v1040, 16
        %v1223 = vadd.s32 %v1047, 16
        %v1224 = vadd.s32 %v1054, 16
        %v1225 = vadd.s32 %v1061, 16
        %v1226 = vadd.s32 %v1068, 16
        %v1227 = vadd.s32 %v1075, 16
        %v1228 = vadd.s32 %v1082, 16
        %v1229 = vadd.s32 %v1089, 16
        %v1230 = vadd.s32 %v1096, 16
        %v1231 = vadd.s32 %v1103, 16
        %v1232 = vsel %vm1168, %v1200, %v886
        %v1233 = vsel %vm1169, %v1201, %v893
        %v1234 = vsel %vm1170, %v1202, %v900
        %v1235 = vsel %vm1171, %v1203, %v907
        %v1236 = vsel %vm1172, %v1204, %v914
        %v1237 = vsel %vm1173, %v1205, %v921
        %v1238 = vsel %vm1174, %v1206, %v928
        %v1239 = vsel %vm1175, %v1207, %v935
        %v1240 = vsel %vm1176, %v1208, %v942
        %v1241 = vsel %vm1177, %v1209, %v949
        %v1242 = vsel %vm1178, %v1210, %v956
        %v1243 = vsel %vm1179, %v1211, %v963
        %v1244 = vsel %vm1180, %v1212, %v970
        %v1245 = vsel %vm1181, %v1213, %v977
        %v1246 = vsel %vm1182, %v1214, %v984
        %v1247 = vsel %vm1183, %v1215, %v991
        %v1248 = vsel %vm1184, %v1216, %v998
        %v1249 = vsel %vm1185, %v1217, %v1005
        %v1250 = vsel %vm1186, %v1218, %v1012
        %v1251 = vsel %vm1187, %v1219, %v1019
        %v1252 = vsel %vm1188, %v1220, %v1026
        %v1253 = vsel %vm1189, %v1221, %v1033
        %v1254 = vsel %vm1190, %v1222, %v1040
        %v1255 = vsel %vm1191, %v1223, %v1047
        %v1256 = vsel %vm1192, %v1224, %v1054
        %v1257 = vsel %vm1193, %v1225, %v1061
        %v1258 = vsel %vm1194, %v1226, %v1068
        %v1259 = vsel %vm1195, %v1227, %v1075
        %v1260 = vsel %vm1196, %v1228, %v1082
        %v1261 = vsel %vm1197, %v1229, %v1089
        %v1262 = vsel %vm1198, %v1230, %v1096
        %v1263 = vsel %vm1199, %v1231, %v1103
        %vm1264 = vcmp.ge.s32.totalorder %v1232, 1
        %vm1265 = vcmp.ge.s32.totalorder %v1233, 1
        %vm1266 = vcmp.ge.s32.totalorder %v1234, 1
        %vm1267 = vcmp.ge.s32.totalorder %v1235, 1
        %vm1268 = vcmp.ge.s32.totalorder %v1236, 1
        %vm1269 = vcmp.ge.s32.totalorder %v1237, 1
        %vm1270 = vcmp.ge.s32.totalorder %v1238, 1
        %vm1271 = vcmp.ge.s32.totalorder %v1239, 1
        %vm1272 = vcmp.ge.s32.totalorder %v1240, 1
        %vm1273 = vcmp.ge.s32.totalorder %v1241, 1
        %vm1274 = vcmp.ge.s32.totalorder %v1242, 1
        %vm1275 = vcmp.ge.s32.totalorder %v1243, 1
        %vm1276 = vcmp.ge.s32.totalorder %v1244, 1
        %vm1277 = vcmp.ge.s32.totalorder %v1245, 1
        %vm1278 = vcmp.ge.s32.totalorder %v1246, 1
        %vm1279 = vcmp.ge.s32.totalorder %v1247, 1
        %vm1280 = vcmp.ge.s32.totalorder %v1248, 1
        %vm1281 = vcmp.ge.s32.totalorder %v1249, 1
        %vm1282 = vcmp.ge.s32.totalorder %v1250, 1
        %vm1283 = vcmp.ge.s32.totalorder %v1251, 1
        %vm1284 = vcmp.ge.s32.totalorder %v1252, 1
        %vm1285 = vcmp.ge.s32.totalorder %v1253, 1
        %vm1286 = vcmp.ge.s32.totalorder %v1254, 1
        %vm1287 = vcmp.ge.s32.totalorder %v1255, 1
        %vm1288 = vcmp.ge.s32.totalorder %v1256, 1
        %vm1289 = vcmp.ge.s32.totalorder %v1257, 1
        %vm1290 = vcmp.ge.s32.totalorder %v1258, 1
        %vm1291 = vcmp.ge.s32.totalorder %v1259, 1
        %vm1292 = vcmp.ge.s32.totalorder %v1260, 1
        %vm1293 = vcmp.ge.s32.totalorder %v1261, 1
        %vm1294 = vcmp.ge.s32.totalorder %v1262, 1
        %vm1295 = vcmp.ge.s32.totalorder %v1263, 1
        %vm1296 = vcmp.le.s32.totalorder %v1232, 14
        %vm1297 = vcmp.le.s32.totalorder %v1233, 14
        %vm1298 = vcmp.le.s32.totalorder %v1234, 14
        %vm1299 = vcmp.le.s32.totalorder %v1235, 14
        %vm1300 = vcmp.le.s32.totalorder %v1236, 14
        %vm1301 = vcmp.le.s32.totalorder %v1237, 14
        %vm1302 = vcmp.le.s32.totalorder %v1238, 14
        %vm1303 = vcmp.le.s32.totalorder %v1239, 14
        %vm1304 = vcmp.le.s32.totalorder %v1240, 14
        %vm1305 = vcmp.le.s32.totalorder %v1241, 14
        %vm1306 = vcmp.le.s32.totalorder %v1242, 14
        %vm1307 = vcmp.le.s32.totalorder %v1243, 14
        %vm1308 = vcmp.le.s32.totalorder %v1244, 14
        %vm1309 = vcmp.le.s32.totalorder %v1245, 14
        %vm1310 = vcmp.le.s32.totalorder %v1246, 14
        %vm1311 = vcmp.le.s32.totalorder %v1247, 14
        %vm1312 = vcmp.le.s32.totalorder %v1248, 14
        %vm1313 = vcmp.le.s32.totalorder %v1249, 14
        %vm1314 = vcmp.le.s32.totalorder %v1250, 14
        %vm1315 = vcmp.le.s32.totalorder %v1251, 14
        %vm1316 = vcmp.le.s32.totalorder %v1252, 14
        %vm1317 = vcmp.le.s32.totalorder %v1253, 14
        %vm1318 = vcmp.le.s32.totalorder %v1254, 14
        %vm1319 = vcmp.le.s32.totalorder %v1255, 14
        %vm1320 = vcmp.le.s32.totalorder %v1256, 14
        %vm1321 = vcmp.le.s32.totalorder %v1257, 14
        %vm1322 = vcmp.le.s32.totalorder %v1258, 14
        %vm1323 = vcmp.le.s32.totalorder %v1259, 14
        %vm1324 = vcmp.le.s32.totalorder %v1260, 14
        %vm1325 = vcmp.le.s32.totalorder %v1261, 14
        %vm1326 = vcmp.le.s32.totalorder %v1262, 14
        %vm1327 = vcmp.le.s32.totalorder %v1263, 14
        %v1328 = vld [vmem:[%s385] sm:$0xff]
        %v1329 = vld [vmem:[%s385 + $0x8] sm:$0x1]
        %v1330 = vld [vmem:[#allocation2 + $0x7] sm:$0xff]
        %v1331 = vld [vmem:[#allocation2 + $0xf] sm:$0xff]
        %v1332 = vld [vmem:[#allocation2 + $0x17] sm:$0xff]
        %v1333 = vld [vmem:[#allocation2 + $0x1f] sm:$0xff]
        %v1334 = vld [vmem:[#allocation2 + $0x27] sm:$0xff]
        %v1335 = vld [vmem:[#allocation2 + $0x2f] sm:$0xff]
        %v1336 = vld [vmem:[#allocation2 + $0x37] sm:$0xff]
        %v1337 = vld [vmem:[#allocation2 + $0x3f] sm:$0xff]
        %v1338 = vld [vmem:[#allocation2 + $0x47] sm:$0xff]
        %v1339 = vld [vmem:[#allocation2 + $0x4f] sm:$0xff]
        %v1340 = vld [vmem:[#allocation2 + $0x57] sm:$0xff]
        %v1341 = vld [vmem:[#allocation2 + $0x5f] sm:$0xff]
        %v1342 = vld [vmem:[#allocation2 + $0x67] sm:$0xff]
        %v1343 = vld [vmem:[#allocation2 + $0x6f] sm:$0xff]
        %v1344 = vld [vmem:[#allocation2 + $0x77] sm:$0xff]
        %v1345 = vld [vmem:[#allocation2 + $0x7f] sm:$0xff]
        %v1346 = vld [vmem:[#allocation2 + $0x87] sm:$0xff]
        %v1347 = vld [vmem:[#allocation2 + $0x8f] sm:$0xff]
        %v1348 = vld [vmem:[#allocation2 + $0x97] sm:$0xff]
        %v1349 = vld [vmem:[#allocation2 + $0x9f] sm:$0xff]
        %v1350 = vld [vmem:[#allocation2 + $0xa7] sm:$0xff]
        %v1351 = vld [vmem:[#allocation2 + $0xaf] sm:$0xff]
        %v1352 = vld [vmem:[#allocation2 + $0xb7] sm:$0xff]
        %v1353 = vld [vmem:[#allocation2 + $0xbf] sm:$0xff]
        %v1354 = vld [vmem:[#allocation2 + $0xc7] sm:$0xff]
        %v1355 = vld [vmem:[#allocation2 + $0xcf] sm:$0xff]
        %v1356 = vld [vmem:[#allocation2 + $0xd7] sm:$0xff]
        %v1357 = vld [vmem:[#allocation2 + $0xdf] sm:$0xff]
        %v1358 = vld [vmem:[#allocation2 + $0xe7] sm:$0xff]
        %v1359 = vld [vmem:[#allocation2 + $0xef] sm:$0xff]
        %v1360 = vld [vmem:[#allocation2 + $0xf7] sm:$0xff]
        %v1361 = vld [vmem:[#allocation2 + $0xff] sm:$0xff]
        %v1362 = vlaneseq
        %v1363 = vshrl.u32 %v1362, 7
        %v1364 = vsub.s32 0, %v1363
        %v1365 = vrot.slane %v1328, %v1364
        %v1366 = vmul.f32 %v1330, %v1365
        %v1367 = vmul.f32 %v1331, %v1365
        %v1368 = vmul.f32 %v1332, %v1365
        %v1369 = vmul.f32 %v1333, %v1365
        %v1370 = vmul.f32 %v1334, %v1365
        %v1371 = vmul.f32 %v1335, %v1365
        %v1372 = vmul.f32 %v1336, %v1365
        %v1373 = vmul.f32 %v1337, %v1365
        %v1374 = vmul.f32 %v1338, %v1365
        %v1375 = vmul.f32 %v1339, %v1365
        %v1376 = vmul.f32 %v1340, %v1365
        %v1377 = vmul.f32 %v1341, %v1365
        %v1378 = vmul.f32 %v1342, %v1365
        %v1379 = vmul.f32 %v1343, %v1365
        %v1380 = vmul.f32 %v1344, %v1365
        %v1381 = vmul.f32 %v1345, %v1365
        %v1382 = vmul.f32 %v1346, %v1365
        %v1383 = vmul.f32 %v1347, %v1365
        %v1384 = vmul.f32 %v1348, %v1365
        %v1385 = vmul.f32 %v1349, %v1365
        %v1386 = vmul.f32 %v1350, %v1365
        %v1387 = vmul.f32 %v1351, %v1365
        %v1388 = vmul.f32 %v1352, %v1365
        %v1389 = vmul.f32 %v1353, %v1365
        %v1390 = vmul.f32 %v1354, %v1365
        %v1391 = vmul.f32 %v1355, %v1365
        %v1392 = vmul.f32 %v1356, %v1365
        %v1393 = vmul.f32 %v1357, %v1365
        %v1394 = vmul.f32 %v1358, %v1365
        %v1395 = vmul.f32 %v1359, %v1365
        %v1396 = vmul.f32 %v1360, %v1365
        %v1397 = vmul.f32 %v1361, %v1365
        %v1398 = vld [vmem:[#allocation2 + $0x107] sm:$0xff]
        %v1399 = vld [vmem:[#allocation2 + $0x10f] sm:$0xff]
        %v1400 = vlaneseq
        %v1401 = vshrl.u32 %v1400, 7
        %v1402 = vsub.s32 3, %v1401
        %v1403 = vrot.slane %v1328, %v1402
        %v1404 = vmul.f32 %v1332, %v1403
        %v1405 = vmul.f32 %v1333, %v1403
        %v1406 = vmul.f32 %v1334, %v1403
        %v1407 = vmul.f32 %v1335, %v1403
        %v1408 = vmul.f32 %v1336, %v1403
        %v1409 = vmul.f32 %v1337, %v1403
        %v1410 = vmul.f32 %v1338, %v1403
        %v1411 = vmul.f32 %v1339, %v1403
        %v1412 = vmul.f32 %v1340, %v1403
        %v1413 = vmul.f32 %v1341, %v1403
        %v1414 = vmul.f32 %v1342, %v1403
        %v1415 = vmul.f32 %v1343, %v1403
        %v1416 = vmul.f32 %v1344, %v1403
        %v1417 = vmul.f32 %v1345, %v1403
        %v1418 = vmul.f32 %v1346, %v1403
        %v1419 = vmul.f32 %v1347, %v1403
        %v1420 = vmul.f32 %v1348, %v1403
        %v1421 = vmul.f32 %v1349, %v1403
        %v1422 = vmul.f32 %v1350, %v1403
        %v1423 = vmul.f32 %v1351, %v1403
        %v1424 = vmul.f32 %v1352, %v1403
        %v1425 = vmul.f32 %v1353, %v1403
        %v1426 = vmul.f32 %v1354, %v1403
        %v1427 = vmul.f32 %v1355, %v1403
        %v1428 = vmul.f32 %v1356, %v1403
        %v1429 = vmul.f32 %v1357, %v1403
        %v1430 = vmul.f32 %v1358, %v1403
        %v1431 = vmul.f32 %v1359, %v1403
        %v1432 = vmul.f32 %v1360, %v1403
        %v1433 = vmul.f32 %v1361, %v1403
        %v1434 = vmul.f32 %v1398, %v1403
        %v1435 = vmul.f32 %v1399, %v1403
        %v1436 = vadd.f32 %v1366, %v1404
        %v1437 = vadd.f32 %v1367, %v1405
        %v1438 = vadd.f32 %v1368, %v1406
        %v1439 = vadd.f32 %v1369, %v1407
        %v1440 = vadd.f32 %v1370, %v1408
        %v1441 = vadd.f32 %v1371, %v1409
        %v1442 = vadd.f32 %v1372, %v1410
        %v1443 = vadd.f32 %v1373, %v1411
        %v1444 = vadd.f32 %v1374, %v1412
        %v1445 = vadd.f32 %v1375, %v1413
        %v1446 = vadd.f32 %v1376, %v1414
        %v1447 = vadd.f32 %v1377, %v1415
        %v1448 = vadd.f32 %v1378, %v1416
        %v1449 = vadd.f32 %v1379, %v1417
        %v1450 = vadd.f32 %v1380, %v1418
        %v1451 = vadd.f32 %v1381, %v1419
        %v1452 = vadd.f32 %v1382, %v1420
        %v1453 = vadd.f32 %v1383, %v1421
        %v1454 = vadd.f32 %v1384, %v1422
        %v1455 = vadd.f32 %v1385, %v1423
        %v1456 = vadd.f32 %v1386, %v1424
        %v1457 = vadd.f32 %v1387, %v1425
        %v1458 = vadd.f32 %v1388, %v1426
        %v1459 = vadd.f32 %v1389, %v1427
        %v1460 = vadd.f32 %v1390, %v1428
        %v1461 = vadd.f32 %v1391, %v1429
        %v1462 = vadd.f32 %v1392, %v1430
        %v1463 = vadd.f32 %v1393, %v1431
        %v1464 = vadd.f32 %v1394, %v1432
        %v1465 = vadd.f32 %v1395, %v1433
        %v1466 = vadd.f32 %v1396, %v1434
        %v1467 = vadd.f32 %v1397, %v1435
        %v1468 = vld [vmem:[#allocation2 + $0x117] sm:$0xff]
        %v1469 = vld [vmem:[#allocation2 + $0x11f] sm:$0xff]
        %v1470 = vlaneseq
        %v1471 = vshrl.u32 %v1470, 7
        %v1472 = vsub.s32 6, %v1471
        %v1473 = vrot.slane %v1328, %v1472
        %v1474 = vmul.f32 %v1334, %v1473
        %v1475 = vmul.f32 %v1335, %v1473
        %v1476 = vmul.f32 %v1336, %v1473
        %v1477 = vmul.f32 %v1337, %v1473
        %v1478 = vmul.f32 %v1338, %v1473
        %v1479 = vmul.f32 %v1339, %v1473
        %v1480 = vmul.f32 %v1340, %v1473
        %v1481 = vmul.f32 %v1341, %v1473
        %v1482 = vmul.f32 %v1342, %v1473
        %v1483 = vmul.f32 %v1343, %v1473
        %v1484 = vmul.f32 %v1344, %v1473
        %v1485 = vmul.f32 %v1345, %v1473
        %v1486 = vmul.f32 %v1346, %v1473
        %v1487 = vmul.f32 %v1347, %v1473
        %v1488 = vmul.f32 %v1348, %v1473
        %v1489 = vmul.f32 %v1349, %v1473
        %v1490 = vmul.f32 %v1350, %v1473
        %v1491 = vmul.f32 %v1351, %v1473
        %v1492 = vmul.f32 %v1352, %v1473
        %v1493 = vmul.f32 %v1353, %v1473
        %v1494 = vmul.f32 %v1354, %v1473
        %v1495 = vmul.f32 %v1355, %v1473
        %v1496 = vmul.f32 %v1356, %v1473
        %v1497 = vmul.f32 %v1357, %v1473
        %v1498 = vmul.f32 %v1358, %v1473
        %v1499 = vmul.f32 %v1359, %v1473
        %v1500 = vmul.f32 %v1360, %v1473
        %v1501 = vmul.f32 %v1361, %v1473
        %v1502 = vmul.f32 %v1398, %v1473
        %v1503 = vmul.f32 %v1399, %v1473
        %v1504 = vmul.f32 %v1468, %v1473
        %v1505 = vmul.f32 %v1469, %v1473
        %v1506 = vadd.f32 %v1436, %v1474
        %v1507 = vadd.f32 %v1437, %v1475
        %v1508 = vadd.f32 %v1438, %v1476
        %v1509 = vadd.f32 %v1439, %v1477
        %v1510 = vadd.f32 %v1440, %v1478
        %v1511 = vadd.f32 %v1441, %v1479
        %v1512 = vadd.f32 %v1442, %v1480
        %v1513 = vadd.f32 %v1443, %v1481
        %v1514 = vadd.f32 %v1444, %v1482
        %v1515 = vadd.f32 %v1445, %v1483
        %v1516 = vadd.f32 %v1446, %v1484
        %v1517 = vadd.f32 %v1447, %v1485
        %v1518 = vadd.f32 %v1448, %v1486
        %v1519 = vadd.f32 %v1449, %v1487
        %v1520 = vadd.f32 %v1450, %v1488
        %v1521 = vadd.f32 %v1451, %v1489
        %v1522 = vadd.f32 %v1452, %v1490
        %v1523 = vadd.f32 %v1453, %v1491
        %v1524 = vadd.f32 %v1454, %v1492
        %v1525 = vadd.f32 %v1455, %v1493
        %v1526 = vadd.f32 %v1456, %v1494
        %v1527 = vadd.f32 %v1457, %v1495
        %v1528 = vadd.f32 %v1458, %v1496
        %v1529 = vadd.f32 %v1459, %v1497
        %v1530 = vadd.f32 %v1460, %v1498
        %v1531 = vadd.f32 %v1461, %v1499
        %v1532 = vadd.f32 %v1462, %v1500
        %v1533 = vadd.f32 %v1463, %v1501
        %v1534 = vadd.f32 %v1464, %v1502
        %v1535 = vadd.f32 %v1465, %v1503
        %v1536 = vadd.f32 %v1466, %v1504
        %v1537 = vadd.f32 %v1467, %v1505
        %v1538 = vld [vmem:[#allocation2 + $0x8] sm:$0xff]
        %v1539 = vld [vmem:[#allocation2 + $0x10] sm:$0xff]
        %v1540 = vld [vmem:[#allocation2 + $0x18] sm:$0xff]
        %v1541 = vld [vmem:[#allocation2 + $0x20] sm:$0xff]
        %v1542 = vld [vmem:[#allocation2 + $0x28] sm:$0xff]
        %v1543 = vld [vmem:[#allocation2 + $0x30] sm:$0xff]
        %v1544 = vld [vmem:[#allocation2 + $0x38] sm:$0xff]
        %v1545 = vld [vmem:[#allocation2 + $0x40] sm:$0xff]
        %v1546 = vld [vmem:[#allocation2 + $0x48] sm:$0xff]
        %v1547 = vld [vmem:[#allocation2 + $0x50] sm:$0xff]
        %v1548 = vld [vmem:[#allocation2 + $0x58] sm:$0xff]
        %v1549 = vld [vmem:[#allocation2 + $0x60] sm:$0xff]
        %v1550 = vld [vmem:[#allocation2 + $0x68] sm:$0xff]
        %v1551 = vld [vmem:[#allocation2 + $0x70] sm:$0xff]
        %v1552 = vld [vmem:[#allocation2 + $0x78] sm:$0xff]
        %v1553 = vld [vmem:[#allocation2 + $0x80] sm:$0xff]
        %v1554 = vld [vmem:[#allocation2 + $0x88] sm:$0xff]
        %v1555 = vld [vmem:[#allocation2 + $0x90] sm:$0xff]
        %v1556 = vld [vmem:[#allocation2 + $0x98] sm:$0xff]
        %v1557 = vld [vmem:[#allocation2 + $0xa0] sm:$0xff]
        %v1558 = vld [vmem:[#allocation2 + $0xa8] sm:$0xff]
        %v1559 = vld [vmem:[#allocation2 + $0xb0] sm:$0xff]
        %v1560 = vld [vmem:[#allocation2 + $0xb8] sm:$0xff]
        %v1561 = vld [vmem:[#allocation2 + $0xc0] sm:$0xff]
        %v1562 = vld [vmem:[#allocation2 + $0xc8] sm:$0xff]
        %v1563 = vld [vmem:[#allocation2 + $0xd0] sm:$0xff]
        %v1564 = vld [vmem:[#allocation2 + $0xd8] sm:$0xff]
        %v1565 = vld [vmem:[#allocation2 + $0xe0] sm:$0xff]
        %v1566 = vld [vmem:[#allocation2 + $0xe8] sm:$0xff]
        %v1567 = vld [vmem:[#allocation2 + $0xf0] sm:$0xff]
        %v1568 = vld [vmem:[#allocation2 + $0xf8] sm:$0xff]
        %v1569 = vld [vmem:[#allocation2 + $0x100] sm:$0xff]
        %v1570 = vlaneseq
        %v1571 = vshrl.u32 %v1570, 7
        %v1572 = vsub.s32 1, %v1571
        %v1573 = vrot.slane %v1328, %v1572
        %v1574 = vmul.f32 %v1538, %v1573
        %v1575 = vmul.f32 %v1539, %v1573
        %v1576 = vmul.f32 %v1540, %v1573
        %v1577 = vmul.f32 %v1541, %v1573
        %v1578 = vmul.f32 %v1542, %v1573
        %v1579 = vmul.f32 %v1543, %v1573
        %v1580 = vmul.f32 %v1544, %v1573
        %v1581 = vmul.f32 %v1545, %v1573
        %v1582 = vmul.f32 %v1546, %v1573
        %v1583 = vmul.f32 %v1547, %v1573
        %v1584 = vmul.f32 %v1548, %v1573
        %v1585 = vmul.f32 %v1549, %v1573
        %v1586 = vmul.f32 %v1550, %v1573
        %v1587 = vmul.f32 %v1551, %v1573
        %v1588 = vmul.f32 %v1552, %v1573
        %v1589 = vmul.f32 %v1553, %v1573
        %v1590 = vmul.f32 %v1554, %v1573
        %v1591 = vmul.f32 %v1555, %v1573
        %v1592 = vmul.f32 %v1556, %v1573
        %v1593 = vmul.f32 %v1557, %v1573
        %v1594 = vmul.f32 %v1558, %v1573
        %v1595 = vmul.f32 %v1559, %v1573
        %v1596 = vmul.f32 %v1560, %v1573
        %v1597 = vmul.f32 %v1561, %v1573
        %v1598 = vmul.f32 %v1562, %v1573
        %v1599 = vmul.f32 %v1563, %v1573
        %v1600 = vmul.f32 %v1564, %v1573
        %v1601 = vmul.f32 %v1565, %v1573
        %v1602 = vmul.f32 %v1566, %v1573
        %v1603 = vmul.f32 %v1567, %v1573
        %v1604 = vmul.f32 %v1568, %v1573
        %v1605 = vmul.f32 %v1569, %v1573
        %v1606 = vld [vmem:[#allocation2 + $0x108] sm:$0xff]
        %v1607 = vld [vmem:[#allocation2 + $0x110] sm:$0xff]
        %v1608 = vlaneseq
        %v1609 = vshrl.u32 %v1608, 7
        %v1610 = vsub.s32 4, %v1609
        %v1611 = vrot.slane %v1328, %v1610
        %v1612 = vmul.f32 %v1540, %v1611
        %v1613 = vmul.f32 %v1541, %v1611
        %v1614 = vmul.f32 %v1542, %v1611
        %v1615 = vmul.f32 %v1543, %v1611
        %v1616 = vmul.f32 %v1544, %v1611
        %v1617 = vmul.f32 %v1545, %v1611
        %v1618 = vmul.f32 %v1546, %v1611
        %v1619 = vmul.f32 %v1547, %v1611
        %v1620 = vmul.f32 %v1548, %v1611
        %v1621 = vmul.f32 %v1549, %v1611
        %v1622 = vmul.f32 %v1550, %v1611
        %v1623 = vmul.f32 %v1551, %v1611
        %v1624 = vmul.f32 %v1552, %v1611
        %v1625 = vmul.f32 %v1553, %v1611
        %v1626 = vmul.f32 %v1554, %v1611
        %v1627 = vmul.f32 %v1555, %v1611
        %v1628 = vmul.f32 %v1556, %v1611
        %v1629 = vmul.f32 %v1557, %v1611
        %v1630 = vmul.f32 %v1558, %v1611
        %v1631 = vmul.f32 %v1559, %v1611
        %v1632 = vmul.f32 %v1560, %v1611
        %v1633 = vmul.f32 %v1561, %v1611
        %v1634 = vmul.f32 %v1562, %v1611
        %v1635 = vmul.f32 %v1563, %v1611
        %v1636 = vmul.f32 %v1564, %v1611
        %v1637 = vmul.f32 %v1565, %v1611
        %v1638 = vmul.f32 %v1566, %v1611
        %v1639 = vmul.f32 %v1567, %v1611
        %v1640 = vmul.f32 %v1568, %v1611
        %v1641 = vmul.f32 %v1569, %v1611
        %v1642 = vmul.f32 %v1606, %v1611
        %v1643 = vmul.f32 %v1607, %v1611
        %v1644 = vadd.f32 %v1574, %v1612
        %v1645 = vadd.f32 %v1575, %v1613
        %v1646 = vadd.f32 %v1576, %v1614
        %v1647 = vadd.f32 %v1577, %v1615
        %v1648 = vadd.f32 %v1578, %v1616
        %v1649 = vadd.f32 %v1579, %v1617
        %v1650 = vadd.f32 %v1580, %v1618
        %v1651 = vadd.f32 %v1581, %v1619
        %v1652 = vadd.f32 %v1582, %v1620
        %v1653 = vadd.f32 %v1583, %v1621
        %v1654 = vadd.f32 %v1584, %v1622
        %v1655 = vadd.f32 %v1585, %v1623
        %v1656 = vadd.f32 %v1586, %v1624
        %v1657 = vadd.f32 %v1587, %v1625
        %v1658 = vadd.f32 %v1588, %v1626
        %v1659 = vadd.f32 %v1589, %v1627
        %v1660 = vadd.f32 %v1590, %v1628
        %v1661 = vadd.f32 %v1591, %v1629
        %v1662 = vadd.f32 %v1592, %v1630
        %v1663 = vadd.f32 %v1593, %v1631
        %v1664 = vadd.f32 %v1594, %v1632
        %v1665 = vadd.f32 %v1595, %v1633
        %v1666 = vadd.f32 %v1596, %v1634
        %v1667 = vadd.f32 %v1597, %v1635
        %v1668 = vadd.f32 %v1598, %v1636
        %v1669 = vadd.f32 %v1599, %v1637
        %v1670 = vadd.f32 %v1600, %v1638
        %v1671 = vadd.f32 %v1601, %v1639
        %v1672 = vadd.f32 %v1602, %v1640
        %v1673 = vadd.f32 %v1603, %v1641
        %v1674 = vadd.f32 %v1604, %v1642
        %v1675 = vadd.f32 %v1605, %v1643
        %v1676 = vld [vmem:[#allocation2 + $0x118] sm:$0xff]
        %v1677 = vld [vmem:[#allocation2 + $0x120] sm:$0xff]
        %v1678 = vlaneseq
        %v1679 = vshrl.u32 %v1678, 7
        %v1680 = vsub.s32 7, %v1679
        %v1681 = vrot.slane %v1328, %v1680
        %v1682 = vmul.f32 %v1542, %v1681
        %v1683 = vmul.f32 %v1543, %v1681
        %v1684 = vmul.f32 %v1544, %v1681
        %v1685 = vmul.f32 %v1545, %v1681
        %v1686 = vmul.f32 %v1546, %v1681
        %v1687 = vmul.f32 %v1547, %v1681
        %v1688 = vmul.f32 %v1548, %v1681
        %v1689 = vmul.f32 %v1549, %v1681
        %v1690 = vmul.f32 %v1550, %v1681
        %v1691 = vmul.f32 %v1551, %v1681
        %v1692 = vmul.f32 %v1552, %v1681
        %v1693 = vmul.f32 %v1553, %v1681
        %v1694 = vmul.f32 %v1554, %v1681
        %v1695 = vmul.f32 %v1555, %v1681
        %v1696 = vmul.f32 %v1556, %v1681
        %v1697 = vmul.f32 %v1557, %v1681
        %v1698 = vmul.f32 %v1558, %v1681
        %v1699 = vmul.f32 %v1559, %v1681
        %v1700 = vmul.f32 %v1560, %v1681
        %v1701 = vmul.f32 %v1561, %v1681
        %v1702 = vmul.f32 %v1562, %v1681
        %v1703 = vmul.f32 %v1563, %v1681
        %v1704 = vmul.f32 %v1564, %v1681
        %v1705 = vmul.f32 %v1565, %v1681
        %v1706 = vmul.f32 %v1566, %v1681
        %v1707 = vmul.f32 %v1567, %v1681
        %v1708 = vmul.f32 %v1568, %v1681
        %v1709 = vmul.f32 %v1569, %v1681
        %v1710 = vmul.f32 %v1606, %v1681
        %v1711 = vmul.f32 %v1607, %v1681
        %v1712 = vmul.f32 %v1676, %v1681
        %v1713 = vmul.f32 %v1677, %v1681
        %v1714 = vadd.f32 %v1644, %v1682
        %v1715 = vadd.f32 %v1645, %v1683
        %v1716 = vadd.f32 %v1646, %v1684
        %v1717 = vadd.f32 %v1647, %v1685
        %v1718 = vadd.f32 %v1648, %v1686
        %v1719 = vadd.f32 %v1649, %v1687
        %v1720 = vadd.f32 %v1650, %v1688
        %v1721 = vadd.f32 %v1651, %v1689
        %v1722 = vadd.f32 %v1652, %v1690
        %v1723 = vadd.f32 %v1653, %v1691
        %v1724 = vadd.f32 %v1654, %v1692
        %v1725 = vadd.f32 %v1655, %v1693
        %v1726 = vadd.f32 %v1656, %v1694
        %v1727 = vadd.f32 %v1657, %v1695
        %v1728 = vadd.f32 %v1658, %v1696
        %v1729 = vadd.f32 %v1659, %v1697
        %v1730 = vadd.f32 %v1660, %v1698
        %v1731 = vadd.f32 %v1661, %v1699
        %v1732 = vadd.f32 %v1662, %v1700
        %v1733 = vadd.f32 %v1663, %v1701
        %v1734 = vadd.f32 %v1664, %v1702
        %v1735 = vadd.f32 %v1665, %v1703
        %v1736 = vadd.f32 %v1666, %v1704
        %v1737 = vadd.f32 %v1667, %v1705
        %v1738 = vadd.f32 %v1668, %v1706
        %v1739 = vadd.f32 %v1669, %v1707
        %v1740 = vadd.f32 %v1670, %v1708
        %v1741 = vadd.f32 %v1671, %v1709
        %v1742 = vadd.f32 %v1672, %v1710
        %v1743 = vadd.f32 %v1673, %v1711
        %v1744 = vadd.f32 %v1674, %v1712
        %v1745 = vadd.f32 %v1675, %v1713
        %v1746 = vld [vmem:[#allocation2 + $0x9] sm:$0xff]
        %v1747 = vld [vmem:[#allocation2 + $0x11] sm:$0xff]
        %v1748 = vld [vmem:[#allocation2 + $0x19] sm:$0xff]
        %v1749 = vld [vmem:[#allocation2 + $0x21] sm:$0xff]
        %v1750 = vld [vmem:[#allocation2 + $0x29] sm:$0xff]
        %v1751 = vld [vmem:[#allocation2 + $0x31] sm:$0xff]
        %v1752 = vld [vmem:[#allocation2 + $0x39] sm:$0xff]
        %v1753 = vld [vmem:[#allocation2 + $0x41] sm:$0xff]
        %v1754 = vld [vmem:[#allocation2 + $0x49] sm:$0xff]
        %v1755 = vld [vmem:[#allocation2 + $0x51] sm:$0xff]
        %v1756 = vld [vmem:[#allocation2 + $0x59] sm:$0xff]
        %v1757 = vld [vmem:[#allocation2 + $0x61] sm:$0xff]
        %v1758 = vld [vmem:[#allocation2 + $0x69] sm:$0xff]
        %v1759 = vld [vmem:[#allocation2 + $0x71] sm:$0xff]
        %v1760 = vld [vmem:[#allocation2 + $0x79] sm:$0xff]
        %v1761 = vld [vmem:[#allocation2 + $0x81] sm:$0xff]
        %v1762 = vld [vmem:[#allocation2 + $0x89] sm:$0xff]
        %v1763 = vld [vmem:[#allocation2 + $0x91] sm:$0xff]
        %v1764 = vld [vmem:[#allocation2 + $0x99] sm:$0xff]
        %v1765 = vld [vmem:[#allocation2 + $0xa1] sm:$0xff]
        %v1766 = vld [vmem:[#allocation2 + $0xa9] sm:$0xff]
        %v1767 = vld [vmem:[#allocation2 + $0xb1] sm:$0xff]
        %v1768 = vld [vmem:[#allocation2 + $0xb9] sm:$0xff]
        %v1769 = vld [vmem:[#allocation2 + $0xc1] sm:$0xff]
        %v1770 = vld [vmem:[#allocation2 + $0xc9] sm:$0xff]
        %v1771 = vld [vmem:[#allocation2 + $0xd1] sm:$0xff]
        %v1772 = vld [vmem:[#allocation2 + $0xd9] sm:$0xff]
        %v1773 = vld [vmem:[#allocation2 + $0xe1] sm:$0xff]
        %v1774 = vld [vmem:[#allocation2 + $0xe9] sm:$0xff]
        %v1775 = vld [vmem:[#allocation2 + $0xf1] sm:$0xff]
        %v1776 = vld [vmem:[#allocation2 + $0xf9] sm:$0xff]
        %v1777 = vld [vmem:[#allocation2 + $0x101] sm:$0xff]
        %v1778 = vlaneseq
        %v1779 = vshrl.u32 %v1778, 7
        %v1780 = vsub.s32 2, %v1779
        %v1781 = vrot.slane %v1328, %v1780
        %v1782 = vmul.f32 %v1746, %v1781
        %v1783 = vmul.f32 %v1747, %v1781
        %v1784 = vmul.f32 %v1748, %v1781
        %v1785 = vmul.f32 %v1749, %v1781
        %v1786 = vmul.f32 %v1750, %v1781
        %v1787 = vmul.f32 %v1751, %v1781
        %v1788 = vmul.f32 %v1752, %v1781
        %v1789 = vmul.f32 %v1753, %v1781
        %v1790 = vmul.f32 %v1754, %v1781
        %v1791 = vmul.f32 %v1755, %v1781
        %v1792 = vmul.f32 %v1756, %v1781
        %v1793 = vmul.f32 %v1757, %v1781
        %v1794 = vmul.f32 %v1758, %v1781
        %v1795 = vmul.f32 %v1759, %v1781
        %v1796 = vmul.f32 %v1760, %v1781
        %v1797 = vmul.f32 %v1761, %v1781
        %v1798 = vmul.f32 %v1762, %v1781
        %v1799 = vmul.f32 %v1763, %v1781
        %v1800 = vmul.f32 %v1764, %v1781
        %v1801 = vmul.f32 %v1765, %v1781
        %v1802 = vmul.f32 %v1766, %v1781
        %v1803 = vmul.f32 %v1767, %v1781
        %v1804 = vmul.f32 %v1768, %v1781
        %v1805 = vmul.f32 %v1769, %v1781
        %v1806 = vmul.f32 %v1770, %v1781
        %v1807 = vmul.f32 %v1771, %v1781
        %v1808 = vmul.f32 %v1772, %v1781
        %v1809 = vmul.f32 %v1773, %v1781
        %v1810 = vmul.f32 %v1774, %v1781
        %v1811 = vmul.f32 %v1775, %v1781
        %v1812 = vmul.f32 %v1776, %v1781
        %v1813 = vmul.f32 %v1777, %v1781
        %v1814 = vld [vmem:[#allocation2 + $0x109] sm:$0xff]
        %v1815 = vld [vmem:[#allocation2 + $0x111] sm:$0xff]
        %v1816 = vlaneseq
        %v1817 = vshrl.u32 %v1816, 7
        %v1818 = vsub.s32 5, %v1817
        %v1819 = vrot.slane %v1328, %v1818
        %v1820 = vmul.f32 %v1748, %v1819
        %v1821 = vmul.f32 %v1749, %v1819
        %v1822 = vmul.f32 %v1750, %v1819
        %v1823 = vmul.f32 %v1751, %v1819
        %v1824 = vmul.f32 %v1752, %v1819
        %v1825 = vmul.f32 %v1753, %v1819
        %v1826 = vmul.f32 %v1754, %v1819
        %v1827 = vmul.f32 %v1755, %v1819
        %v1828 = vmul.f32 %v1756, %v1819
        %v1829 = vmul.f32 %v1757, %v1819
        %v1830 = vmul.f32 %v1758, %v1819
        %v1831 = vmul.f32 %v1759, %v1819
        %v1832 = vmul.f32 %v1760, %v1819
        %v1833 = vmul.f32 %v1761, %v1819
        %v1834 = vmul.f32 %v1762, %v1819
        %v1835 = vmul.f32 %v1763, %v1819
        %v1836 = vmul.f32 %v1764, %v1819
        %v1837 = vmul.f32 %v1765, %v1819
        %v1838 = vmul.f32 %v1766, %v1819
        %v1839 = vmul.f32 %v1767, %v1819
        %v1840 = vmul.f32 %v1768, %v1819
        %v1841 = vmul.f32 %v1769, %v1819
        %v1842 = vmul.f32 %v1770, %v1819
        %v1843 = vmul.f32 %v1771, %v1819
        %v1844 = vmul.f32 %v1772, %v1819
        %v1845 = vmul.f32 %v1773, %v1819
        %v1846 = vmul.f32 %v1774, %v1819
        %v1847 = vmul.f32 %v1775, %v1819
        %v1848 = vmul.f32 %v1776, %v1819
        %v1849 = vmul.f32 %v1777, %v1819
        %v1850 = vmul.f32 %v1814, %v1819
        %v1851 = vmul.f32 %v1815, %v1819
        %v1852 = vadd.f32 %v1782, %v1820
        %v1853 = vadd.f32 %v1783, %v1821
        %v1854 = vadd.f32 %v1784, %v1822
        %v1855 = vadd.f32 %v1785, %v1823
        %v1856 = vadd.f32 %v1786, %v1824
        %v1857 = vadd.f32 %v1787, %v1825
        %v1858 = vadd.f32 %v1788, %v1826
        %v1859 = vadd.f32 %v1789, %v1827
        %v1860 = vadd.f32 %v1790, %v1828
        %v1861 = vadd.f32 %v1791, %v1829
        %v1862 = vadd.f32 %v1792, %v1830
        %v1863 = vadd.f32 %v1793, %v1831
        %v1864 = vadd.f32 %v1794, %v1832
        %v1865 = vadd.f32 %v1795, %v1833
        %v1866 = vadd.f32 %v1796, %v1834
        %v1867 = vadd.f32 %v1797, %v1835
        %v1868 = vadd.f32 %v1798, %v1836
        %v1869 = vadd.f32 %v1799, %v1837
        %v1870 = vadd.f32 %v1800, %v1838
        %v1871 = vadd.f32 %v1801, %v1839
        %v1872 = vadd.f32 %v1802, %v1840
        %v1873 = vadd.f32 %v1803, %v1841
        %v1874 = vadd.f32 %v1804, %v1842
        %v1875 = vadd.f32 %v1805, %v1843
        %v1876 = vadd.f32 %v1806, %v1844
        %v1877 = vadd.f32 %v1807, %v1845
        %v1878 = vadd.f32 %v1808, %v1846
        %v1879 = vadd.f32 %v1809, %v1847
        %v1880 = vadd.f32 %v1810, %v1848
        %v1881 = vadd.f32 %v1811, %v1849
        %v1882 = vadd.f32 %v1812, %v1850
        %v1883 = vadd.f32 %v1813, %v1851
        %v1884 = vld [vmem:[#allocation2 + $0x119] sm:$0xff]
        %v1885 = vld [vmem:[#allocation2 + $0x121] sm:$0xff]
        %v1886 = vlaneseq
        %v1887 = vshrl.u32 %v1886, 7
        %v1888 = vsub.s32 0, %v1887
        %v1889 = vrot.slane %v1329, %v1888
        %v1890 = vmul.f32 %v1750, %v1889
        %v1891 = vmul.f32 %v1751, %v1889
        %v1892 = vmul.f32 %v1752, %v1889
        %v1893 = vmul.f32 %v1753, %v1889
        %v1894 = vmul.f32 %v1754, %v1889
        %v1895 = vmul.f32 %v1755, %v1889
        %v1896 = vmul.f32 %v1756, %v1889
        %v1897 = vmul.f32 %v1757, %v1889
        %v1898 = vmul.f32 %v1758, %v1889
        %v1899 = vmul.f32 %v1759, %v1889
        %v1900 = vmul.f32 %v1760, %v1889
        %v1901 = vmul.f32 %v1761, %v1889
        %v1902 = vmul.f32 %v1762, %v1889
        %v1903 = vmul.f32 %v1763, %v1889
        %v1904 = vmul.f32 %v1764, %v1889
        %v1905 = vmul.f32 %v1765, %v1889
        %v1906 = vmul.f32 %v1766, %v1889
        %v1907 = vmul.f32 %v1767, %v1889
        %v1908 = vmul.f32 %v1768, %v1889
        %v1909 = vmul.f32 %v1769, %v1889
        %v1910 = vmul.f32 %v1770, %v1889
        %v1911 = vmul.f32 %v1771, %v1889
        %v1912 = vmul.f32 %v1772, %v1889
        %v1913 = vmul.f32 %v1773, %v1889
        %v1914 = vmul.f32 %v1774, %v1889
        %v1915 = vmul.f32 %v1775, %v1889
        %v1916 = vmul.f32 %v1776, %v1889
        %v1917 = vmul.f32 %v1777, %v1889
        %v1918 = vmul.f32 %v1814, %v1889
        %v1919 = vmul.f32 %v1815, %v1889
        %v1920 = vmul.f32 %v1884, %v1889
        %v1921 = vmul.f32 %v1885, %v1889
        %v1922 = vadd.f32 %v1852, %v1890
        %v1923 = vadd.f32 %v1853, %v1891
        %v1924 = vadd.f32 %v1854, %v1892
        %v1925 = vadd.f32 %v1855, %v1893
        %v1926 = vadd.f32 %v1856, %v1894
        %v1927 = vadd.f32 %v1857, %v1895
        %v1928 = vadd.f32 %v1858, %v1896
        %v1929 = vadd.f32 %v1859, %v1897
        %v1930 = vadd.f32 %v1860, %v1898
        %v1931 = vadd.f32 %v1861, %v1899
        %v1932 = vadd.f32 %v1862, %v1900
        %v1933 = vadd.f32 %v1863, %v1901
        %v1934 = vadd.f32 %v1864, %v1902
        %v1935 = vadd.f32 %v1865, %v1903
        %v1936 = vadd.f32 %v1866, %v1904
        %v1937 = vadd.f32 %v1867, %v1905
        %v1938 = vadd.f32 %v1868, %v1906
        %v1939 = vadd.f32 %v1869, %v1907
        %v1940 = vadd.f32 %v1870, %v1908
        %v1941 = vadd.f32 %v1871, %v1909
        %v1942 = vadd.f32 %v1872, %v1910
        %v1943 = vadd.f32 %v1873, %v1911
        %v1944 = vadd.f32 %v1874, %v1912
        %v1945 = vadd.f32 %v1875, %v1913
        %v1946 = vadd.f32 %v1876, %v1914
        %v1947 = vadd.f32 %v1877, %v1915
        %v1948 = vadd.f32 %v1878, %v1916
        %v1949 = vadd.f32 %v1879, %v1917
        %v1950 = vadd.f32 %v1880, %v1918
        %v1951 = vadd.f32 %v1881, %v1919
        %v1952 = vadd.f32 %v1882, %v1920
        %v1953 = vadd.f32 %v1883, %v1921
        %v1954 = vsel %vm1264, 1, 0
        %v1955 = vsel %vm1265, 1, 0
        %v1956 = vsel %vm1266, 1, 0
        %v1957 = vsel %vm1267, 1, 0
        %v1958 = vsel %vm1268, 1, 0
        %v1959 = vsel %vm1269, 1, 0
        %v1960 = vsel %vm1270, 1, 0
        %v1961 = vsel %vm1271, 1, 0
        %v1962 = vsel %vm1272, 1, 0
        %v1963 = vsel %vm1273, 1, 0
        %v1964 = vsel %vm1274, 1, 0
        %v1965 = vsel %vm1275, 1, 0
        %v1966 = vsel %vm1276, 1, 0
        %v1967 = vsel %vm1277, 1, 0
        %v1968 = vsel %vm1278, 1, 0
        %v1969 = vsel %vm1279, 1, 0
        %v1970 = vsel %vm1280, 1, 0
        %v1971 = vsel %vm1281, 1, 0
        %v1972 = vsel %vm1282, 1, 0
        %v1973 = vsel %vm1283, 1, 0
        %v1974 = vsel %vm1284, 1, 0
        %v1975 = vsel %vm1285, 1, 0
        %v1976 = vsel %vm1286, 1, 0
        %v1977 = vsel %vm1287, 1, 0
        %v1978 = vsel %vm1288, 1, 0
        %v1979 = vsel %vm1289, 1, 0
        %v1980 = vsel %vm1290, 1, 0
        %v1981 = vsel %vm1291, 1, 0
        %v1982 = vsel %vm1292, 1, 0
        %v1983 = vsel %vm1293, 1, 0
        %v1984 = vsel %vm1294, 1, 0
        %v1985 = vsel %vm1295, 1, 0
        %vm1986 = vcmp.eq.s32.totalorder %v1954, 1
        %vm1987 = vcmp.eq.s32.totalorder %v1955, 1
        %vm1988 = vcmp.eq.s32.totalorder %v1956, 1
        %vm1989 = vcmp.eq.s32.totalorder %v1957, 1
        %vm1990 = vcmp.eq.s32.totalorder %v1958, 1
        %vm1991 = vcmp.eq.s32.totalorder %v1959, 1
        %vm1992 = vcmp.eq.s32.totalorder %v1960, 1
        %vm1993 = vcmp.eq.s32.totalorder %v1961, 1
        %vm1994 = vcmp.eq.s32.totalorder %v1962, 1
        %vm1995 = vcmp.eq.s32.totalorder %v1963, 1
        %vm1996 = vcmp.eq.s32.totalorder %v1964, 1
        %vm1997 = vcmp.eq.s32.totalorder %v1965, 1
        %vm1998 = vcmp.eq.s32.totalorder %v1966, 1
        %vm1999 = vcmp.eq.s32.totalorder %v1967, 1
        %vm2000 = vcmp.eq.s32.totalorder %v1968, 1
        %vm2001 = vcmp.eq.s32.totalorder %v1969, 1
        %vm2002 = vcmp.eq.s32.totalorder %v1970, 1
        %vm2003 = vcmp.eq.s32.totalorder %v1971, 1
        %vm2004 = vcmp.eq.s32.totalorder %v1972, 1
        %vm2005 = vcmp.eq.s32.totalorder %v1973, 1
        %vm2006 = vcmp.eq.s32.totalorder %v1974, 1
        %vm2007 = vcmp.eq.s32.totalorder %v1975, 1
        %vm2008 = vcmp.eq.s32.totalorder %v1976, 1
        %vm2009 = vcmp.eq.s32.totalorder %v1977, 1
        %vm2010 = vcmp.eq.s32.totalorder %v1978, 1
        %vm2011 = vcmp.eq.s32.totalorder %v1979, 1
        %vm2012 = vcmp.eq.s32.totalorder %v1980, 1
        %vm2013 = vcmp.eq.s32.totalorder %v1981, 1
        %vm2014 = vcmp.eq.s32.totalorder %v1982, 1
        %vm2015 = vcmp.eq.s32.totalorder %v1983, 1
        %vm2016 = vcmp.eq.s32.totalorder %v1984, 1
        %vm2017 = vcmp.eq.s32.totalorder %v1985, 1
        %v2018 = vsel %vm1986, %v1506, 0.0
        %v2019 = vsel %vm1987, %v1507, 0.0
        %v2020 = vsel %vm1988, %v1508, 0.0
        %v2021 = vsel %vm1989, %v1509, 0.0
        %v2022 = vsel %vm1990, %v1510, 0.0
        %v2023 = vsel %vm1991, %v1511, 0.0
        %v2024 = vsel %vm1992, %v1512, 0.0
        %v2025 = vsel %vm1993, %v1513, 0.0
        %v2026 = vsel %vm1994, %v1514, 0.0
        %v2027 = vsel %vm1995, %v1515, 0.0
        %v2028 = vsel %vm1996, %v1516, 0.0
        %v2029 = vsel %vm1997, %v1517, 0.0
        %v2030 = vsel %vm1998, %v1518, 0.0
        %v2031 = vsel %vm1999, %v1519, 0.0
        %v2032 = vsel %vm2000, %v1520, 0.0
        %v2033 = vsel %vm2001, %v1521, 0.0
        %v2034 = vsel %vm2002, %v1522, 0.0
        %v2035 = vsel %vm2003, %v1523, 0.0
        %v2036 = vsel %vm2004, %v1524, 0.0
        %v2037 = vsel %vm2005, %v1525, 0.0
        %v2038 = vsel %vm2006, %v1526, 0.0
        %v2039 = vsel %vm2007, %v1527, 0.0
        %v2040 = vsel %vm2008, %v1528, 0.0
        %v2041 = vsel %vm2009, %v1529, 0.0
        %v2042 = vsel %vm2010, %v1530, 0.0
        %v2043 = vsel %vm2011, %v1531, 0.0
        %v2044 = vsel %vm2012, %v1532, 0.0
        %v2045 = vsel %vm2013, %v1533, 0.0
        %v2046 = vsel %vm2014, %v1534, 0.0
        %v2047 = vsel %vm2015, %v1535, 0.0
        %v2048 = vsel %vm2016, %v1536, 0.0
        %v2049 = vsel %vm2017, %v1537, 0.0
        %v2050 = vadd.f32 %v1714, %v2018
        %v2051 = vadd.f32 %v1715, %v2019
        %v2052 = vadd.f32 %v1716, %v2020
        %v2053 = vadd.f32 %v1717, %v2021
        %v2054 = vadd.f32 %v1718, %v2022
        %v2055 = vadd.f32 %v1719, %v2023
        %v2056 = vadd.f32 %v1720, %v2024
        %v2057 = vadd.f32 %v1721, %v2025
        %v2058 = vadd.f32 %v1722, %v2026
        %v2059 = vadd.f32 %v1723, %v2027
        %v2060 = vadd.f32 %v1724, %v2028
        %v2061 = vadd.f32 %v1725, %v2029
        %v2062 = vadd.f32 %v1726, %v2030
        %v2063 = vadd.f32 %v1727, %v2031
        %v2064 = vadd.f32 %v1728, %v2032
        %v2065 = vadd.f32 %v1729, %v2033
        %v2066 = vadd.f32 %v1730, %v2034
        %v2067 = vadd.f32 %v1731, %v2035
        %v2068 = vadd.f32 %v1732, %v2036
        %v2069 = vadd.f32 %v1733, %v2037
        %v2070 = vadd.f32 %v1734, %v2038
        %v2071 = vadd.f32 %v1735, %v2039
        %v2072 = vadd.f32 %v1736, %v2040
        %v2073 = vadd.f32 %v1737, %v2041
        %v2074 = vadd.f32 %v1738, %v2042
        %v2075 = vadd.f32 %v1739, %v2043
        %v2076 = vadd.f32 %v1740, %v2044
        %v2077 = vadd.f32 %v1741, %v2045
        %v2078 = vadd.f32 %v1742, %v2046
        %v2079 = vadd.f32 %v1743, %v2047
        %v2080 = vadd.f32 %v1744, %v2048
        %v2081 = vadd.f32 %v1745, %v2049
        %v2082 = vsel %vm1296, 1, 0
        %v2083 = vsel %vm1297, 1, 0
        %v2084 = vsel %vm1298, 1, 0
        %v2085 = vsel %vm1299, 1, 0
        %v2086 = vsel %vm1300, 1, 0
        %v2087 = vsel %vm1301, 1, 0
        %v2088 = vsel %vm1302, 1, 0
        %v2089 = vsel %vm1303, 1, 0
        %v2090 = vsel %vm1304, 1, 0
        %v2091 = vsel %vm1305, 1, 0
        %v2092 = vsel %vm1306, 1, 0
        %v2093 = vsel %vm1307, 1, 0
        %v2094 = vsel %vm1308, 1, 0
        %v2095 = vsel %vm1309, 1, 0
        %v2096 = vsel %vm1310, 1, 0
        %v2097 = vsel %vm1311, 1, 0
        %v2098 = vsel %vm1312, 1, 0
        %v2099 = vsel %vm1313, 1, 0
        %v2100 = vsel %vm1314, 1, 0
        %v2101 = vsel %vm1315, 1, 0
        %v2102 = vsel %vm1316, 1, 0
        %v2103 = vsel %vm1317, 1, 0
        %v2104 = vsel %vm1318, 1, 0
        %v2105 = vsel %vm1319, 1, 0
        %v2106 = vsel %vm1320, 1, 0
        %v2107 = vsel %vm1321, 1, 0
        %v2108 = vsel %vm1322, 1, 0
        %v2109 = vsel %vm1323, 1, 0
        %v2110 = vsel %vm1324, 1, 0
        %v2111 = vsel %vm1325, 1, 0
        %v2112 = vsel %vm1326, 1, 0
        %v2113 = vsel %vm1327, 1, 0
        %vm2114 = vcmp.eq.s32.totalorder %v2082, 1
        %vm2115 = vcmp.eq.s32.totalorder %v2083, 1
        %vm2116 = vcmp.eq.s32.totalorder %v2084, 1
        %vm2117 = vcmp.eq.s32.totalorder %v2085, 1
        %vm2118 = vcmp.eq.s32.totalorder %v2086, 1
        %vm2119 = vcmp.eq.s32.totalorder %v2087, 1
        %vm2120 = vcmp.eq.s32.totalorder %v2088, 1
        %vm2121 = vcmp.eq.s32.totalorder %v2089, 1
        %vm2122 = vcmp.eq.s32.totalorder %v2090, 1
        %vm2123 = vcmp.eq.s32.totalorder %v2091, 1
        %vm2124 = vcmp.eq.s32.totalorder %v2092, 1
        %vm2125 = vcmp.eq.s32.totalorder %v2093, 1
        %vm2126 = vcmp.eq.s32.totalorder %v2094, 1
        %vm2127 = vcmp.eq.s32.totalorder %v2095, 1
        %vm2128 = vcmp.eq.s32.totalorder %v2096, 1
        %vm2129 = vcmp.eq.s32.totalorder %v2097, 1
        %vm2130 = vcmp.eq.s32.totalorder %v2098, 1
        %vm2131 = vcmp.eq.s32.totalorder %v2099, 1
        %vm2132 = vcmp.eq.s32.totalorder %v2100, 1
        %vm2133 = vcmp.eq.s32.totalorder %v2101, 1
        %vm2134 = vcmp.eq.s32.totalorder %v2102, 1
        %vm2135 = vcmp.eq.s32.totalorder %v2103, 1
        %vm2136 = vcmp.eq.s32.totalorder %v2104, 1
        %vm2137 = vcmp.eq.s32.totalorder %v2105, 1
        %vm2138 = vcmp.eq.s32.totalorder %v2106, 1
        %vm2139 = vcmp.eq.s32.totalorder %v2107, 1
        %vm2140 = vcmp.eq.s32.totalorder %v2108, 1
        %vm2141 = vcmp.eq.s32.totalorder %v2109, 1
        %vm2142 = vcmp.eq.s32.totalorder %v2110, 1
        %vm2143 = vcmp.eq.s32.totalorder %v2111, 1
        %vm2144 = vcmp.eq.s32.totalorder %v2112, 1
        %vm2145 = vcmp.eq.s32.totalorder %v2113, 1
        %v2146 = vsel %vm2114, %v1922, 0.0
        %v2147 = vsel %vm2115, %v1923, 0.0
        %v2148 = vsel %vm2116, %v1924, 0.0
        %v2149 = vsel %vm2117, %v1925, 0.0
        %v2150 = vsel %vm2118, %v1926, 0.0
        %v2151 = vsel %vm2119, %v1927, 0.0
        %v2152 = vsel %vm2120, %v1928, 0.0
        %v2153 = vsel %vm2121, %v1929, 0.0
        %v2154 = vsel %vm2122, %v1930, 0.0
        %v2155 = vsel %vm2123, %v1931, 0.0
        %v2156 = vsel %vm2124, %v1932, 0.0
        %v2157 = vsel %vm2125, %v1933, 0.0
        %v2158 = vsel %vm2126, %v1934, 0.0
        %v2159 = vsel %vm2127, %v1935, 0.0
        %v2160 = vsel %vm2128, %v1936, 0.0
        %v2161 = vsel %vm2129, %v1937, 0.0
        %v2162 = vsel %vm2130, %v1938, 0.0
        %v2163 = vsel %vm2131, %v1939, 0.0
        %v2164 = vsel %vm2132, %v1940, 0.0
        %v2165 = vsel %vm2133, %v1941, 0.0
        %v2166 = vsel %vm2134, %v1942, 0.0
        %v2167 = vsel %vm2135, %v1943, 0.0
        %v2168 = vsel %vm2136, %v1944, 0.0
        %v2169 = vsel %vm2137, %v1945, 0.0
        %v2170 = vsel %vm2138, %v1946, 0.0
        %v2171 = vsel %vm2139, %v1947, 0.0
        %v2172 = vsel %vm2140, %v1948, 0.0
        %v2173 = vsel %vm2141, %v1949, 0.0
        %v2174 = vsel %vm2142, %v1950, 0.0
        %v2175 = vsel %vm2143, %v1951, 0.0
        %v2176 = vsel %vm2144, %v1952, 0.0
        %v2177 = vsel %vm2145, %v1953, 0.0
        %v2178 = vadd.f32 %v2050, %v2146
        %v2179 = vadd.f32 %v2051, %v2147
        %v2180 = vadd.f32 %v2052, %v2148
        %v2181 = vadd.f32 %v2053, %v2149
        %v2182 = vadd.f32 %v2054, %v2150
        %v2183 = vadd.f32 %v2055, %v2151
        %v2184 = vadd.f32 %v2056, %v2152
        %v2185 = vadd.f32 %v2057, %v2153
        %v2186 = vadd.f32 %v2058, %v2154
        %v2187 = vadd.f32 %v2059, %v2155
        %v2188 = vadd.f32 %v2060, %v2156
        %v2189 = vadd.f32 %v2061, %v2157
        %v2190 = vadd.f32 %v2062, %v2158
        %v2191 = vadd.f32 %v2063, %v2159
        %v2192 = vadd.f32 %v2064, %v2160
        %v2193 = vadd.f32 %v2065, %v2161
        %v2194 = vadd.f32 %v2066, %v2162
        %v2195 = vadd.f32 %v2067, %v2163
        %v2196 = vadd.f32 %v2068, %v2164
        %v2197 = vadd.f32 %v2069, %v2165
        %v2198 = vadd.f32 %v2070, %v2166
        %v2199 = vadd.f32 %v2071, %v2167
        %v2200 = vadd.f32 %v2072, %v2168
        %v2201 = vadd.f32 %v2073, %v2169
        %v2202 = vadd.f32 %v2074, %v2170
        %v2203 = vadd.f32 %v2075, %v2171
        %v2204 = vadd.f32 %v2076, %v2172
        %v2205 = vadd.f32 %v2077, %v2173
        %v2206 = vadd.f32 %v2078, %v2174
        %v2207 = vadd.f32 %v2079, %v2175
        %v2208 = vadd.f32 %v2080, %v2176
        %v2209 = vadd.f32 %v2081, %v2177
        %v2210 = vld [vmem:[%s451] sm:$0x1]
        %v2212 = vlaneseq
        %v2213 = vshrl.u32 %v2212, 7
        %v2214 = vsub.s32 0, %v2213
        %v2215 = vrot.slane %v2210, %v2214
        %v2217 = vadd.f32 %v2178, %v2215
        %v2218 = vadd.f32 %v2179, %v2215
        %v2219 = vadd.f32 %v2180, %v2215
        %v2220 = vadd.f32 %v2181, %v2215
        %v2221 = vadd.f32 %v2182, %v2215
        %v2222 = vadd.f32 %v2183, %v2215
        %v2223 = vadd.f32 %v2184, %v2215
        %v2224 = vadd.f32 %v2185, %v2215
        %v2225 = vadd.f32 %v2186, %v2215
        %v2226 = vadd.f32 %v2187, %v2215
        %v2227 = vadd.f32 %v2188, %v2215
        %v2228 = vadd.f32 %v2189, %v2215
        %v2229 = vadd.f32 %v2190, %v2215
        %v2230 = vadd.f32 %v2191, %v2215
        %v2231 = vadd.f32 %v2192, %v2215
        %v2232 = vadd.f32 %v2193, %v2215
        %v2233 = vadd.f32 %v2194, %v2215
        %v2234 = vadd.f32 %v2195, %v2215
        %v2235 = vadd.f32 %v2196, %v2215
        %v2236 = vadd.f32 %v2197, %v2215
        %v2237 = vadd.f32 %v2198, %v2215
        %v2238 = vadd.f32 %v2199, %v2215
        %v2239 = vadd.f32 %v2200, %v2215
        %v2240 = vadd.f32 %v2201, %v2215
        %v2241 = vadd.f32 %v2202, %v2215
        %v2242 = vadd.f32 %v2203, %v2215
        %v2243 = vadd.f32 %v2204, %v2215
        %v2244 = vadd.f32 %v2205, %v2215
        %v2245 = vadd.f32 %v2206, %v2215
        %v2246 = vadd.f32 %v2207, %v2215
        %v2247 = vadd.f32 %v2208, %v2215
        %v2248 = vadd.f32 %v2209, %v2215
        %v2249 = vmul.f32 %v2217, 0.5
        %v2250 = vmul.f32 %v2218, 0.5
        %v2251 = vmul.f32 %v2219, 0.5
        %v2252 = vmul.f32 %v2220, 0.5
        %v2253 = vmul.f32 %v2221, 0.5
        %v2254 = vmul.f32 %v2222, 0.5
        %v2255 = vmul.f32 %v2223, 0.5
        %v2256 = vmul.f32 %v2224, 0.5
        %v2257 = vmul.f32 %v2225, 0.5
        %v2258 = vmul.f32 %v2226, 0.5
        %v2259 = vmul.f32 %v2227, 0.5
        %v2260 = vmul.f32 %v2228, 0.5
        %v2261 = vmul.f32 %v2229, 0.5
        %v2262 = vmul.f32 %v2230, 0.5
        %v2263 = vmul.f32 %v2231, 0.5
        %v2264 = vmul.f32 %v2232, 0.5
        %v2265 = vmul.f32 %v2233, 0.5
        %v2266 = vmul.f32 %v2234, 0.5
        %v2267 = vmul.f32 %v2235, 0.5
        %v2268 = vmul.f32 %v2236, 0.5
        %v2269 = vmul.f32 %v2237, 0.5
        %v2270 = vmul.f32 %v2238, 0.5
        %v2271 = vmul.f32 %v2239, 0.5
        %v2272 = vmul.f32 %v2240, 0.5
        %v2273 = vmul.f32 %v2241, 0.5
        %v2274 = vmul.f32 %v2242, 0.5
        %v2275 = vmul.f32 %v2243, 0.5
        %v2276 = vmul.f32 %v2244, 0.5
        %v2277 = vmul.f32 %v2245, 0.5
        %v2278 = vmul.f32 %v2246, 0.5
        %v2279 = vmul.f32 %v2247, 0.5
        %v2280 = vmul.f32 %v2248, 0.5
        %v2281 = vmul.f32 %v2217, 0.70710677
        %v2282 = vmul.f32 %v2218, 0.70710677
        %v2283 = vmul.f32 %v2219, 0.70710677
        %v2284 = vmul.f32 %v2220, 0.70710677
        %v2285 = vmul.f32 %v2221, 0.70710677
        %v2286 = vmul.f32 %v2222, 0.70710677
        %v2287 = vmul.f32 %v2223, 0.70710677
        %v2288 = vmul.f32 %v2224, 0.70710677
        %v2289 = vmul.f32 %v2225, 0.70710677
        %v2290 = vmul.f32 %v2226, 0.70710677
        %v2291 = vmul.f32 %v2227, 0.70710677
        %v2292 = vmul.f32 %v2228, 0.70710677
        %v2293 = vmul.f32 %v2229, 0.70710677
        %v2294 = vmul.f32 %v2230, 0.70710677
        %v2295 = vmul.f32 %v2231, 0.70710677
        %v2296 = vmul.f32 %v2232, 0.70710677
        %v2297 = vmul.f32 %v2233, 0.70710677
        %v2298 = vmul.f32 %v2234, 0.70710677
        %v2299 = vmul.f32 %v2235, 0.70710677
        %v2300 = vmul.f32 %v2236, 0.70710677
        %v2301 = vmul.f32 %v2237, 0.70710677
        %v2302 = vmul.f32 %v2238, 0.70710677
        %v2303 = vmul.f32 %v2239, 0.70710677
        %v2304 = vmul.f32 %v2240, 0.70710677
        %v2305 = vmul.f32 %v2241, 0.70710677
        %v2306 = vmul.f32 %v2242, 0.70710677
        %v2307 = vmul.f32 %v2243, 0.70710677
        %v2308 = vmul.f32 %v2244, 0.70710677
        %v2309 = vmul.f32 %v2245, 0.70710677
        %v2310 = vmul.f32 %v2246, 0.70710677
        %v2311 = vmul.f32 %v2247, 0.70710677
        %v2312 = vmul.f32 %v2248, 0.70710677
        %v2313 = verf.f32.pop %v2281
        %v2314 = verf.f32.pop %v2282
        %v2315 = verf.f32.pop %v2283
        %v2316 = verf.f32.pop %v2284
        %v2317 = verf.f32.pop %v2285
        %v2318 = verf.f32.pop %v2286
        %v2319 = verf.f32.pop %v2287
        %v2320 = verf.f32.pop %v2288
        %v2321 = verf.f32.pop %v2289
        %v2322 = verf.f32.pop %v2290
        %v2323 = verf.f32.pop %v2291
        %v2324 = verf.f32.pop %v2292
        %v2325 = verf.f32.pop %v2293
        %v2326 = verf.f32.pop %v2294
        %v2327 = verf.f32.pop %v2295
        %v2328 = verf.f32.pop %v2296
        %v2329 = verf.f32.pop %v2297
        %v2330 = verf.f32.pop %v2298
        %v2331 = verf.f32.pop %v2299
        %v2332 = verf.f32.pop %v2300
        %v2333 = verf.f32.pop %v2301
        %v2334 = verf.f32.pop %v2302
        %v2335 = verf.f32.pop %v2303
        %v2336 = verf.f32.pop %v2304
        %v2337 = verf.f32.pop %v2305
        %v2338 = verf.f32.pop %v2306
        %v2339 = verf.f32.pop %v2307
        %v2340 = verf.f32.pop %v2308
        %v2341 = verf.f32.pop %v2309
        %v2342 = verf.f32.pop %v2310
        %v2343 = verf.f32.pop %v2311
        %v2344 = verf.f32.pop %v2312
        %v2345 = vadd.f32 %v2313, 1.0
        %v2346 = vadd.f32 %v2314, 1.0
        %v2347 = vadd.f32 %v2315, 1.0
        %v2348 = vadd.f32 %v2316, 1.0
        %v2349 = vadd.f32 %v2317, 1.0
        %v2350 = vadd.f32 %v2318, 1.0
        %v2351 = vadd.f32 %v2319, 1.0
        %v2352 = vadd.f32 %v2320, 1.0
        %v2353 = vadd.f32 %v2321, 1.0
        %v2354 = vadd.f32 %v2322, 1.0
        %v2355 = vadd.f32 %v2323, 1.0
        %v2356 = vadd.f32 %v2324, 1.0
        %v2357 = vadd.f32 %v2325, 1.0
        %v2358 = vadd.f32 %v2326, 1.0
        %v2359 = vadd.f32 %v2327, 1.0
        %v2360 = vadd.f32 %v2328, 1.0
        %v2361 = vadd.f32 %v2329, 1.0
        %v2362 = vadd.f32 %v2330, 1.0
        %v2363 = vadd.f32 %v2331, 1.0
        %v2364 = vadd.f32 %v2332, 1.0
        %v2365 = vadd.f32 %v2333, 1.0
        %v2366 = vadd.f32 %v2334, 1.0
        %v2367 = vadd.f32 %v2335, 1.0
        %v2368 = vadd.f32 %v2336, 1.0
        %v2369 = vadd.f32 %v2337, 1.0
        %v2370 = vadd.f32 %v2338, 1.0
        %v2371 = vadd.f32 %v2339, 1.0
        %v2372 = vadd.f32 %v2340, 1.0
        %v2373 = vadd.f32 %v2341, 1.0
        %v2374 = vadd.f32 %v2342, 1.0
        %v2375 = vadd.f32 %v2343, 1.0
        %v2376 = vadd.f32 %v2344, 1.0
        %v2377 = vmul.f32 %v2249, %v2345
        %v2378 = vmul.f32 %v2250, %v2346
        %v2379 = vmul.f32 %v2251, %v2347
        %v2380 = vmul.f32 %v2252, %v2348
        %v2381 = vmul.f32 %v2253, %v2349
        %v2382 = vmul.f32 %v2254, %v2350
        %v2383 = vmul.f32 %v2255, %v2351
        %v2384 = vmul.f32 %v2256, %v2352
        %v2385 = vmul.f32 %v2257, %v2353
        %v2386 = vmul.f32 %v2258, %v2354
        %v2387 = vmul.f32 %v2259, %v2355
        %v2388 = vmul.f32 %v2260, %v2356
        %v2389 = vmul.f32 %v2261, %v2357
        %v2390 = vmul.f32 %v2262, %v2358
        %v2391 = vmul.f32 %v2263, %v2359
        %v2392 = vmul.f32 %v2264, %v2360
        %v2393 = vmul.f32 %v2265, %v2361
        %v2394 = vmul.f32 %v2266, %v2362
        %v2395 = vmul.f32 %v2267, %v2363
        %v2396 = vmul.f32 %v2268, %v2364
        %v2397 = vmul.f32 %v2269, %v2365
        %v2398 = vmul.f32 %v2270, %v2366
        %v2399 = vmul.f32 %v2271, %v2367
        %v2400 = vmul.f32 %v2272, %v2368
        %v2401 = vmul.f32 %v2273, %v2369
        %v2402 = vmul.f32 %v2274, %v2370
        %v2403 = vmul.f32 %v2275, %v2371
        %v2404 = vmul.f32 %v2276, %v2372
        %v2405 = vmul.f32 %v2277, %v2373
        %v2406 = vmul.f32 %v2278, %v2374
        %v2407 = vmul.f32 %v2279, %v2375
        %v2408 = vmul.f32 %v2280, %v2376
        %v2409 = vld [vmem:[#allocation3] sm:$0xff]
        %v2410 = vld [vmem:[#allocation3 + $0x8] sm:$0xff]
        %v2411 = vld [vmem:[#allocation3 + $0x10] sm:$0xff]
        %v2412 = vld [vmem:[#allocation3 + $0x18] sm:$0xff]
        %v2413 = vld [vmem:[#allocation3 + $0x20] sm:$0xff]
        %v2414 = vld [vmem:[#allocation3 + $0x28] sm:$0xff]
        %v2415 = vld [vmem:[#allocation3 + $0x30] sm:$0xff]
        %v2416 = vld [vmem:[#allocation3 + $0x38] sm:$0xff]
        %v2417 = vld [vmem:[#allocation3 + $0x40] sm:$0xff]
        %v2418 = vld [vmem:[#allocation3 + $0x48] sm:$0xff]
        %v2419 = vld [vmem:[#allocation3 + $0x50] sm:$0xff]
        %v2420 = vld [vmem:[#allocation3 + $0x58] sm:$0xff]
        %v2421 = vld [vmem:[#allocation3 + $0x60] sm:$0xff]
        %v2422 = vld [vmem:[#allocation3 + $0x68] sm:$0xff]
        %v2423 = vld [vmem:[#allocation3 + $0x70] sm:$0xff]
        %v2424 = vld [vmem:[#allocation3 + $0x78] sm:$0xff]
        %v2425 = vld [vmem:[#allocation3 + $0x80] sm:$0xff]
        %v2426 = vld [vmem:[#allocation3 + $0x88] sm:$0xff]
        %v2427 = vld [vmem:[#allocation3 + $0x90] sm:$0xff]
        %v2428 = vld [vmem:[#allocation3 + $0x98] sm:$0xff]
        %v2429 = vld [vmem:[#allocation3 + $0xa0] sm:$0xff]
        %v2430 = vld [vmem:[#allocation3 + $0xa8] sm:$0xff]
        %v2431 = vld [vmem:[#allocation3 + $0xb0] sm:$0xff]
        %v2432 = vld [vmem:[#allocation3 + $0xb8] sm:$0xff]
        %v2433 = vld [vmem:[#allocation3 + $0xc0] sm:$0xff]
        %v2434 = vld [vmem:[#allocation3 + $0xc8] sm:$0xff]
        %v2435 = vld [vmem:[#allocation3 + $0xd0] sm:$0xff]
        %v2436 = vld [vmem:[#allocation3 + $0xd8] sm:$0xff]
        %v2437 = vld [vmem:[#allocation3 + $0xe0] sm:$0xff]
        %v2438 = vld [vmem:[#allocation3 + $0xe8] sm:$0xff]
        %v2439 = vld [vmem:[#allocation3 + $0xf0] sm:$0xff]
        %v2440 = vld [vmem:[#allocation3 + $0xf8] sm:$0xff]
        %v2441 = vld [vmem:[%s394] sm:$0xff]
        %v2442 = vld [vmem:[%s394 + $0x8] sm:$0xff]
        %v2443 = vld [vmem:[%s394 + $0x10] sm:$0xff]
        %v2444 = vld [vmem:[%s394 + $0x18] sm:$0xff]
        %v2445 = vld [vmem:[%s394 + $0x20] sm:$0xff]
        %v2446 = vld [vmem:[%s394 + $0x28] sm:$0xff]
        %v2447 = vld [vmem:[%s394 + $0x30] sm:$0xff]
        %v2448 = vld [vmem:[%s394 + $0x38] sm:$0xff]
        %v2449 = vld [vmem:[%s394 + $0x40] sm:$0xff]
        %v2450 = vld [vmem:[%s394 + $0x48] sm:$0xff]
        %v2451 = vld [vmem:[%s394 + $0x50] sm:$0xff]
        %v2452 = vld [vmem:[%s394 + $0x58] sm:$0xff]
        %v2453 = vld [vmem:[%s394 + $0x60] sm:$0xff]
        %v2454 = vld [vmem:[%s394 + $0x68] sm:$0xff]
        %v2455 = vld [vmem:[%s394 + $0x70] sm:$0xff]
        %v2456 = vld [vmem:[%s394 + $0x78] sm:$0xff]
        %2457 = vmatprep.subr.mxu0 0.0
        %2458 = vmatpush1.msra.mxu0 %v2456
        %2459 = vmatprep.subr.mxu0 0.0
        %2460 = vmatpush1.msra.mxu0 %v2455
        %2461 = vmatprep.subr.mxu0 0.0
        %2462 = vmatpush1.msra.mxu0 %v2454
        %2463 = vmatprep.subr.mxu0 0.0
        %2464 = vmatpush1.msra.mxu0 %v2453
        %2465 = vmatprep.subr.mxu0 0.0
        %2466 = vmatpush1.msra.mxu0 %v2452
        %2467 = vmatprep.subr.mxu0 0.0
        %2468 = vmatpush1.msra.mxu0 %v2451
        %2469 = vmatprep.subr.mxu0 0.0
        %2470 = vmatpush1.msra.mxu0 %v2450
        %2471 = vmatprep.subr.mxu0 0.0
        %2472 = vmatpush1.msra.mxu0 %v2449
        %2473 = vmatprep.subr.mxu0 0.0
        %2474 = vmatpush1.msra.mxu0 %v2448
        %2475 = vmatprep.subr.mxu0 0.0
        %2476 = vmatpush1.msra.mxu0 %v2447
        %2477 = vmatprep.subr.mxu0 0.0
        %2478 = vmatpush1.msra.mxu0 %v2446
        %2479 = vmatprep.subr.mxu0 0.0
        %2480 = vmatpush1.msra.mxu0 %v2445
        %2481 = vmatprep.subr.mxu0 0.0
        %2482 = vmatpush1.msra.mxu0 %v2444
        %2483 = vmatprep.subr.mxu0 0.0
        %2484 = vmatpush1.msra.mxu0 %v2443
        %2485 = vmatprep.subr.mxu0 0.0
        %2486 = vmatpush1.msra.mxu0 %v2442
        %2487 = vmatprep.subr.mxu0 0.0
        %2488 = vmatpush1.msra.mxu0 %v2441
        %2489 = vmatprep.subr.mxu0 0.0
        %2490 = vmatpush2.msra.mxu0 0.0
        %2491 = vmatprep.subr.mxu0 0.0
        %2492 = vmatpush2.msra.mxu0 0.0
        %2493 = vmatprep.subr.mxu0 0.0
        %2494 = vmatpush2.msra.mxu0 0.0
        %2495 = vmatprep.subr.mxu0 0.0
        %2496 = vmatpush2.msra.mxu0 0.0
        %2497 = vmatprep.subr.mxu0 0.0
        %2498 = vmatpush2.msra.mxu0 0.0
        %2499 = vmatprep.subr.mxu0 0.0
        %2500 = vmatpush2.msra.mxu0 0.0
        %2501 = vmatprep.subr.mxu0 0.0
        %2502 = vmatpush2.msra.mxu0 0.0
        %2503 = vmatprep.subr.mxu0 0.0
        %2504 = vmatpush2.msra.mxu0 0.0
        %2505 = vmatprep.subr.mxu0 0.0
        %2506 = vmatpush2.msra.mxu0 0.0
        %2507 = vmatprep.subr.mxu0 0.0
        %2508 = vmatpush2.msra.mxu0 0.0
        %2509 = vmatprep.subr.mxu0 0.0
        %2510 = vmatpush2.msra.mxu0 0.0
        %2511 = vmatprep.subr.mxu0 0.0
        %2512 = vmatpush2.msra.mxu0 0.0
        %2513 = vmatprep.subr.mxu0 0.0
        %2514 = vmatpush2.msra.mxu0 0.0
        %2515 = vmatprep.subr.mxu0 0.0
        %2516 = vmatpush2.msra.mxu0 0.0
        %2517 = vmatprep.subr.mxu0 0.0
        %2518 = vmatpush2.msra.mxu0 0.0
        %2519 = vmatprep.subr.mxu0 0.0
        %2520 = vmatpush2.msra.mxu0 0.0
        %2521 = vmatprep.mubr.f32.mxu0 0.0
        %2522 = vmatmul.mubr.f32.gmra.mxu0 %v2377
        %v2523 = vpop.f32.mrf.mxu0
        %v2524 = vadd.f32 0.0, %v2523
        %v2525 = vpop.f32.mrf.mxu0
        %2526 = vmatprep.mubr.f32.mxu0 0.0
        %2527 = vmatmul.mubr.f32.gmra.mxu0 %v2378
        %v2528 = vpop.f32.mrf.mxu0
        %v2529 = vadd.f32 0.0, %v2528
        %v2530 = vpop.f32.mrf.mxu0
        %2531 = vmatprep.mubr.f32.mxu0 0.0
        %2532 = vmatmul.mubr.f32.gmra.mxu0 %v2379
        %v2533 = vpop.f32.mrf.mxu0
        %v2534 = vadd.f32 0.0, %v2533
        %v2535 = vpop.f32.mrf.mxu0
        %2536 = vmatprep.mubr.f32.mxu0 0.0
        %2537 = vmatmul.mubr.f32.gmra.mxu0 %v2380
        %v2538 = vpop.f32.mrf.mxu0
        %v2539 = vadd.f32 0.0, %v2538
        %v2540 = vpop.f32.mrf.mxu0
        %2541 = vmatprep.mubr.f32.mxu0 0.0
        %2542 = vmatmul.mubr.f32.gmra.mxu0 %v2381
        %v2543 = vpop.f32.mrf.mxu0
        %v2544 = vadd.f32 0.0, %v2543
        %v2545 = vpop.f32.mrf.mxu0
        %2546 = vmatprep.mubr.f32.mxu0 0.0
        %2547 = vmatmul.mubr.f32.gmra.mxu0 %v2382
        %v2548 = vpop.f32.mrf.mxu0
        %v2549 = vadd.f32 0.0, %v2548
        %v2550 = vpop.f32.mrf.mxu0
        %2551 = vmatprep.mubr.f32.mxu0 0.0
        %2552 = vmatmul.mubr.f32.gmra.mxu0 %v2383
        %v2553 = vpop.f32.mrf.mxu0
        %v2554 = vadd.f32 0.0, %v2553
        %v2555 = vpop.f32.mrf.mxu0
        %2556 = vmatprep.mubr.f32.mxu0 0.0
        %2557 = vmatmul.mubr.f32.gmra.mxu0 %v2384
        %v2558 = vpop.f32.mrf.mxu0
        %v2559 = vadd.f32 0.0, %v2558
        %v2560 = vpop.f32.mrf.mxu0
        %2561 = vmatprep.mubr.f32.mxu0 0.0
        %2562 = vmatmul.mubr.f32.gmra.mxu0 %v2385
        %v2563 = vpop.f32.mrf.mxu0
        %v2564 = vadd.f32 0.0, %v2563
        %v2565 = vpop.f32.mrf.mxu0
        %2566 = vmatprep.mubr.f32.mxu0 0.0
        %2567 = vmatmul.mubr.f32.gmra.mxu0 %v2386
        %v2568 = vpop.f32.mrf.mxu0
        %v2569 = vadd.f32 0.0, %v2568
        %v2570 = vpop.f32.mrf.mxu0
        %2571 = vmatprep.mubr.f32.mxu0 0.0
        %2572 = vmatmul.mubr.f32.gmra.mxu0 %v2387
        %v2573 = vpop.f32.mrf.mxu0
        %v2574 = vadd.f32 0.0, %v2573
        %v2575 = vpop.f32.mrf.mxu0
        %2576 = vmatprep.mubr.f32.mxu0 0.0
        %2577 = vmatmul.mubr.f32.gmra.mxu0 %v2388
        %v2578 = vpop.f32.mrf.mxu0
        %v2579 = vadd.f32 0.0, %v2578
        %v2580 = vpop.f32.mrf.mxu0
        %2581 = vmatprep.mubr.f32.mxu0 0.0
        %2582 = vmatmul.mubr.f32.gmra.mxu0 %v2389
        %v2583 = vpop.f32.mrf.mxu0
        %v2584 = vadd.f32 0.0, %v2583
        %v2585 = vpop.f32.mrf.mxu0
        %2586 = vmatprep.mubr.f32.mxu0 0.0
        %2587 = vmatmul.mubr.f32.gmra.mxu0 %v2390
        %v2588 = vpop.f32.mrf.mxu0
        %v2589 = vadd.f32 0.0, %v2588
        %v2590 = vpop.f32.mrf.mxu0
        %2591 = vmatprep.mubr.f32.mxu0 0.0
        %2592 = vmatmul.mubr.f32.gmra.mxu0 %v2391
        %v2593 = vpop.f32.mrf.mxu0
        %v2594 = vadd.f32 0.0, %v2593
        %v2595 = vpop.f32.mrf.mxu0
        %2596 = vmatprep.mubr.f32.mxu0 0.0
        %2597 = vmatmul.mubr.f32.gmra.mxu0 %v2392
        %v2598 = vpop.f32.mrf.mxu0
        %v2599 = vadd.f32 0.0, %v2598
        %v2600 = vpop.f32.mrf.mxu0
        %2601 = vmatprep.mubr.f32.mxu0 0.0
        %2602 = vmatmul.mubr.f32.gmra.mxu0 %v2393
        %v2603 = vpop.f32.mrf.mxu0
        %v2604 = vadd.f32 0.0, %v2603
        %v2605 = vpop.f32.mrf.mxu0
        %2606 = vmatprep.mubr.f32.mxu0 0.0
        %2607 = vmatmul.mubr.f32.gmra.mxu0 %v2394
        %v2608 = vpop.f32.mrf.mxu0
        %v2609 = vadd.f32 0.0, %v2608
        %v2610 = vpop.f32.mrf.mxu0
        %2611 = vmatprep.mubr.f32.mxu0 0.0
        %2612 = vmatmul.mubr.f32.gmra.mxu0 %v2395
        %v2613 = vpop.f32.mrf.mxu0
        %v2614 = vadd.f32 0.0, %v2613
        %v2615 = vpop.f32.mrf.mxu0
        %2616 = vmatprep.mubr.f32.mxu0 0.0
        %2617 = vmatmul.mubr.f32.gmra.mxu0 %v2396
        %v2618 = vpop.f32.mrf.mxu0
        %v2619 = vadd.f32 0.0, %v2618
        %v2620 = vpop.f32.mrf.mxu0
        %2621 = vmatprep.mubr.f32.mxu0 0.0
        %2622 = vmatmul.mubr.f32.gmra.mxu0 %v2397
        %v2623 = vpop.f32.mrf.mxu0
        %v2624 = vadd.f32 0.0, %v2623
        %v2625 = vpop.f32.mrf.mxu0
        %2626 = vmatprep.mubr.f32.mxu0 0.0
        %2627 = vmatmul.mubr.f32.gmra.mxu0 %v2398
        %v2628 = vpop.f32.mrf.mxu0
        %v2629 = vadd.f32 0.0, %v2628
        %v2630 = vpop.f32.mrf.mxu0
        %2631 = vmatprep.mubr.f32.mxu0 0.0
        %2632 = vmatmul.mubr.f32.gmra.mxu0 %v2399
        %v2633 = vpop.f32.mrf.mxu0
        %v2634 = vadd.f32 0.0, %v2633
        %v2635 = vpop.f32.mrf.mxu0
        %2636 = vmatprep.mubr.f32.mxu0 0.0
        %2637 = vmatmul.mubr.f32.gmra.mxu0 %v2400
        %v2638 = vpop.f32.mrf.mxu0
        %v2639 = vadd.f32 0.0, %v2638
        %v2640 = vpop.f32.mrf.mxu0
        %2641 = vmatprep.mubr.f32.mxu0 0.0
        %2642 = vmatmul.mubr.f32.gmra.mxu0 %v2401
        %v2643 = vpop.f32.mrf.mxu0
        %v2644 = vadd.f32 0.0, %v2643
        %v2645 = vpop.f32.mrf.mxu0
        %2646 = vmatprep.mubr.f32.mxu0 0.0
        %2647 = vmatmul.mubr.f32.gmra.mxu0 %v2402
        %v2648 = vpop.f32.mrf.mxu0
        %v2649 = vadd.f32 0.0, %v2648
        %v2650 = vpop.f32.mrf.mxu0
        %2651 = vmatprep.mubr.f32.mxu0 0.0
        %2652 = vmatmul.mubr.f32.gmra.mxu0 %v2403
        %v2653 = vpop.f32.mrf.mxu0
        %v2654 = vadd.f32 0.0, %v2653
        %v2655 = vpop.f32.mrf.mxu0
        %2656 = vmatprep.mubr.f32.mxu0 0.0
        %2657 = vmatmul.mubr.f32.gmra.mxu0 %v2404
        %v2658 = vpop.f32.mrf.mxu0
        %v2659 = vadd.f32 0.0, %v2658
        %v2660 = vpop.f32.mrf.mxu0
        %2661 = vmatprep.mubr.f32.mxu0 0.0
        %2662 = vmatmul.mubr.f32.gmra.mxu0 %v2405
        %v2663 = vpop.f32.mrf.mxu0
        %v2664 = vadd.f32 0.0, %v2663
        %v2665 = vpop.f32.mrf.mxu0
        %2666 = vmatprep.mubr.f32.mxu0 0.0
        %2667 = vmatmul.mubr.f32.gmra.mxu0 %v2406
        %v2668 = vpop.f32.mrf.mxu0
        %v2669 = vadd.f32 0.0, %v2668
        %v2670 = vpop.f32.mrf.mxu0
        %2671 = vmatprep.mubr.f32.mxu0 0.0
        %2672 = vmatmul.mubr.f32.gmra.mxu0 %v2407
        %v2673 = vpop.f32.mrf.mxu0
        %v2674 = vadd.f32 0.0, %v2673
        %v2675 = vpop.f32.mrf.mxu0
        %2676 = vmatprep.mubr.f32.mxu0 0.0
        %2677 = vmatmul.mubr.f32.gmra.mxu0 %v2408
        %v2678 = vpop.f32.mrf.mxu0
        %v2679 = vadd.f32 0.0, %v2678
        %v2680 = vpop.f32.mrf.mxu0
        %2681 = vdwg.mxu0
        %v2682 = vadd.f32 %v2409, %v2524
        %v2683 = vadd.f32 %v2410, %v2529
        %v2684 = vadd.f32 %v2411, %v2534
        %v2685 = vadd.f32 %v2412, %v2539
        %v2686 = vadd.f32 %v2413, %v2544
        %v2687 = vadd.f32 %v2414, %v2549
        %v2688 = vadd.f32 %v2415, %v2554
        %v2689 = vadd.f32 %v2416, %v2559
        %v2690 = vadd.f32 %v2417, %v2564
        %v2691 = vadd.f32 %v2418, %v2569
        %v2692 = vadd.f32 %v2419, %v2574
        %v2693 = vadd.f32 %v2420, %v2579
        %v2694 = vadd.f32 %v2421, %v2584
        %v2695 = vadd.f32 %v2422, %v2589
        %v2696 = vadd.f32 %v2423, %v2594
        %v2697 = vadd.f32 %v2424, %v2599
        %v2698 = vadd.f32 %v2425, %v2604
        %v2699 = vadd.f32 %v2426, %v2609
        %v2700 = vadd.f32 %v2427, %v2614
        %v2701 = vadd.f32 %v2428, %v2619
        %v2702 = vadd.f32 %v2429, %v2624
        %v2703 = vadd.f32 %v2430, %v2629
        %v2704 = vadd.f32 %v2431, %v2634
        %v2705 = vadd.f32 %v2432, %v2639
        %v2706 = vadd.f32 %v2433, %v2644
        %v2707 = vadd.f32 %v2434, %v2649
        %v2708 = vadd.f32 %v2435, %v2654
        %v2709 = vadd.f32 %v2436, %v2659
        %v2710 = vadd.f32 %v2437, %v2664
        %v2711 = vadd.f32 %v2438, %v2669
        %v2712 = vadd.f32 %v2439, %v2674
        %v2713 = vadd.f32 %v2440, %v2679
        %2714 = vst [vmem:[#allocation3] sm:$0xff] %v2682
        %2715 = vst [vmem:[#allocation3 + $0x8] sm:$0xff] %v2683
        %2716 = vst [vmem:[#allocation3 + $0x10] sm:$0xff] %v2684
        %2717 = vst [vmem:[#allocation3 + $0x18] sm:$0xff] %v2685
        %2718 = vst [vmem:[#allocation3 + $0x20] sm:$0xff] %v2686
        %2719 = vst [vmem:[#allocation3 + $0x28] sm:$0xff] %v2687
        %2720 = vst [vmem:[#allocation3 + $0x30] sm:$0xff] %v2688
        %2721 = vst [vmem:[#allocation3 + $0x38] sm:$0xff] %v2689
        %2722 = vst [vmem:[#allocation3 + $0x40] sm:$0xff] %v2690
        %2723 = vst [vmem:[#allocation3 + $0x48] sm:$0xff] %v2691
        %2724 = vst [vmem:[#allocation3 + $0x50] sm:$0xff] %v2692
        %2725 = vst [vmem:[#allocation3 + $0x58] sm:$0xff] %v2693
        %2726 = vst [vmem:[#allocation3 + $0x60] sm:$0xff] %v2694
        %2727 = vst [vmem:[#allocation3 + $0x68] sm:$0xff] %v2695
        %2728 = vst [vmem:[#allocation3 + $0x70] sm:$0xff] %v2696
        %2729 = vst [vmem:[#allocation3 + $0x78] sm:$0xff] %v2697
        %2730 = vst [vmem:[#allocation3 + $0x80] sm:$0xff] %v2698
        %2731 = vst [vmem:[#allocation3 + $0x88] sm:$0xff] %v2699
        %2732 = vst [vmem:[#allocation3 + $0x90] sm:$0xff] %v2700
        %2733 = vst [vmem:[#allocation3 + $0x98] sm:$0xff] %v2701
        %2734 = vst [vmem:[#allocation3 + $0xa0] sm:$0xff] %v2702
        %2735 = vst [vmem:[#allocation3 + $0xa8] sm:$0xff] %v2703
        %2736 = vst [vmem:[#allocation3 + $0xb0] sm:$0xff] %v2704
        %2737 = vst [vmem:[#allocation3 + $0xb8] sm:$0xff] %v2705
        %2738 = vst [vmem:[#allocation3 + $0xc0] sm:$0xff] %v2706
        %2739 = vst [vmem:[#allocation3 + $0xc8] sm:$0xff] %v2707
        %2740 = vst [vmem:[#allocation3 + $0xd0] sm:$0xff] %v2708
        %2741 = vst [vmem:[#allocation3 + $0xd8] sm:$0xff] %v2709
        %2742 = vst [vmem:[#allocation3 + $0xe0] sm:$0xff] %v2710
        %2743 = vst [vmem:[#allocation3 + $0xe8] sm:$0xff] %v2711
        %2744 = vst [vmem:[#allocation3 + $0xf0] sm:$0xff] %v2712
        %2745 = vst [vmem:[#allocation3 + $0xf8] sm:$0xff] %v2713
        %p2746 = scmp.eq.s32.totalorder %s35, 1
        // Predicated region
        $region69: #{tpu_custom_call.1} parent=47 // pred_check
          %p2747 = pneg %p2746
        $region70: #{tpu_custom_call.1} parent=47 // pred_check_branch
          %2749 = sbr.rel (%p2747) target = $region72
        $region71: #{tpu_custom_call.1} parent=47 // pred_region
          %v2750 = vld [vmem:[#allocation3] sm:$0xff]
          %v2751 = vld [vmem:[#allocation3 + $0x8] sm:$0xff]
          %v2752 = vld [vmem:[#allocation3 + $0x10] sm:$0xff]
          %v2753 = vld [vmem:[#allocation3 + $0x18] sm:$0xff]
          %v2754 = vld [vmem:[#allocation3 + $0x20] sm:$0xff]
          %v2755 = vld [vmem:[#allocation3 + $0x28] sm:$0xff]
          %v2756 = vld [vmem:[#allocation3 + $0x30] sm:$0xff]
          %v2757 = vld [vmem:[#allocation3 + $0x38] sm:$0xff]
          %v2758 = vld [vmem:[#allocation3 + $0x40] sm:$0xff]
          %v2759 = vld [vmem:[#allocation3 + $0x48] sm:$0xff]
          %v2760 = vld [vmem:[#allocation3 + $0x50] sm:$0xff]
          %v2761 = vld [vmem:[#allocation3 + $0x58] sm:$0xff]
          %v2762 = vld [vmem:[#allocation3 + $0x60] sm:$0xff]
          %v2763 = vld [vmem:[#allocation3 + $0x68] sm:$0xff]
          %v2764 = vld [vmem:[#allocation3 + $0x70] sm:$0xff]
          %v2765 = vld [vmem:[#allocation3 + $0x78] sm:$0xff]
          %v2766 = vld [vmem:[#allocation3 + $0x80] sm:$0xff]
          %v2767 = vld [vmem:[#allocation3 + $0x88] sm:$0xff]
          %v2768 = vld [vmem:[#allocation3 + $0x90] sm:$0xff]
          %v2769 = vld [vmem:[#allocation3 + $0x98] sm:$0xff]
          %v2770 = vld [vmem:[#allocation3 + $0xa0] sm:$0xff]
          %v2771 = vld [vmem:[#allocation3 + $0xa8] sm:$0xff]
          %v2772 = vld [vmem:[#allocation3 + $0xb0] sm:$0xff]
          %v2773 = vld [vmem:[#allocation3 + $0xb8] sm:$0xff]
          %v2774 = vld [vmem:[#allocation3 + $0xc0] sm:$0xff]
          %v2775 = vld [vmem:[#allocation3 + $0xc8] sm:$0xff]
          %v2776 = vld [vmem:[#allocation3 + $0xd0] sm:$0xff]
          %v2777 = vld [vmem:[#allocation3 + $0xd8] sm:$0xff]
          %v2778 = vld [vmem:[#allocation3 + $0xe0] sm:$0xff]
          %v2779 = vld [vmem:[#allocation3 + $0xe8] sm:$0xff]
          %v2780 = vld [vmem:[#allocation3 + $0xf0] sm:$0xff]
          %v2781 = vld [vmem:[#allocation3 + $0xf8] sm:$0xff]
          %2782 = vst [vmem:[%s445] sm:$0xff] %v2750
          %2783 = vst [vmem:[%s445 + $0x8] sm:$0xff] %v2751
          %2784 = vst [vmem:[%s445 + $0x10] sm:$0xff] %v2752
          %2785 = vst [vmem:[%s445 + $0x18] sm:$0xff] %v2753
          %2786 = vst [vmem:[%s445 + $0x20] sm:$0xff] %v2754
          %2787 = vst [vmem:[%s445 + $0x28] sm:$0xff] %v2755
          %2788 = vst [vmem:[%s445 + $0x30] sm:$0xff] %v2756
          %2789 = vst [vmem:[%s445 + $0x38] sm:$0xff] %v2757
          %2790 = vst [vmem:[%s445 + $0x40] sm:$0xff] %v2758
          %2791 = vst [vmem:[%s445 + $0x48] sm:$0xff] %v2759
          %2792 = vst [vmem:[%s445 + $0x50] sm:$0xff] %v2760
          %2793 = vst [vmem:[%s445 + $0x58] sm:$0xff] %v2761
          %2794 = vst [vmem:[%s445 + $0x60] sm:$0xff] %v2762
          %2795 = vst [vmem:[%s445 + $0x68] sm:$0xff] %v2763
          %2796 = vst [vmem:[%s445 + $0x70] sm:$0xff] %v2764
          %2797 = vst [vmem:[%s445 + $0x78] sm:$0xff] %v2765
          %2798 = vst [vmem:[%s445 + $0x80] sm:$0xff] %v2766
          %2799 = vst [vmem:[%s445 + $0x88] sm:$0xff] %v2767
          %2800 = vst [vmem:[%s445 + $0x90] sm:$0xff] %v2768
          %2801 = vst [vmem:[%s445 + $0x98] sm:$0xff] %v2769
          %2802 = vst [vmem:[%s445 + $0xa0] sm:$0xff] %v2770
          %2803 = vst [vmem:[%s445 + $0xa8] sm:$0xff] %v2771
          %2804 = vst [vmem:[%s445 + $0xb0] sm:$0xff] %v2772
          %2805 = vst [vmem:[%s445 + $0xb8] sm:$0xff] %v2773
          %2806 = vst [vmem:[%s445 + $0xc0] sm:$0xff] %v2774
          %2807 = vst [vmem:[%s445 + $0xc8] sm:$0xff] %v2775
          %2808 = vst [vmem:[%s445 + $0xd0] sm:$0xff] %v2776
          %2809 = vst [vmem:[%s445 + $0xd8] sm:$0xff] %v2777
          %2810 = vst [vmem:[%s445 + $0xe0] sm:$0xff] %v2778
          %2811 = vst [vmem:[%s445 + $0xe8] sm:$0xff] %v2779
          %2812 = vst [vmem:[%s445 + $0xf0] sm:$0xff] %v2780
          %2813 = vst [vmem:[%s445 + $0xf8] sm:$0xff] %v2781
        $region72: #{tpu_custom_call.1} parent=47 // pred_fallthru
          _
        %s2814 = sand.u32 %s227, 1
        %s2815 = scalar_lea.sflag [#allocation6], %s2814
        %s2816 = sand.u32 %s227, 1
        %s2817 = smul.addr %s2816, 256
        %s2818 = scalar_lea.vmem [#allocation12], %s2817
        // Predicated region
        $region73: #{tpu_custom_call.1} parent=47 // pred_check
          %p2819 = pneg %p237
        $region74: #{tpu_custom_call.1} parent=47 // pred_check_branch
          %2821 = sbr.rel (%p2819) target = $region76
        $region75: #{tpu_custom_call.1} parent=47 // pred_region
          %s2823 = ssub.s32 4096, 4096
          %2824 = vsyncadd %s2815, %s2823
          %s2825 = smul.addr %s34, 32
          %s2826 = smul.addr %s2825, 128
          %s2827 = scalar_lea.hbm %s7, %s2826
          %s2828 = sshll.u32 %s2818, 4
          %s2829 = int_to_ptr.vmem [resolvable:$true] %s2828
          %2834 = dma.vmem_to_hbm [thread:$0]  %s2829, 4096, %s2827, %s2815, 128, 128, 8
        $region76: #{tpu_custom_call.1} parent=47 // pred_fallthru
          _
      $region48: #{tpu_custom_call.1} parent=5 // pred_fallthru
        _
      %p2835 = scmp.le.s32.totalorder 2, %s25
      // Predicated region
      $region77: #{tpu_custom_call.1} parent=5 // pred_check
        %p2836 = pneg %p2835
      $region78: #{tpu_custom_call.1} parent=5 // pred_check_branch
        %2838 = sbr.rel (%p2836) target = $region80
      $region79: #{tpu_custom_call.1} parent=5 // pred_region
        %s2839 = ssub.s32 %s25, 2
        // Predicated region
        $region81: #{tpu_custom_call.1} parent=79 // pred_check
          %p2840 = pneg %p243
        $region82: #{tpu_custom_call.1} parent=79 // pred_check_branch
          %2842 = sbr.rel (%p2840) target = $region84
        $region83: #{tpu_custom_call.1} parent=79 // pred_region
          %s2843 = sand.u32 %s228, 1
          %s2844 = scalar_lea.sflag [#allocation6], %s2843
          %s2845 = sand.u32 %s228, 1
          %s2846 = smul.addr %s2845, 256
          %s2847 = scalar_lea.vmem [#allocation12], %s2846
          %2848 = dma.done %s2844, 4096
        $region84: #{tpu_custom_call.1} parent=79 // pred_fallthru
          _
      $region80: #{tpu_custom_call.1} parent=5 // pred_fallthru
        _
    $region6: #{tpu_custom_call.1} parent=1 // loop_footer
      %s29 = sadd.s32 1, %s25
    $region7: #{tpu_custom_call.1} parent=1 // loop_footer_branch
      %24 = sbr.rel target = $region3
    $region8: #{tpu_custom_call.1} parent=1 // loop_exit
      _
    %2849 = vsyncpa [#allocation5], 1
    %s2850 = scalar_lea.sflag [#allocation5], 1
    %2851 = vsyncpa %s2850, 1
    %2852 = vsyncpa [#allocation8], 1
    %s2853 = scalar_lea.sflag [#allocation8], 1
    %2854 = vsyncpa %s2853, 1
    %2855 = vsyncpa [#allocation11], 1
    %s2856 = scalar_lea.sflag [#allocation11], 1
    %2857 = vsyncpa %s2856, 1
    %2858 = vsyncpa [#allocation6], 1
    %s2859 = scalar_lea.sflag [#allocation6], 1
    %2860 = vsyncpa %s2859, 1

</llo_original>
